<compile_context>
chip_gen: v6e
topology: v6e:2x2x1
jax: 0.10.0
libtpu: 0.0.40
codegen_flags: <defaults>
</compile_context>

<pallas_src>
import functools

import numpy as np
import jax
import jax.numpy as jnp
from jax.experimental import pallas as pl
from jax.experimental.pallas import tpu as pltpu


# ----------------------------------------------------------------------------
# exact GELU helpers (erf via Abramowitz & Stegun 7.1.26, max abs err ~1.5e-7)
# ----------------------------------------------------------------------------
def _erf(x):
    p = 0.3275911
    a1, a2, a3, a4, a5 = (0.254829592, -0.284496736, 1.421413741,
                          -1.453152027, 1.061405429)
    s = jnp.where(x >= 0.0, 1.0, -1.0)
    ax = x * s
    t = 1.0 / (1.0 + p * ax)
    poly = ((((a5 * t + a4) * t + a3) * t + a2) * t + a1) * t
    return s * (1.0 - poly * jnp.exp(-(ax * ax)))


def _gelu_exact(x):
    return 0.5 * x * (1.0 + _erf(x * (1.0 / np.sqrt(2.0))))


# ----------------------------------------------------------------------------
# fused Pallas kernel
# ----------------------------------------------------------------------------
def _fused_kernel(sb_ref, anc_ref, w1t_ref, b1_ref, w2t_ref, b2_ref, mask_ref,
                  hm_ref, o_ref, hm_scr, *, B, H, W, K, C, A):
    f32 = jnp.float32
    KK = K * K
    HW = H * W
    pad = K // 2

    # ---- anchor MLP -> L2-normalized per-tap conv weights (computed ONCE) ----
    x = anc_ref[...]                                                   # (A, C)
    h = jnp.dot(x, w1t_ref[...], preferred_element_type=f32) + b1_ref[...]
    h = _gelu_exact(h)                                                 # exact GELU
    wn = []                                                            # KK x (A, C)
    for t in range(KK):
        lo = t * C
        wt = (jnp.dot(h, w2t_ref[:, lo:lo + C], preferred_element_type=f32)
              + b2_ref[:, lo:lo + C])                                  # (A, C)
        # exact 1/(1e-8 + ||.||) kept (work is negligible; matches reference)
        inv = 1.0 / (1e-8 + jnp.sqrt(jnp.sum(wt * wt, axis=-1, keepdims=True)))
        wn.append(wt * inv)

    # ---- heatmap: L2-normalize over channels (padded zeros stay zero) ----
    hm = hm_ref[...]                                                   # (B, C, HWp)
    inv_h = 1.0 / (1e-8 + jnp.sqrt(jnp.sum(hm * hm, axis=1, keepdims=True)))
    hm_scr[...] = hm * inv_h

    es = sb_ref[0]       # exp(scale)
    bias = sb_ref[1]

    # ---- conv: each tap = contiguous lane-slice; accumulate (A, HW) directly --
    for b in range(B):
        acc = jnp.zeros((A, HW), f32)
        for j in range(K):                 # horizontal tap (shares a mask)
            accj = jnp.zeros((A, HW), f32)
            for i in range(K):             # vertical tap (handled by zero pad)
                t = i * K + j
                off = i * W + j
                blk = hm_scr[b, :, off:off + HW]                       # (C, HW)
                accj = accj + jnp.dot(wn[t], blk, preferred_element_type=f32)
            if j == pad:                   # center column: mask is all-ones
                acc = acc + accj
            else:
                acc = acc + accj * mask_ref[j:j + 1, :]                # (1, HW)
        o_ref[b] = acc * es + bias                                     # (A, HW) lane-dense


# ----------------------------------------------------------------------------
# module forward (Pallas path)
# ----------------------------------------------------------------------------
def dense_conv_anchor_queries(heatmap, anchors_embs, params, k=3):
    B, C, H, W = heatmap.shape
    f32 = jnp.float32
    anchors = anchors_embs.reshape(-1, C).astype(f32)
    A = anchors.shape[0]
    KK = k * k
    HW = H * W
    pad = k // 2
    flat_pad = pad * (W + 1)               # vertical pad rows + horizontal reach
    HWp = HW + 2 * flat_pad

    # -- parameter re-layout (tiny, layout-only; could be hoisted out of fwd) --
    w1t = jnp.transpose(params["w1"]).astype(f32)                      # (C, C)
    b1 = params["b1"].reshape(1, C).astype(f32)
    # second Linear, pre-transposed + reordered so column = tap*C + channel
    w2t = (jnp.transpose(params["w2"]).reshape(C, C, KK)
           .transpose(0, 2, 1).reshape(C, KK * C).astype(f32))         # (C, KK*C)
    b2 = params["b2"].reshape(C, KK).T.reshape(1, KK * C).astype(f32)  # (1, KK*C)
    sb = jnp.stack([jnp.exp(params["scale"][0]),
                    params["bias"][0]]).astype(f32)                    # SMEM scalars

    # -- static horizontal-validity masks (numpy, folded at trace time) --
    xs = np.arange(HW) % W
    masks_np = np.stack(
        [((xs + (j - pad) >= 0) & (xs + (j - pad) < W)) for j in range(k)]
    ).astype(np.float32)                                               # (k, HW)
    masks = jnp.asarray(masks_np)

    # -- heatmap: NCHW -> channel-major flat spatial, zero pad on the flat axis
    #    so every (ki, kj) tap is a contiguous lane-slice inside the kernel --
    hm_flat = jnp.pad(heatmap.astype(f32).reshape(B, C, HW),
                      ((0, 0), (0, 0), (flat_pad, flat_pad)))          # (B, C, HWp)

    kern = functools.partial(_fused_kernel, B=B, H=H, W=W, K=k, C=C, A=A)
    vmem = pl.BlockSpec(memory_space=pltpu.MemorySpace.VMEM)
    out = pl.pallas_call(
        kern,
        out_shape=jax.ShapeDtypeStruct((B, A, HW), f32),
        in_specs=[
            pl.BlockSpec(memory_space=pltpu.MemorySpace.SMEM),         # [exp(scale), bias]
            vmem,                                                      # anchors
            vmem,                                                      # w1^T
            vmem,                                                      # b1
            vmem,                                                      # w2^T (tap-major)
            vmem,                                                      # b2   (tap-major)
            vmem,                                                      # horizontal masks
            vmem,                                                      # flat heatmap
        ],
        out_specs=vmem,
        scratch_shapes=[pltpu.VMEM((B, C, HWp), f32)],                 # normalized heatmap
    )(sb, anchors, w1t, b1, w2t, b2, masks, hm_flat)

    # (B, A, H*W) is NCHW flattened -> free reshape, no transpose pass
    return out.reshape(B, A, H, W)


# ----------------------------------------------------------------------------
# pure-JAX reference (mirrors the PyTorch forward)
# ----------------------------------------------------------------------------
def reference(heatmap, anchors_embs, params, k=3):
    C = heatmap.shape[1]
    x = anchors_embs.reshape(-1, C).astype(jnp.float32)
    hi = jax.lax.Precision.HIGHEST
    h = jax.nn.gelu(jnp.dot(x, params["w1"].T, precision=hi) + params["b1"],
                    approximate=False)
    w = jnp.dot(h, params["w2"].T, precision=hi) + params["b2"]
    w = w.reshape(-1, C, k, k)
    w = w / (1e-8 + jnp.linalg.norm(w, axis=1, keepdims=True))
    hm = heatmap / (1e-8 + jnp.linalg.norm(heatmap, axis=1, keepdims=True))
    out = jax.lax.conv_general_dilated(
        hm, w, window_strides=(1, 1), padding="SAME",
        dimension_numbers=("NCHW", "OIHW", "NCHW"), precision=hi)
    return out * jnp.exp(params["scale"]) + params["bias"]


# ----------------------------------------------------------------------------
if __name__ == "__main__":
    B, C, H, W = 2, 32, 16, 16        # text_dim = 32
    A, K = 8, 3                        # 8 anchor queries, k = 3

    key = jax.random.PRNGKey(0)
    k0, k1, k2, k3, k4, k5 = jax.random.split(key, 6)
    params = {
        "w1": jax.random.normal(k0, (C, C), jnp.float32) / np.sqrt(C),
        "b1": jax.random.normal(k1, (C,), jnp.float32) * 0.02,
        "w2": jax.random.normal(k2, (C * K * K, C), jnp.float32) / np.sqrt(C),
        "b2": jax.random.normal(k3, (C * K * K,), jnp.float32) * 0.02,
        "bias": jnp.full((1,), -10.0, jnp.float32),                   # nn.Parameter(-10)
        "scale": jnp.full((1,), float(np.log(10.0)), jnp.float32),    # nn.Parameter(log 10)
    }
    heatmap = jax.random.normal(k4, (B, C, H, W), jnp.float32)
    anchors_embs = jax.random.normal(k5, (A, C), jnp.float32)

    out = dense_conv_anchor_queries(heatmap, anchors_embs, params, k=K)
    out = jax.block_until_ready(out)

    ref = reference(heatmap, anchors_embs, params, k=K)
    assert out.shape == (B, A, H, W), out.shape
    np.testing.assert_allclose(np.asarray(out), np.asarray(ref), rtol=2e-3, atol=2e-2)
    print("KERNEL_OK")
</pallas_src>

<mosaic_0001>
module attributes {stable_mosaic.version = 11 : i64} {
  func.func @_fused_kernel(%arg0: memref<2xf32, #tpu.memory_space<smem>>, %arg1: memref<8x32xf32, #tpu.memory_space<vmem>>, %arg2: memref<32x32xf32, #tpu.memory_space<vmem>>, %arg3: memref<1x32xf32, #tpu.memory_space<vmem>>, %arg4: memref<32x288xf32, #tpu.memory_space<vmem>>, %arg5: memref<1x288xf32, #tpu.memory_space<vmem>>, %arg6: memref<3x256xf32, #tpu.memory_space<vmem>>, %arg7: memref<2x32x290xf32, #tpu.memory_space<vmem>>, %arg8: memref<2x8x256xf32, #tpu.memory_space<vmem>>, %arg9: memref<2x32x290xf32, #tpu.memory_space<vmem>>) attributes {dimension_semantics = [], scalar_prefetch = 0 : i64, scratch_operands = 1 : i64, tpu.core_type = #tpu.core_type<tc>} {
    %c0 = arith.constant 0 : index
    %c0_0 = arith.constant 0 : index
    %0 = vector.load %arg1[%c0, %c0_0] : memref<8x32xf32, #tpu.memory_space<vmem>>, vector<8x32xf32>
    %c0_1 = arith.constant 0 : index
    %c0_2 = arith.constant 0 : index
    %1 = vector.load %arg2[%c0_1, %c0_2] : memref<32x32xf32, #tpu.memory_space<vmem>>, vector<32x32xf32>
    %cst = arith.constant dense<0.000000e+00> : vector<8x32xf32>
    %2 = tpu.matmul %0, %1, %cst {dimension_numbers = #tpu.dot_dimension_numbers<[1], [0], [0], [1], [0, 0, 1, 1], [], []>} : vector<8x32xf32>, vector<32x32xf32>, vector<8x32xf32> -> vector<8x32xf32>
    %c0_3 = arith.constant 0 : index
    %c0_4 = arith.constant 0 : index
    %3 = vector.load %arg3[%c0_3, %c0_4] : memref<1x32xf32, #tpu.memory_space<vmem>>, vector<1x32xf32>
    %4 = vector.broadcast %3 : vector<1x32xf32> to vector<8x32xf32>
    %5 = arith.addf %2, %4 : vector<8x32xf32>
    %cst_5 = arith.constant 5.000000e-01 : f32
    %6 = vector.broadcast %cst_5 : f32 to vector<8x32xf32>
    %7 = arith.mulf %6, %5 : vector<8x32xf32>
    %cst_6 = arith.constant 0.707106769 : f32
    %8 = vector.broadcast %cst_6 : f32 to vector<8x32xf32>
    %9 = arith.mulf %5, %8 : vector<8x32xf32>
    %cst_7 = arith.constant 0.000000e+00 : f32
    %10 = vector.broadcast %cst_7 : f32 to vector<8x32xf32>
    %11 = arith.cmpf oge, %9, %10 : vector<8x32xf32>
    %cst_8 = arith.constant 1.000000e+00 : f32
    %cst_9 = arith.constant -1.000000e+00 : f32
    %12 = vector.broadcast %cst_8 : f32 to vector<8x32xf32>
    %13 = vector.broadcast %cst_9 : f32 to vector<8x32xf32>
    %14 = arith.select %11, %12, %13 : vector<8x32xi1>, vector<8x32xf32>
    %15 = arith.mulf %9, %14 : vector<8x32xf32>
    %cst_10 = arith.constant 0.327591091 : f32
    %16 = vector.broadcast %cst_10 : f32 to vector<8x32xf32>
    %17 = arith.mulf %16, %15 : vector<8x32xf32>
    %cst_11 = arith.constant 1.000000e+00 : f32
    %18 = vector.broadcast %cst_11 : f32 to vector<8x32xf32>
    %19 = arith.addf %18, %17 : vector<8x32xf32>
    %cst_12 = arith.constant 1.000000e+00 : f32
    %20 = vector.broadcast %cst_12 : f32 to vector<8x32xf32>
    %21 = arith.divf %20, %19 : vector<8x32xf32>
    %cst_13 = arith.constant 1.06140542 : f32
    %22 = vector.broadcast %cst_13 : f32 to vector<8x32xf32>
    %23 = arith.mulf %22, %21 : vector<8x32xf32>
    %cst_14 = arith.constant -1.45315206 : f32
    %24 = vector.broadcast %cst_14 : f32 to vector<8x32xf32>
    %25 = arith.addf %23, %24 : vector<8x32xf32>
    %26 = arith.mulf %25, %21 : vector<8x32xf32>
    %cst_15 = arith.constant 1.42141378 : f32
    %27 = vector.broadcast %cst_15 : f32 to vector<8x32xf32>
    %28 = arith.addf %26, %27 : vector<8x32xf32>
    %29 = arith.mulf %28, %21 : vector<8x32xf32>
    %cst_16 = arith.constant -0.284496725 : f32
    %30 = vector.broadcast %cst_16 : f32 to vector<8x32xf32>
    %31 = arith.addf %29, %30 : vector<8x32xf32>
    %32 = arith.mulf %31, %21 : vector<8x32xf32>
    %cst_17 = arith.constant 0.254829586 : f32
    %33 = vector.broadcast %cst_17 : f32 to vector<8x32xf32>
    %34 = arith.addf %32, %33 : vector<8x32xf32>
    %35 = arith.mulf %34, %21 : vector<8x32xf32>
    %36 = arith.mulf %15, %15 : vector<8x32xf32>
    %cst_18 = arith.constant 0.000000e+00 : f32
    %37 = vector.broadcast %cst_18 : f32 to vector<8x32xf32>
    %38 = arith.subf %37, %36 : vector<8x32xf32>
    %39 = math.exp %38 : vector<8x32xf32>
    %40 = arith.mulf %35, %39 : vector<8x32xf32>
    %cst_19 = arith.constant 1.000000e+00 : f32
    %41 = vector.broadcast %cst_19 : f32 to vector<8x32xf32>
    %42 = arith.subf %41, %40 : vector<8x32xf32>
    %43 = arith.mulf %14, %42 : vector<8x32xf32>
    %cst_20 = arith.constant 1.000000e+00 : f32
    %44 = vector.broadcast %cst_20 : f32 to vector<8x32xf32>
    %45 = arith.addf %44, %43 : vector<8x32xf32>
    %46 = arith.mulf %7, %45 : vector<8x32xf32>
    %c0_21 = arith.constant 0 : index
    %c0_22 = arith.constant 0 : index
    %47 = vector.load %arg4[%c0_21, %c0_22] : memref<32x288xf32, #tpu.memory_space<vmem>>, vector<32x32xf32>
    %cst_23 = arith.constant dense<0.000000e+00> : vector<8x32xf32>
    %48 = tpu.matmul %46, %47, %cst_23 {dimension_numbers = #tpu.dot_dimension_numbers<[1], [0], [0], [1], [0, 0, 1, 1], [], []>} : vector<8x32xf32>, vector<32x32xf32>, vector<8x32xf32> -> vector<8x32xf32>
    %c0_24 = arith.constant 0 : index
    %c0_25 = arith.constant 0 : index
    %49 = vector.load %arg5[%c0_24, %c0_25] : memref<1x288xf32, #tpu.memory_space<vmem>>, vector<1x32xf32>
    %50 = vector.broadcast %49 : vector<1x32xf32> to vector<8x32xf32>
    %51 = arith.addf %48, %50 : vector<8x32xf32>
    %52 = arith.mulf %51, %51 : vector<8x32xf32>
    %cst_26 = arith.constant dense<0.000000e+00> : vector<8xf32>
    %53 = vector.multi_reduction <add>, %52, %cst_26 [1] : vector<8x32xf32> to vector<8xf32>
    %54 = vector.shape_cast %53 : vector<8xf32> to vector<8x1xf32>
    %55 = math.sqrt %54 : vector<8x1xf32>
    %cst_27 = arith.constant 9.99999993E-9 : f32
    %56 = vector.broadcast %cst_27 : f32 to vector<8x1xf32>
    %57 = arith.addf %56, %55 : vector<8x1xf32>
    %cst_28 = arith.constant 1.000000e+00 : f32
    %58 = vector.broadcast %cst_28 : f32 to vector<8x1xf32>
    %59 = arith.divf %58, %57 : vector<8x1xf32>
    %60 = vector.broadcast %59 : vector<8x1xf32> to vector<8x32xf32>
    %61 = arith.mulf %51, %60 : vector<8x32xf32>
    %c0_29 = arith.constant 0 : index
    %c32 = arith.constant 32 : index
    %62 = vector.load %arg4[%c0_29, %c32] : memref<32x288xf32, #tpu.memory_space<vmem>>, vector<32x32xf32>
    %cst_30 = arith.constant dense<0.000000e+00> : vector<8x32xf32>
    %63 = tpu.matmul %46, %62, %cst_30 {dimension_numbers = #tpu.dot_dimension_numbers<[1], [0], [0], [1], [0, 0, 1, 1], [], []>} : vector<8x32xf32>, vector<32x32xf32>, vector<8x32xf32> -> vector<8x32xf32>
    %c0_31 = arith.constant 0 : index
    %c32_32 = arith.constant 32 : index
    %64 = vector.load %arg5[%c0_31, %c32_32] : memref<1x288xf32, #tpu.memory_space<vmem>>, vector<1x32xf32>
    %65 = vector.broadcast %64 : vector<1x32xf32> to vector<8x32xf32>
    %66 = arith.addf %63, %65 : vector<8x32xf32>
    %67 = arith.mulf %66, %66 : vector<8x32xf32>
    %cst_33 = arith.constant dense<0.000000e+00> : vector<8xf32>
    %68 = vector.multi_reduction <add>, %67, %cst_33 [1] : vector<8x32xf32> to vector<8xf32>
    %69 = vector.shape_cast %68 : vector<8xf32> to vector<8x1xf32>
    %70 = math.sqrt %69 : vector<8x1xf32>
    %cst_34 = arith.constant 9.99999993E-9 : f32
    %71 = vector.broadcast %cst_34 : f32 to vector<8x1xf32>
    %72 = arith.addf %71, %70 : vector<8x1xf32>
    %cst_35 = arith.constant 1.000000e+00 : f32
    %73 = vector.broadcast %cst_35 : f32 to vector<8x1xf32>
    %74 = arith.divf %73, %72 : vector<8x1xf32>
    %75 = vector.broadcast %74 : vector<8x1xf32> to vector<8x32xf32>
    %76 = arith.mulf %66, %75 : vector<8x32xf32>
    %c0_36 = arith.constant 0 : index
    %c64 = arith.constant 64 : index
    %77 = vector.load %arg4[%c0_36, %c64] : memref<32x288xf32, #tpu.memory_space<vmem>>, vector<32x32xf32>
    %cst_37 = arith.constant dense<0.000000e+00> : vector<8x32xf32>
    %78 = tpu.matmul %46, %77, %cst_37 {dimension_numbers = #tpu.dot_dimension_numbers<[1], [0], [0], [1], [0, 0, 1, 1], [], []>} : vector<8x32xf32>, vector<32x32xf32>, vector<8x32xf32> -> vector<8x32xf32>
    %c0_38 = arith.constant 0 : index
    %c64_39 = arith.constant 64 : index
    %79 = vector.load %arg5[%c0_38, %c64_39] : memref<1x288xf32, #tpu.memory_space<vmem>>, vector<1x32xf32>
    %80 = vector.broadcast %79 : vector<1x32xf32> to vector<8x32xf32>
    %81 = arith.addf %78, %80 : vector<8x32xf32>
    %82 = arith.mulf %81, %81 : vector<8x32xf32>
    %cst_40 = arith.constant dense<0.000000e+00> : vector<8xf32>
    %83 = vector.multi_reduction <add>, %82, %cst_40 [1] : vector<8x32xf32> to vector<8xf32>
    %84 = vector.shape_cast %83 : vector<8xf32> to vector<8x1xf32>
    %85 = math.sqrt %84 : vector<8x1xf32>
    %cst_41 = arith.constant 9.99999993E-9 : f32
    %86 = vector.broadcast %cst_41 : f32 to vector<8x1xf32>
    %87 = arith.addf %86, %85 : vector<8x1xf32>
    %cst_42 = arith.constant 1.000000e+00 : f32
    %88 = vector.broadcast %cst_42 : f32 to vector<8x1xf32>
    %89 = arith.divf %88, %87 : vector<8x1xf32>
    %90 = vector.broadcast %89 : vector<8x1xf32> to vector<8x32xf32>
    %91 = arith.mulf %81, %90 : vector<8x32xf32>
    %c0_43 = arith.constant 0 : index
    %c96 = arith.constant 96 : index
    %92 = vector.load %arg4[%c0_43, %c96] : memref<32x288xf32, #tpu.memory_space<vmem>>, vector<32x32xf32>
    %cst_44 = arith.constant dense<0.000000e+00> : vector<8x32xf32>
    %93 = tpu.matmul %46, %92, %cst_44 {dimension_numbers = #tpu.dot_dimension_numbers<[1], [0], [0], [1], [0, 0, 1, 1], [], []>} : vector<8x32xf32>, vector<32x32xf32>, vector<8x32xf32> -> vector<8x32xf32>
    %c0_45 = arith.constant 0 : index
    %c96_46 = arith.constant 96 : index
    %94 = vector.load %arg5[%c0_45, %c96_46] : memref<1x288xf32, #tpu.memory_space<vmem>>, vector<1x32xf32>
    %95 = vector.broadcast %94 : vector<1x32xf32> to vector<8x32xf32>
    %96 = arith.addf %93, %95 : vector<8x32xf32>
    %97 = arith.mulf %96, %96 : vector<8x32xf32>
    %cst_47 = arith.constant dense<0.000000e+00> : vector<8xf32>
    %98 = vector.multi_reduction <add>, %97, %cst_47 [1] : vector<8x32xf32> to vector<8xf32>
    %99 = vector.shape_cast %98 : vector<8xf32> to vector<8x1xf32>
    %100 = math.sqrt %99 : vector<8x1xf32>
    %cst_48 = arith.constant 9.99999993E-9 : f32
    %101 = vector.broadcast %cst_48 : f32 to vector<8x1xf32>
    %102 = arith.addf %101, %100 : vector<8x1xf32>
    %cst_49 = arith.constant 1.000000e+00 : f32
    %103 = vector.broadcast %cst_49 : f32 to vector<8x1xf32>
    %104 = arith.divf %103, %102 : vector<8x1xf32>
    %105 = vector.broadcast %104 : vector<8x1xf32> to vector<8x32xf32>
    %106 = arith.mulf %96, %105 : vector<8x32xf32>
    %c0_50 = arith.constant 0 : index
    %c128 = arith.constant 128 : index
    %107 = vector.load %arg4[%c0_50, %c128] : memref<32x288xf32, #tpu.memory_space<vmem>>, vector<32x32xf32>
    %cst_51 = arith.constant dense<0.000000e+00> : vector<8x32xf32>
    %108 = tpu.matmul %46, %107, %cst_51 {dimension_numbers = #tpu.dot_dimension_numbers<[1], [0], [0], [1], [0, 0, 1, 1], [], []>} : vector<8x32xf32>, vector<32x32xf32>, vector<8x32xf32> -> vector<8x32xf32>
    %c0_52 = arith.constant 0 : index
    %c128_53 = arith.constant 128 : index
    %109 = vector.load %arg5[%c0_52, %c128_53] : memref<1x288xf32, #tpu.memory_space<vmem>>, vector<1x32xf32>
    %110 = vector.broadcast %109 : vector<1x32xf32> to vector<8x32xf32>
    %111 = arith.addf %108, %110 : vector<8x32xf32>
    %112 = arith.mulf %111, %111 : vector<8x32xf32>
    %cst_54 = arith.constant dense<0.000000e+00> : vector<8xf32>
    %113 = vector.multi_reduction <add>, %112, %cst_54 [1] : vector<8x32xf32> to vector<8xf32>
    %114 = vector.shape_cast %113 : vector<8xf32> to vector<8x1xf32>
    %115 = math.sqrt %114 : vector<8x1xf32>
    %cst_55 = arith.constant 9.99999993E-9 : f32
    %116 = vector.broadcast %cst_55 : f32 to vector<8x1xf32>
    %117 = arith.addf %116, %115 : vector<8x1xf32>
    %cst_56 = arith.constant 1.000000e+00 : f32
    %118 = vector.broadcast %cst_56 : f32 to vector<8x1xf32>
    %119 = arith.divf %118, %117 : vector<8x1xf32>
    %120 = vector.broadcast %119 : vector<8x1xf32> to vector<8x32xf32>
    %121 = arith.mulf %111, %120 : vector<8x32xf32>
    %c0_57 = arith.constant 0 : index
    %c160 = arith.constant 160 : index
    %122 = vector.load %arg4[%c0_57, %c160] : memref<32x288xf32, #tpu.memory_space<vmem>>, vector<32x32xf32>
    %cst_58 = arith.constant dense<0.000000e+00> : vector<8x32xf32>
    %123 = tpu.matmul %46, %122, %cst_58 {dimension_numbers = #tpu.dot_dimension_numbers<[1], [0], [0], [1], [0, 0, 1, 1], [], []>} : vector<8x32xf32>, vector<32x32xf32>, vector<8x32xf32> -> vector<8x32xf32>
    %c0_59 = arith.constant 0 : index
    %c160_60 = arith.constant 160 : index
    %124 = vector.load %arg5[%c0_59, %c160_60] : memref<1x288xf32, #tpu.memory_space<vmem>>, vector<1x32xf32>
    %125 = vector.broadcast %124 : vector<1x32xf32> to vector<8x32xf32>
    %126 = arith.addf %123, %125 : vector<8x32xf32>
    %127 = arith.mulf %126, %126 : vector<8x32xf32>
    %cst_61 = arith.constant dense<0.000000e+00> : vector<8xf32>
    %128 = vector.multi_reduction <add>, %127, %cst_61 [1] : vector<8x32xf32> to vector<8xf32>
    %129 = vector.shape_cast %128 : vector<8xf32> to vector<8x1xf32>
    %130 = math.sqrt %129 : vector<8x1xf32>
    %cst_62 = arith.constant 9.99999993E-9 : f32
    %131 = vector.broadcast %cst_62 : f32 to vector<8x1xf32>
    %132 = arith.addf %131, %130 : vector<8x1xf32>
    %cst_63 = arith.constant 1.000000e+00 : f32
    %133 = vector.broadcast %cst_63 : f32 to vector<8x1xf32>
    %134 = arith.divf %133, %132 : vector<8x1xf32>
    %135 = vector.broadcast %134 : vector<8x1xf32> to vector<8x32xf32>
    %136 = arith.mulf %126, %135 : vector<8x32xf32>
    %c0_64 = arith.constant 0 : index
    %c192 = arith.constant 192 : index
    %137 = vector.load %arg4[%c0_64, %c192] : memref<32x288xf32, #tpu.memory_space<vmem>>, vector<32x32xf32>
    %cst_65 = arith.constant dense<0.000000e+00> : vector<8x32xf32>
    %138 = tpu.matmul %46, %137, %cst_65 {dimension_numbers = #tpu.dot_dimension_numbers<[1], [0], [0], [1], [0, 0, 1, 1], [], []>} : vector<8x32xf32>, vector<32x32xf32>, vector<8x32xf32> -> vector<8x32xf32>
    %c0_66 = arith.constant 0 : index
    %c192_67 = arith.constant 192 : index
    %139 = vector.load %arg5[%c0_66, %c192_67] : memref<1x288xf32, #tpu.memory_space<vmem>>, vector<1x32xf32>
    %140 = vector.broadcast %139 : vector<1x32xf32> to vector<8x32xf32>
    %141 = arith.addf %138, %140 : vector<8x32xf32>
    %142 = arith.mulf %141, %141 : vector<8x32xf32>
    %cst_68 = arith.constant dense<0.000000e+00> : vector<8xf32>
    %143 = vector.multi_reduction <add>, %142, %cst_68 [1] : vector<8x32xf32> to vector<8xf32>
    %144 = vector.shape_cast %143 : vector<8xf32> to vector<8x1xf32>
    %145 = math.sqrt %144 : vector<8x1xf32>
    %cst_69 = arith.constant 9.99999993E-9 : f32
    %146 = vector.broadcast %cst_69 : f32 to vector<8x1xf32>
    %147 = arith.addf %146, %145 : vector<8x1xf32>
    %cst_70 = arith.constant 1.000000e+00 : f32
    %148 = vector.broadcast %cst_70 : f32 to vector<8x1xf32>
    %149 = arith.divf %148, %147 : vector<8x1xf32>
    %150 = vector.broadcast %149 : vector<8x1xf32> to vector<8x32xf32>
    %151 = arith.mulf %141, %150 : vector<8x32xf32>
    %c0_71 = arith.constant 0 : index
    %c224 = arith.constant 224 : index
    %152 = vector.load %arg4[%c0_71, %c224] : memref<32x288xf32, #tpu.memory_space<vmem>>, vector<32x32xf32>
    %cst_72 = arith.constant dense<0.000000e+00> : vector<8x32xf32>
    %153 = tpu.matmul %46, %152, %cst_72 {dimension_numbers = #tpu.dot_dimension_numbers<[1], [0], [0], [1], [0, 0, 1, 1], [], []>} : vector<8x32xf32>, vector<32x32xf32>, vector<8x32xf32> -> vector<8x32xf32>
    %c0_73 = arith.constant 0 : index
    %c224_74 = arith.constant 224 : index
    %154 = vector.load %arg5[%c0_73, %c224_74] : memref<1x288xf32, #tpu.memory_space<vmem>>, vector<1x32xf32>
    %155 = vector.broadcast %154 : vector<1x32xf32> to vector<8x32xf32>
    %156 = arith.addf %153, %155 : vector<8x32xf32>
    %157 = arith.mulf %156, %156 : vector<8x32xf32>
    %cst_75 = arith.constant dense<0.000000e+00> : vector<8xf32>
    %158 = vector.multi_reduction <add>, %157, %cst_75 [1] : vector<8x32xf32> to vector<8xf32>
    %159 = vector.shape_cast %158 : vector<8xf32> to vector<8x1xf32>
    %160 = math.sqrt %159 : vector<8x1xf32>
    %cst_76 = arith.constant 9.99999993E-9 : f32
    %161 = vector.broadcast %cst_76 : f32 to vector<8x1xf32>
    %162 = arith.addf %161, %160 : vector<8x1xf32>
    %cst_77 = arith.constant 1.000000e+00 : f32
    %163 = vector.broadcast %cst_77 : f32 to vector<8x1xf32>
    %164 = arith.divf %163, %162 : vector<8x1xf32>
    %165 = vector.broadcast %164 : vector<8x1xf32> to vector<8x32xf32>
    %166 = arith.mulf %156, %165 : vector<8x32xf32>
    %c0_78 = arith.constant 0 : index
    %c256 = arith.constant 256 : index
    %167 = vector.load %arg4[%c0_78, %c256] : memref<32x288xf32, #tpu.memory_space<vmem>>, vector<32x32xf32>
    %cst_79 = arith.constant dense<0.000000e+00> : vector<8x32xf32>
    %168 = tpu.matmul %46, %167, %cst_79 {dimension_numbers = #tpu.dot_dimension_numbers<[1], [0], [0], [1], [0, 0, 1, 1], [], []>} : vector<8x32xf32>, vector<32x32xf32>, vector<8x32xf32> -> vector<8x32xf32>
    %c0_80 = arith.constant 0 : index
    %c256_81 = arith.constant 256 : index
    %169 = vector.load %arg5[%c0_80, %c256_81] : memref<1x288xf32, #tpu.memory_space<vmem>>, vector<1x32xf32>
    %170 = vector.broadcast %169 : vector<1x32xf32> to vector<8x32xf32>
    %171 = arith.addf %168, %170 : vector<8x32xf32>
    %172 = arith.mulf %171, %171 : vector<8x32xf32>
    %cst_82 = arith.constant dense<0.000000e+00> : vector<8xf32>
    %173 = vector.multi_reduction <add>, %172, %cst_82 [1] : vector<8x32xf32> to vector<8xf32>
    %174 = vector.shape_cast %173 : vector<8xf32> to vector<8x1xf32>
    %175 = math.sqrt %174 : vector<8x1xf32>
    %cst_83 = arith.constant 9.99999993E-9 : f32
    %176 = vector.broadcast %cst_83 : f32 to vector<8x1xf32>
    %177 = arith.addf %176, %175 : vector<8x1xf32>
    %cst_84 = arith.constant 1.000000e+00 : f32
    %178 = vector.broadcast %cst_84 : f32 to vector<8x1xf32>
    %179 = arith.divf %178, %177 : vector<8x1xf32>
    %180 = vector.broadcast %179 : vector<8x1xf32> to vector<8x32xf32>
    %181 = arith.mulf %171, %180 : vector<8x32xf32>
    %c0_85 = arith.constant 0 : index
    %c0_86 = arith.constant 0 : index
    %c0_87 = arith.constant 0 : index
    %182 = vector.load %arg7[%c0_85, %c0_86, %c0_87] : memref<2x32x290xf32, #tpu.memory_space<vmem>>, vector<2x32x290xf32>
    %183 = arith.mulf %182, %182 : vector<2x32x290xf32>
    %cst_88 = arith.constant dense<0.000000e+00> : vector<2x290xf32>
    %184 = vector.multi_reduction <add>, %183, %cst_88 [1] : vector<2x32x290xf32> to vector<2x290xf32>
    %185 = vector.shape_cast %184 : vector<2x290xf32> to vector<2x1x290xf32>
    %186 = math.sqrt %185 : vector<2x1x290xf32>
    %cst_89 = arith.constant 9.99999993E-9 : f32
    %187 = vector.broadcast %cst_89 : f32 to vector<2x1x290xf32>
    %188 = arith.addf %187, %186 : vector<2x1x290xf32>
    %cst_90 = arith.constant 1.000000e+00 : f32
    %189 = vector.broadcast %cst_90 : f32 to vector<2x1x290xf32>
    %190 = arith.divf %189, %188 : vector<2x1x290xf32>
    %191 = vector.broadcast %190 : vector<2x1x290xf32> to vector<2x32x290xf32>
    %192 = arith.mulf %182, %191 : vector<2x32x290xf32>
    %c0_91 = arith.constant 0 : index
    %c0_92 = arith.constant 0 : index
    %c0_93 = arith.constant 0 : index
    %193 = vector.load %arg9[%c0_91, %c0_92, %c0_93] : memref<2x32x290xf32, #tpu.memory_space<vmem>>, vector<2x32x290xf32>
    tpu.vector_store %arg9[%c0_91, %c0_92, %c0_93], %192 {strides = array<i32>} : memref<2x32x290xf32, #tpu.memory_space<vmem>>, vector<2x32x290xf32>,
    %c0_94 = arith.constant 0 : index
    %194 = memref.load %arg0[%c0_94] : memref<2xf32, #tpu.memory_space<smem>>
    %c1 = arith.constant 1 : index
    %195 = memref.load %arg0[%c1] : memref<2xf32, #tpu.memory_space<smem>>
    %cst_95 = arith.constant 0.000000e+00 : f32
    %196 = vector.broadcast %cst_95 : f32 to vector<8x256xf32>
    %cst_96 = arith.constant 0.000000e+00 : f32
    %197 = vector.broadcast %cst_96 : f32 to vector<8x256xf32>
    %c0_97 = arith.constant 0 : index
    %c0_98 = arith.constant 0 : index
    %c0_99 = arith.constant 0 : index
    %198 = vector.load %arg9[%c0_97, %c0_98, %c0_99] : memref<2x32x290xf32, #tpu.memory_space<vmem>>, vector<1x32x256xf32>
    %199 = vector.shape_cast %198 : vector<1x32x256xf32> to vector<32x256xf32>
    %cst_100 = arith.constant dense<0.000000e+00> : vector<8x256xf32>
    %200 = tpu.matmul %61, %199, %cst_100 {dimension_numbers = #tpu.dot_dimension_numbers<[1], [0], [0], [1], [0, 0, 1, 1], [], []>} : vector<8x32xf32>, vector<32x256xf32>, vector<8x256xf32> -> vector<8x256xf32>
    %201 = arith.addf %197, %200 : vector<8x256xf32>
    %c0_101 = arith.constant 0 : index
    %c0_102 = arith.constant 0 : index
    %c16 = arith.constant 16 : index
    %202 = vector.load %arg9[%c0_101, %c0_102, %c16] : memref<2x32x290xf32, #tpu.memory_space<vmem>>, vector<1x32x256xf32>
    %203 = vector.shape_cast %202 : vector<1x32x256xf32> to vector<32x256xf32>
    %cst_103 = arith.constant dense<0.000000e+00> : vector<8x256xf32>
    %204 = tpu.matmul %106, %203, %cst_103 {dimension_numbers = #tpu.dot_dimension_numbers<[1], [0], [0], [1], [0, 0, 1, 1], [], []>} : vector<8x32xf32>, vector<32x256xf32>, vector<8x256xf32> -> vector<8x256xf32>
    %205 = arith.addf %201, %204 : vector<8x256xf32>
    %c0_104 = arith.constant 0 : index
    %c0_105 = arith.constant 0 : index
    %c32_106 = arith.constant 32 : index
    %206 = vector.load %arg9[%c0_104, %c0_105, %c32_106] : memref<2x32x290xf32, #tpu.memory_space<vmem>>, vector<1x32x256xf32>
    %207 = vector.shape_cast %206 : vector<1x32x256xf32> to vector<32x256xf32>
    %cst_107 = arith.constant dense<0.000000e+00> : vector<8x256xf32>
    %208 = tpu.matmul %151, %207, %cst_107 {dimension_numbers = #tpu.dot_dimension_numbers<[1], [0], [0], [1], [0, 0, 1, 1], [], []>} : vector<8x32xf32>, vector<32x256xf32>, vector<8x256xf32> -> vector<8x256xf32>
    %209 = arith.addf %205, %208 : vector<8x256xf32>
    %c0_108 = arith.constant 0 : index
    %c0_109 = arith.constant 0 : index
    %210 = vector.load %arg6[%c0_108, %c0_109] : memref<3x256xf32, #tpu.memory_space<vmem>>, vector<1x256xf32>
    %211 = vector.broadcast %210 : vector<1x256xf32> to vector<8x256xf32>
    %212 = arith.mulf %209, %211 : vector<8x256xf32>
    %213 = arith.addf %196, %212 : vector<8x256xf32>
    %cst_110 = arith.constant 0.000000e+00 : f32
    %214 = vector.broadcast %cst_110 : f32 to vector<8x256xf32>
    %c0_111 = arith.constant 0 : index
    %c0_112 = arith.constant 0 : index
    %c1_113 = arith.constant 1 : index
    %215 = vector.load %arg9[%c0_111, %c0_112, %c1_113] : memref<2x32x290xf32, #tpu.memory_space<vmem>>, vector<1x32x256xf32>
    %216 = vector.shape_cast %215 : vector<1x32x256xf32> to vector<32x256xf32>
    %cst_114 = arith.constant dense<0.000000e+00> : vector<8x256xf32>
    %217 = tpu.matmul %76, %216, %cst_114 {dimension_numbers = #tpu.dot_dimension_numbers<[1], [0], [0], [1], [0, 0, 1, 1], [], []>} : vector<8x32xf32>, vector<32x256xf32>, vector<8x256xf32> -> vector<8x256xf32>
    %218 = arith.addf %214, %217 : vector<8x256xf32>
    %c0_115 = arith.constant 0 : index
    %c0_116 = arith.constant 0 : index
    %c17 = arith.constant 17 : index
    %219 = vector.load %arg9[%c0_115, %c0_116, %c17] : memref<2x32x290xf32, #tpu.memory_space<vmem>>, vector<1x32x256xf32>
    %220 = vector.shape_cast %219 : vector<1x32x256xf32> to vector<32x256xf32>
    %cst_117 = arith.constant dense<0.000000e+00> : vector<8x256xf32>
    %221 = tpu.matmul %121, %220, %cst_117 {dimension_numbers = #tpu.dot_dimension_numbers<[1], [0], [0], [1], [0, 0, 1, 1], [], []>} : vector<8x32xf32>, vector<32x256xf32>, vector<8x256xf32> -> vector<8x256xf32>
    %222 = arith.addf %218, %221 : vector<8x256xf32>
    %c0_118 = arith.constant 0 : index
    %c0_119 = arith.constant 0 : index
    %c33 = arith.constant 33 : index
    %223 = vector.load %arg9[%c0_118, %c0_119, %c33] : memref<2x32x290xf32, #tpu.memory_space<vmem>>, vector<1x32x256xf32>
    %224 = vector.shape_cast %223 : vector<1x32x256xf32> to vector<32x256xf32>
    %cst_120 = arith.constant dense<0.000000e+00> : vector<8x256xf32>
    %225 = tpu.matmul %166, %224, %cst_120 {dimension_numbers = #tpu.dot_dimension_numbers<[1], [0], [0], [1], [0, 0, 1, 1], [], []>} : vector<8x32xf32>, vector<32x256xf32>, vector<8x256xf32> -> vector<8x256xf32>
    %226 = arith.addf %222, %225 : vector<8x256xf32>
    %227 = arith.addf %213, %226 : vector<8x256xf32>
    %cst_121 = arith.constant 0.000000e+00 : f32
    %228 = vector.broadcast %cst_121 : f32 to vector<8x256xf32>
    %c0_122 = arith.constant 0 : index
    %c0_123 = arith.constant 0 : index
    %c2 = arith.constant 2 : index
    %229 = vector.load %arg9[%c0_122, %c0_123, %c2] : memref<2x32x290xf32, #tpu.memory_space<vmem>>, vector<1x32x256xf32>
    %230 = vector.shape_cast %229 : vector<1x32x256xf32> to vector<32x256xf32>
    %cst_124 = arith.constant dense<0.000000e+00> : vector<8x256xf32>
    %231 = tpu.matmul %91, %230, %cst_124 {dimension_numbers = #tpu.dot_dimension_numbers<[1], [0], [0], [1], [0, 0, 1, 1], [], []>} : vector<8x32xf32>, vector<32x256xf32>, vector<8x256xf32> -> vector<8x256xf32>
    %232 = arith.addf %228, %231 : vector<8x256xf32>
    %c0_125 = arith.constant 0 : index
    %c0_126 = arith.constant 0 : index
    %c18 = arith.constant 18 : index
    %233 = vector.load %arg9[%c0_125, %c0_126, %c18] : memref<2x32x290xf32, #tpu.memory_space<vmem>>, vector<1x32x256xf32>
    %234 = vector.shape_cast %233 : vector<1x32x256xf32> to vector<32x256xf32>
    %cst_127 = arith.constant dense<0.000000e+00> : vector<8x256xf32>
    %235 = tpu.matmul %136, %234, %cst_127 {dimension_numbers = #tpu.dot_dimension_numbers<[1], [0], [0], [1], [0, 0, 1, 1], [], []>} : vector<8x32xf32>, vector<32x256xf32>, vector<8x256xf32> -> vector<8x256xf32>
    %236 = arith.addf %232, %235 : vector<8x256xf32>
    %c0_128 = arith.constant 0 : index
    %c0_129 = arith.constant 0 : index
    %c34 = arith.constant 34 : index
    %237 = vector.load %arg9[%c0_128, %c0_129, %c34] : memref<2x32x290xf32, #tpu.memory_space<vmem>>, vector<1x32x256xf32>
    %238 = vector.shape_cast %237 : vector<1x32x256xf32> to vector<32x256xf32>
    %cst_130 = arith.constant dense<0.000000e+00> : vector<8x256xf32>
    %239 = tpu.matmul %181, %238, %cst_130 {dimension_numbers = #tpu.dot_dimension_numbers<[1], [0], [0], [1], [0, 0, 1, 1], [], []>} : vector<8x32xf32>, vector<32x256xf32>, vector<8x256xf32> -> vector<8x256xf32>
    %240 = arith.addf %236, %239 : vector<8x256xf32>
    %c2_131 = arith.constant 2 : index
    %c0_132 = arith.constant 0 : index
    %241 = vector.load %arg6[%c2_131, %c0_132] : memref<3x256xf32, #tpu.memory_space<vmem>>, vector<1x256xf32>
    %242 = vector.broadcast %241 : vector<1x256xf32> to vector<8x256xf32>
    %243 = arith.mulf %240, %242 : vector<8x256xf32>
    %244 = arith.addf %227, %243 : vector<8x256xf32>
    %245 = vector.broadcast %194 : f32 to vector<8x256xf32>
    %246 = arith.mulf %244, %245 : vector<8x256xf32>
    %247 = vector.broadcast %195 : f32 to vector<8x256xf32>
    %248 = arith.addf %246, %247 : vector<8x256xf32>
    %c0_133 = arith.constant 0 : index
    %c0_134 = arith.constant 0 : index
    %c0_135 = arith.constant 0 : index
    %249 = vector.load %arg8[%c0_133, %c0_134, %c0_135] : memref<2x8x256xf32, #tpu.memory_space<vmem>>, vector<1x8x256xf32>
    %250 = vector.shape_cast %249 : vector<1x8x256xf32> to vector<8x256xf32>
    %251 = vector.shape_cast %248 : vector<8x256xf32> to vector<1x8x256xf32>
    tpu.vector_store %arg8[%c0_133, %c0_134, %c0_135], %251 {strides = array<i32>} : memref<2x8x256xf32, #tpu.memory_space<vmem>>, vector<1x8x256xf32>,
    %cst_136 = arith.constant 0.000000e+00 : f32
    %252 = vector.broadcast %cst_136 : f32 to vector<8x256xf32>
    %cst_137 = arith.constant 0.000000e+00 : f32
    %253 = vector.broadcast %cst_137 : f32 to vector<8x256xf32>
    %c1_138 = arith.constant 1 : index
    %c0_139 = arith.constant 0 : index
    %c0_140 = arith.constant 0 : index
    %254 = vector.load %arg9[%c1_138, %c0_139, %c0_140] : memref<2x32x290xf32, #tpu.memory_space<vmem>>, vector<1x32x256xf32>
    %255 = vector.shape_cast %254 : vector<1x32x256xf32> to vector<32x256xf32>
    %cst_141 = arith.constant dense<0.000000e+00> : vector<8x256xf32>
    %256 = tpu.matmul %61, %255, %cst_141 {dimension_numbers = #tpu.dot_dimension_numbers<[1], [0], [0], [1], [0, 0, 1, 1], [], []>} : vector<8x32xf32>, vector<32x256xf32>, vector<8x256xf32> -> vector<8x256xf32>
    %257 = arith.addf %253, %256 : vector<8x256xf32>
    %c1_142 = arith.constant 1 : index
    %c0_143 = arith.constant 0 : index
    %c16_144 = arith.constant 16 : index
    %258 = vector.load %arg9[%c1_142, %c0_143, %c16_144] : memref<2x32x290xf32, #tpu.memory_space<vmem>>, vector<1x32x256xf32>
    %259 = vector.shape_cast %258 : vector<1x32x256xf32> to vector<32x256xf32>
    %cst_145 = arith.constant dense<0.000000e+00> : vector<8x256xf32>
    %260 = tpu.matmul %106, %259, %cst_145 {dimension_numbers = #tpu.dot_dimension_numbers<[1], [0], [0], [1], [0, 0, 1, 1], [], []>} : vector<8x32xf32>, vector<32x256xf32>, vector<8x256xf32> -> vector<8x256xf32>
    %261 = arith.addf %257, %260 : vector<8x256xf32>
    %c1_146 = arith.constant 1 : index
    %c0_147 = arith.constant 0 : index
    %c32_148 = arith.constant 32 : index
    %262 = vector.load %arg9[%c1_146, %c0_147, %c32_148] : memref<2x32x290xf32, #tpu.memory_space<vmem>>, vector<1x32x256xf32>
    %263 = vector.shape_cast %262 : vector<1x32x256xf32> to vector<32x256xf32>
    %cst_149 = arith.constant dense<0.000000e+00> : vector<8x256xf32>
    %264 = tpu.matmul %151, %263, %cst_149 {dimension_numbers = #tpu.dot_dimension_numbers<[1], [0], [0], [1], [0, 0, 1, 1], [], []>} : vector<8x32xf32>, vector<32x256xf32>, vector<8x256xf32> -> vector<8x256xf32>
    %265 = arith.addf %261, %264 : vector<8x256xf32>
    %c0_150 = arith.constant 0 : index
    %c0_151 = arith.constant 0 : index
    %266 = vector.load %arg6[%c0_150, %c0_151] : memref<3x256xf32, #tpu.memory_space<vmem>>, vector<1x256xf32>
    %267 = vector.broadcast %266 : vector<1x256xf32> to vector<8x256xf32>
    %268 = arith.mulf %265, %267 : vector<8x256xf32>
    %269 = arith.addf %252, %268 : vector<8x256xf32>
    %cst_152 = arith.constant 0.000000e+00 : f32
    %270 = vector.broadcast %cst_152 : f32 to vector<8x256xf32>
    %c1_153 = arith.constant 1 : index
    %c0_154 = arith.constant 0 : index
    %c1_155 = arith.constant 1 : index
    %271 = vector.load %arg9[%c1_153, %c0_154, %c1_155] : memref<2x32x290xf32, #tpu.memory_space<vmem>>, vector<1x32x256xf32>
    %272 = vector.shape_cast %271 : vector<1x32x256xf32> to vector<32x256xf32>
    %cst_156 = arith.constant dense<0.000000e+00> : vector<8x256xf32>
    %273 = tpu.matmul %76, %272, %cst_156 {dimension_numbers = #tpu.dot_dimension_numbers<[1], [0], [0], [1], [0, 0, 1, 1], [], []>} : vector<8x32xf32>, vector<32x256xf32>, vector<8x256xf32> -> vector<8x256xf32>
    %274 = arith.addf %270, %273 : vector<8x256xf32>
    %c1_157 = arith.constant 1 : index
    %c0_158 = arith.constant 0 : index
    %c17_159 = arith.constant 17 : index
    %275 = vector.load %arg9[%c1_157, %c0_158, %c17_159] : memref<2x32x290xf32, #tpu.memory_space<vmem>>, vector<1x32x256xf32>
    %276 = vector.shape_cast %275 : vector<1x32x256xf32> to vector<32x256xf32>
    %cst_160 = arith.constant dense<0.000000e+00> : vector<8x256xf32>
    %277 = tpu.matmul %121, %276, %cst_160 {dimension_numbers = #tpu.dot_dimension_numbers<[1], [0], [0], [1], [0, 0, 1, 1], [], []>} : vector<8x32xf32>, vector<32x256xf32>, vector<8x256xf32> -> vector<8x256xf32>
    %278 = arith.addf %274, %277 : vector<8x256xf32>
    %c1_161 = arith.constant 1 : index
    %c0_162 = arith.constant 0 : index
    %c33_163 = arith.constant 33 : index
    %279 = vector.load %arg9[%c1_161, %c0_162, %c33_163] : memref<2x32x290xf32, #tpu.memory_space<vmem>>, vector<1x32x256xf32>
    %280 = vector.shape_cast %279 : vector<1x32x256xf32> to vector<32x256xf32>
    %cst_164 = arith.constant dense<0.000000e+00> : vector<8x256xf32>
    %281 = tpu.matmul %166, %280, %cst_164 {dimension_numbers = #tpu.dot_dimension_numbers<[1], [0], [0], [1], [0, 0, 1, 1], [], []>} : vector<8x32xf32>, vector<32x256xf32>, vector<8x256xf32> -> vector<8x256xf32>
    %282 = arith.addf %278, %281 : vector<8x256xf32>
    %283 = arith.addf %269, %282 : vector<8x256xf32>
    %cst_165 = arith.constant 0.000000e+00 : f32
    %284 = vector.broadcast %cst_165 : f32 to vector<8x256xf32>
    %c1_166 = arith.constant 1 : index
    %c0_167 = arith.constant 0 : index
    %c2_168 = arith.constant 2 : index
    %285 = vector.load %arg9[%c1_166, %c0_167, %c2_168] : memref<2x32x290xf32, #tpu.memory_space<vmem>>, vector<1x32x256xf32>
    %286 = vector.shape_cast %285 : vector<1x32x256xf32> to vector<32x256xf32>
    %cst_169 = arith.constant dense<0.000000e+00> : vector<8x256xf32>
    %287 = tpu.matmul %91, %286, %cst_169 {dimension_numbers = #tpu.dot_dimension_numbers<[1], [0], [0], [1], [0, 0, 1, 1], [], []>} : vector<8x32xf32>, vector<32x256xf32>, vector<8x256xf32> -> vector<8x256xf32>
    %288 = arith.addf %284, %287 : vector<8x256xf32>
    %c1_170 = arith.constant 1 : index
    %c0_171 = arith.constant 0 : index
    %c18_172 = arith.constant 18 : index
    %289 = vector.load %arg9[%c1_170, %c0_171, %c18_172] : memref<2x32x290xf32, #tpu.memory_space<vmem>>, vector<1x32x256xf32>
    %290 = vector.shape_cast %289 : vector<1x32x256xf32> to vector<32x256xf32>
    %cst_173 = arith.constant dense<0.000000e+00> : vector<8x256xf32>
    %291 = tpu.matmul %136, %290, %cst_173 {dimension_numbers = #tpu.dot_dimension_numbers<[1], [0], [0], [1], [0, 0, 1, 1], [], []>} : vector<8x32xf32>, vector<32x256xf32>, vector<8x256xf32> -> vector<8x256xf32>
    %292 = arith.addf %288, %291 : vector<8x256xf32>
    %c1_174 = arith.constant 1 : index
    %c0_175 = arith.constant 0 : index
    %c34_176 = arith.constant 34 : index
    %293 = vector.load %arg9[%c1_174, %c0_175, %c34_176] : memref<2x32x290xf32, #tpu.memory_space<vmem>>, vector<1x32x256xf32>
    %294 = vector.shape_cast %293 : vector<1x32x256xf32> to vector<32x256xf32>
    %cst_177 = arith.constant dense<0.000000e+00> : vector<8x256xf32>
    %295 = tpu.matmul %181, %294, %cst_177 {dimension_numbers = #tpu.dot_dimension_numbers<[1], [0], [0], [1], [0, 0, 1, 1], [], []>} : vector<8x32xf32>, vector<32x256xf32>, vector<8x256xf32> -> vector<8x256xf32>
    %296 = arith.addf %292, %295 : vector<8x256xf32>
    %c2_178 = arith.constant 2 : index
    %c0_179 = arith.constant 0 : index
    %297 = vector.load %arg6[%c2_178, %c0_179] : memref<3x256xf32, #tpu.memory_space<vmem>>, vector<1x256xf32>
    %298 = vector.broadcast %297 : vector<1x256xf32> to vector<8x256xf32>
    %299 = arith.mulf %296, %298 : vector<8x256xf32>
    %300 = arith.addf %283, %299 : vector<8x256xf32>
    %301 = vector.broadcast %194 : f32 to vector<8x256xf32>
    %302 = arith.mulf %300, %301 : vector<8x256xf32>
    %303 = vector.broadcast %195 : f32 to vector<8x256xf32>
    %304 = arith.addf %302, %303 : vector<8x256xf32>
    %c1_180 = arith.constant 1 : index
    %c0_181 = arith.constant 0 : index
    %c0_182 = arith.constant 0 : index
    %305 = vector.load %arg8[%c1_180, %c0_181, %c0_182] : memref<2x8x256xf32, #tpu.memory_space<vmem>>, vector<1x8x256xf32>
    %306 = vector.shape_cast %305 : vector<1x8x256xf32> to vector<8x256xf32>
    %307 = vector.shape_cast %304 : vector<8x256xf32> to vector<1x8x256xf32>
    tpu.vector_store %arg8[%c1_180, %c0_181, %c0_182], %307 {strides = array<i32>} : memref<2x8x256xf32, #tpu.memory_space<vmem>>, vector<1x8x256xf32>,
    return
  }
}

</mosaic_0001>

<llo_original>
// kernel: tpu_custom_call.1
$region0: #{tpu_custom_call.1}
  #allocation0 [shape = 'u32[]', space=smem, size = 0x4, offset = 0x4, fixed_abs, tag = 'smem constant byte address 0x4 - core index']
  #allocation1 [shape = 'u32[144,128]{1,0:T(1,128)}', space=vmem, size = 0x12000, scoped, tag = 'internal scratch']
  #allocation2 [shape = 'f32[2,32,290]{2,1,0:T(8,128)}', space=vmem, size = 0x18000, scoped, tag = 'scratch operand']
  %s0 = inlined_call_operand.hbm [shape: f32[2], index: 0, kind: input, shape index: {}]
  %s1 = inlined_call_operand.hbm [shape: f32[8,32], index: 1, kind: input, shape index: {}]
  %s2 = inlined_call_operand.hbm [shape: f32[32,32], index: 2, kind: input, shape index: {}]
  %s3 = inlined_call_operand.vmem [shape: f32[1,32], index: 3, kind: input, shape index: {}]
  %s4 = inlined_call_operand.hbm [shape: f32[32,288], index: 4, kind: input, shape index: {}]
  %s5 = inlined_call_operand.hbm [shape: f32[1,288], index: 5, kind: input, shape index: {}]
  %s6 = inlined_call_operand.vmem [shape: f32[3,256], index: 6, kind: input, shape index: {}]
  %s7 = inlined_call_operand.hbm [shape: f32[2,32,290], index: 7, kind: input, shape index: {}]
  %s8 = inlined_call_operand.hbm [shape: f32[2,8,256], index: 8, kind: output, shape index: {}]
  %s9 = sld [smem:[#allocation0]]
  $region66: #{tpu_custom_call.1} parent=0
    _
  %s11 = ssub.s32 1, %s9
  %s12 = scalar_select 0, %s11, %s9
  $region1: #{tpu_custom_call.1} parent=0
    #allocation3 [shape = 'u8[512]{0}', space=smem, size = 0x200, scoped, tag = 'input window, operand 0, single buffered']
    #allocation4 [shape = 's32[1]{0}', space=sflag, size = 0x4, scoped, tag = 'scoped memory for tpu_custom_call.1']
    #allocation5 [shape = 's32[1]{0}', space=sflag, size = 0x4, scoped, tag = 'scoped memory for tpu_custom_call.1']
    #allocation6 [shape = 's32[1]{0}', space=sflag, size = 0x4, scoped, tag = 'scoped memory for tpu_custom_call.1']
    #allocation7 [shape = 'u8[4096]{0}', space=vmem, size = 0x1000, scoped, tag = 'input window, operand 1, single buffered']
    #allocation8 [shape = 'u8[16384]{0}', space=vmem, size = 0x4000, scoped, tag = 'input window, operand 2, single buffered']
    #allocation9 [shape = 's32[1]{0}', space=sflag, size = 0x4, scoped, tag = 'scoped memory for tpu_custom_call.1']
    #allocation10 [shape = 'u8[49152]{0}', space=vmem, size = 0xc000, scoped, tag = 'input window, operand 4, single buffered']
    #allocation11 [shape = 'u8[1536]{0}', space=vmem, size = 0x800, scoped, tag = 'input window, operand 5, single buffered']
    #allocation12 [shape = 's32[1]{0}', space=sflag, size = 0x4, scoped, tag = 'scoped memory for tpu_custom_call.1']
    #allocation13 [shape = 'u8[98304]{0}', space=vmem, size = 0x18000, scoped, tag = 'input window, operand 7, single buffered']
    #allocation14 [shape = 'u8[16384]{0}', space=vmem, size = 0x4000, scoped, tag = 'output window, operand 0, single buffered']
    %13 = vsyncpa [#allocation6], 0
    %14 = vsyncpa [#allocation4], 0
    %15 = vsyncpa [#allocation9], 0
    %16 = vsyncpa [#allocation12], 0
    %17 = vsyncpa [#allocation5], 0
    // Predicated region
    $region2: #{tpu_custom_call.1} parent=1 // pred_check
      _
    $region3: #{tpu_custom_call.1} parent=1 // pred_check_branch
      %19 = sbr.rel (0) target = $region5
    $region4: #{tpu_custom_call.1} parent=1 // pred_region
      %s21 = ssub.s32 16, 16
      %22 = vsyncadd [#allocation6], %s21
      %25 = dma.hbm_to_smem %s0, 16, [#allocation3], [#allocation6]
    $region5: #{tpu_custom_call.1} parent=1 // pred_fallthru
      _
    // Predicated region
    $region6: #{tpu_custom_call.1} parent=1 // pred_check
      _
    $region7: #{tpu_custom_call.1} parent=1 // pred_check_branch
      %27 = sbr.rel (0) target = $region9
    $region8: #{tpu_custom_call.1} parent=1 // pred_region
      %s29 = ssub.s32 128, 128
      %30 = vsyncadd [#allocation4], %s29
      %s32 = sshll.u32 [#allocation7], 4
      %s33 = int_to_ptr.vmem [resolvable:$true] %s32
      %35 = dma.hbm_to_vmem [thread:$0]  %s1, 128, %s33, [#allocation4]
    $region9: #{tpu_custom_call.1} parent=1 // pred_fallthru
      _
    // Predicated region
    $region10: #{tpu_custom_call.1} parent=1 // pred_check
      _
    $region11: #{tpu_custom_call.1} parent=1 // pred_check_branch
      %37 = sbr.rel (0) target = $region13
    $region12: #{tpu_custom_call.1} parent=1 // pred_region
      %s39 = ssub.s32 512, 512
      %40 = vsyncadd [#allocation9], %s39
      %s41 = sshll.u32 [#allocation8], 4
      %s42 = int_to_ptr.vmem [resolvable:$true] %s41
      %47 = dma.hbm_to_vmem [thread:$0]  %s2, 512, %s42, [#allocation9], 128, 128, 8
    $region13: #{tpu_custom_call.1} parent=1 // pred_fallthru
      _
    // Predicated region
    $region14: #{tpu_custom_call.1} parent=1 // pred_check
      _
    $region15: #{tpu_custom_call.1} parent=1 // pred_check_branch
      %49 = sbr.rel (0) target = $region17
    $region16: #{tpu_custom_call.1} parent=1 // pred_region
      _
    $region17: #{tpu_custom_call.1} parent=1 // pred_fallthru
      _
    // Predicated region
    $region18: #{tpu_custom_call.1} parent=1 // pred_check
      _
    $region19: #{tpu_custom_call.1} parent=1 // pred_check_branch
      %51 = sbr.rel (0) target = $region21
    $region20: #{tpu_custom_call.1} parent=1 // pred_region
      %s53 = ssub.s32 1536, 1536
      %54 = vsyncadd [#allocation9], %s53
      %s55 = sshll.u32 [#allocation10], 4
      %s56 = int_to_ptr.vmem [resolvable:$true] %s55
      %61 = dma.hbm_to_vmem [thread:$0]  %s4, 1536, %s56, [#allocation9], 384, 384, 24
    $region21: #{tpu_custom_call.1} parent=1 // pred_fallthru
      _
    // Predicated region
    $region22: #{tpu_custom_call.1} parent=1 // pred_check
      _
    $region23: #{tpu_custom_call.1} parent=1 // pred_check_branch
      %63 = sbr.rel (0) target = $region25
    $region24: #{tpu_custom_call.1} parent=1 // pred_region
      %s65 = ssub.s32 48, 48
      %66 = vsyncadd [#allocation12], %s65
      %s68 = sshll.u32 [#allocation11], 4
      %s69 = int_to_ptr.vmem [resolvable:$true] %s68
      %71 = dma.hbm_to_vmem [thread:$0]  %s5, 48, %s69, [#allocation12]
    $region25: #{tpu_custom_call.1} parent=1 // pred_fallthru
      _
    // Predicated region
    $region26: #{tpu_custom_call.1} parent=1 // pred_check
      _
    $region27: #{tpu_custom_call.1} parent=1 // pred_check_branch
      %73 = sbr.rel (0) target = $region29
    $region28: #{tpu_custom_call.1} parent=1 // pred_region
      _
    $region29: #{tpu_custom_call.1} parent=1 // pred_fallthru
      _
    // Predicated region
    $region30: #{tpu_custom_call.1} parent=1 // pred_check
      _
    $region31: #{tpu_custom_call.1} parent=1 // pred_check_branch
      %75 = sbr.rel (0) target = $region33
    $region32: #{tpu_custom_call.1} parent=1 // pred_region
      %s77 = ssub.s32 3072, 3072
      %78 = vsyncadd [#allocation12], %s77
      %s79 = sshll.u32 [#allocation13], 4
      %s80 = int_to_ptr.vmem [resolvable:$true] %s79
      %85 = dma.hbm_to_vmem [thread:$0]  %s7, 3072, %s80, [#allocation12], 384, 384, 24
    $region33: #{tpu_custom_call.1} parent=1 // pred_fallthru
      _
    // Predicated region
    $region34: #{tpu_custom_call.1} parent=1 // pred_check
      _
    $region35: #{tpu_custom_call.1} parent=1 // pred_check_branch
      %87 = sbr.rel (0) target = $region37
    $region36: #{tpu_custom_call.1} parent=1 // pred_region
      %88 = dma.done [#allocation6], 16
    $region37: #{tpu_custom_call.1} parent=1 // pred_fallthru
      _
    // Predicated region
    $region38: #{tpu_custom_call.1} parent=1 // pred_check
      _
    $region39: #{tpu_custom_call.1} parent=1 // pred_check_branch
      %90 = sbr.rel (0) target = $region41
    $region40: #{tpu_custom_call.1} parent=1 // pred_region
      %91 = dma.done [#allocation4], 128
    $region41: #{tpu_custom_call.1} parent=1 // pred_fallthru
      _
    // Predicated region
    $region42: #{tpu_custom_call.1} parent=1 // pred_check
      _
    $region43: #{tpu_custom_call.1} parent=1 // pred_check_branch
      %93 = sbr.rel (0) target = $region45
    $region44: #{tpu_custom_call.1} parent=1 // pred_region
      %94 = dma.done [#allocation9], 512
    $region45: #{tpu_custom_call.1} parent=1 // pred_fallthru
      _
    // Predicated region
    $region46: #{tpu_custom_call.1} parent=1 // pred_check
      _
    $region47: #{tpu_custom_call.1} parent=1 // pred_check_branch
      %96 = sbr.rel (0) target = $region49
    $region48: #{tpu_custom_call.1} parent=1 // pred_region
      %97 = dma.done [#allocation9], 1536
    $region49: #{tpu_custom_call.1} parent=1 // pred_fallthru
      _
    // Predicated region
    $region50: #{tpu_custom_call.1} parent=1 // pred_check
      _
    $region51: #{tpu_custom_call.1} parent=1 // pred_check_branch
      %99 = sbr.rel (0) target = $region53
    $region52: #{tpu_custom_call.1} parent=1 // pred_region
      %100 = dma.done [#allocation12], 48
    $region53: #{tpu_custom_call.1} parent=1 // pred_fallthru
      _
    // Predicated region
    $region54: #{tpu_custom_call.1} parent=1 // pred_check
      _
    $region55: #{tpu_custom_call.1} parent=1 // pred_check_branch
      %102 = sbr.rel (0) target = $region57
    $region56: #{tpu_custom_call.1} parent=1 // pred_region
      %103 = dma.done [#allocation12], 3072
    $region57: #{tpu_custom_call.1} parent=1 // pred_fallthru
      _
    %104 = sfence
    %v105 = vld [vmem:[#allocation7] sm:$0xff]
    %v106 = vld [vmem:[#allocation8] sm:$0xff]
    %v107 = vld [vmem:[#allocation8 + $0x8] sm:$0xff]
    %v108 = vld [vmem:[#allocation8 + $0x10] sm:$0xff]
    %v109 = vld [vmem:[#allocation8 + $0x18] sm:$0xff]
    %v110 = vld [vmem:[%s3] sm:$0x1]
    %v112 = vlaneseq
    %v113 = vshrl.u32 %v112, 7
    %v114 = vsub.s32 0, %v113
    %v115 = vrot.slane %v110, %v114
    %vm117 = vcmask 261120
    %v119 = vsel %vm117, %v105, 0
    %121 = vmatprep.subr.mxu0 0.0
    %122 = vmatpush1.msra.mxu0 0.0
    %123 = vmatprep.subr.mxu0 0.0
    %124 = vmatpush1.msra.mxu0 0.0
    %125 = vmatprep.subr.mxu0 0.0
    %126 = vmatpush1.msra.mxu0 0.0
    %127 = vmatprep.subr.mxu0 0.0
    %128 = vmatpush1.msra.mxu0 0.0
    %129 = vmatprep.subr.mxu0 0.0
    %130 = vmatpush1.msra.mxu0 0.0
    %131 = vmatprep.subr.mxu0 0.0
    %132 = vmatpush1.msra.mxu0 0.0
    %133 = vmatprep.subr.mxu0 0.0
    %134 = vmatpush1.msra.mxu0 0.0
    %135 = vmatprep.subr.mxu0 0.0
    %136 = vmatpush1.msra.mxu0 0.0
    %137 = vmatprep.subr.mxu0 0.0
    %138 = vmatpush1.msra.mxu0 0.0
    %139 = vmatprep.subr.mxu0 0.0
    %140 = vmatpush1.msra.mxu0 0.0
    %141 = vmatprep.subr.mxu0 0.0
    %142 = vmatpush1.msra.mxu0 0.0
    %143 = vmatprep.subr.mxu0 0.0
    %144 = vmatpush1.msra.mxu0 0.0
    %145 = vmatprep.subr.mxu0 0.0
    %146 = vmatpush1.msra.mxu0 %v109
    %147 = vmatprep.subr.mxu0 0.0
    %148 = vmatpush1.msra.mxu0 %v108
    %149 = vmatprep.subr.mxu0 0.0
    %150 = vmatpush1.msra.mxu0 %v107
    %151 = vmatprep.subr.mxu0 0.0
    %152 = vmatpush1.msra.mxu0 %v106
    %153 = vmatprep.subr.mxu0 0.0
    %154 = vmatpush2.msra.mxu0 0.0
    %155 = vmatprep.subr.mxu0 0.0
    %156 = vmatpush2.msra.mxu0 0.0
    %157 = vmatprep.subr.mxu0 0.0
    %158 = vmatpush2.msra.mxu0 0.0
    %159 = vmatprep.subr.mxu0 0.0
    %160 = vmatpush2.msra.mxu0 0.0
    %161 = vmatprep.subr.mxu0 0.0
    %162 = vmatpush2.msra.mxu0 0.0
    %163 = vmatprep.subr.mxu0 0.0
    %164 = vmatpush2.msra.mxu0 0.0
    %165 = vmatprep.subr.mxu0 0.0
    %166 = vmatpush2.msra.mxu0 0.0
    %167 = vmatprep.subr.mxu0 0.0
    %168 = vmatpush2.msra.mxu0 0.0
    %169 = vmatprep.subr.mxu0 0.0
    %170 = vmatpush2.msra.mxu0 0.0
    %171 = vmatprep.subr.mxu0 0.0
    %172 = vmatpush2.msra.mxu0 0.0
    %173 = vmatprep.subr.mxu0 0.0
    %174 = vmatpush2.msra.mxu0 0.0
    %175 = vmatprep.subr.mxu0 0.0
    %176 = vmatpush2.msra.mxu0 0.0
    %177 = vmatprep.subr.mxu0 0.0
    %178 = vmatpush2.msra.mxu0 0.0
    %179 = vmatprep.subr.mxu0 0.0
    %180 = vmatpush2.msra.mxu0 0.0
    %181 = vmatprep.subr.mxu0 0.0
    %182 = vmatpush2.msra.mxu0 0.0
    %183 = vmatprep.subr.mxu0 0.0
    %184 = vmatpush2.msra.mxu0 0.0
    %185 = vmatprep.mubr.f32.mxu0 0.0
    %186 = vmatmul.mubr.f32.gmra.mxu0 %v119
    %v187 = vpop.f32.mrf.mxu0
    %v188 = vadd.f32 %v115, %v187
    %v189 = vpop.f32.mrf.mxu0
    %190 = vdwg.mxu0
    %v191 = vmul.f32 %v188, 0.5
    %v192 = vmul.f32 %v188, 0.70710677
    %vm193 = vcmp.ge.f32.partialorder %v192, 0.0
    %v194 = vsel %vm193, 1.0, -1.0
    %v195 = vmul.f32 %v192, %v194
    %v196 = vmul.f32 %v195, 0.3275911
    %v197 = vadd.f32 %v196, 1.0
    %v198 = vrcp.pop %v197
    %v199 = vmul.f32 1.0, %v198
    %v200 = vmul.f32 %v199, 1.0614054
    %v201 = vadd.f32 %v200, -1.4531521
    %v202 = vmul.f32 %v201, %v199
    %v203 = vadd.f32 %v202, 1.4214138
    %v204 = vmul.f32 %v203, %v199
    %v205 = vadd.f32 %v204, -0.28449672
    %v206 = vmul.f32 %v205, %v199
    %v207 = vadd.f32 %v206, 0.2548296
    %v208 = vmul.f32 %v207, %v199
    %v209 = vmul.f32 %v195, %v195
    %v210 = vsub.f32 0.0, %v209
    %v211 = vmul.f32 %v210, 1.442695
    %v212 = vpow.pop %v211
    %v213 = vmul.f32 %v208, %v212
    %v214 = vsub.f32 1.0, %v213
    %v215 = vmul.f32 %v194, %v214
    %v216 = vadd.f32 %v215, 1.0
    %v217 = vmul.f32 %v191, %v216
    %v218 = vld [vmem:[#allocation10] sm:$0xff]
    %v219 = vld [vmem:[#allocation10 + $0x18] sm:$0xff]
    %v220 = vld [vmem:[#allocation10 + $0x30] sm:$0xff]
    %v221 = vld [vmem:[#allocation10 + $0x48] sm:$0xff]
    %v222 = vld [vmem:[#allocation11] sm:$0x1]
    %v224 = vlaneseq
    %v225 = vshrl.u32 %v224, 7
    %v226 = vsub.s32 0, %v225
    %v227 = vrot.slane %v222, %v226
    %v230 = vsel %vm117, %v217, 0
    %232 = vmatprep.subr.mxu0 0.0
    %233 = vmatpush1.msra.mxu0 0.0
    %234 = vmatprep.subr.mxu0 0.0
    %235 = vmatpush1.msra.mxu0 0.0
    %236 = vmatprep.subr.mxu0 0.0
    %237 = vmatpush1.msra.mxu0 0.0
    %238 = vmatprep.subr.mxu0 0.0
    %239 = vmatpush1.msra.mxu0 0.0
    %240 = vmatprep.subr.mxu0 0.0
    %241 = vmatpush1.msra.mxu0 0.0
    %242 = vmatprep.subr.mxu0 0.0
    %243 = vmatpush1.msra.mxu0 0.0
    %244 = vmatprep.subr.mxu0 0.0
    %245 = vmatpush1.msra.mxu0 0.0
    %246 = vmatprep.subr.mxu0 0.0
    %247 = vmatpush1.msra.mxu0 0.0
    %248 = vmatprep.subr.mxu0 0.0
    %249 = vmatpush1.msra.mxu0 0.0
    %250 = vmatprep.subr.mxu0 0.0
    %251 = vmatpush1.msra.mxu0 0.0
    %252 = vmatprep.subr.mxu0 0.0
    %253 = vmatpush1.msra.mxu0 0.0
    %254 = vmatprep.subr.mxu0 0.0
    %255 = vmatpush1.msra.mxu0 0.0
    %256 = vmatprep.subr.mxu0 0.0
    %257 = vmatpush1.msra.mxu0 %v221
    %258 = vmatprep.subr.mxu0 0.0
    %259 = vmatpush1.msra.mxu0 %v220
    %260 = vmatprep.subr.mxu0 0.0
    %261 = vmatpush1.msra.mxu0 %v219
    %262 = vmatprep.subr.mxu0 0.0
    %263 = vmatpush1.msra.mxu0 %v218
    %264 = vmatprep.subr.mxu0 0.0
    %265 = vmatpush2.msra.mxu0 0.0
    %266 = vmatprep.subr.mxu0 0.0
    %267 = vmatpush2.msra.mxu0 0.0
    %268 = vmatprep.subr.mxu0 0.0
    %269 = vmatpush2.msra.mxu0 0.0
    %270 = vmatprep.subr.mxu0 0.0
    %271 = vmatpush2.msra.mxu0 0.0
    %272 = vmatprep.subr.mxu0 0.0
    %273 = vmatpush2.msra.mxu0 0.0
    %274 = vmatprep.subr.mxu0 0.0
    %275 = vmatpush2.msra.mxu0 0.0
    %276 = vmatprep.subr.mxu0 0.0
    %277 = vmatpush2.msra.mxu0 0.0
    %278 = vmatprep.subr.mxu0 0.0
    %279 = vmatpush2.msra.mxu0 0.0
    %280 = vmatprep.subr.mxu0 0.0
    %281 = vmatpush2.msra.mxu0 0.0
    %282 = vmatprep.subr.mxu0 0.0
    %283 = vmatpush2.msra.mxu0 0.0
    %284 = vmatprep.subr.mxu0 0.0
    %285 = vmatpush2.msra.mxu0 0.0
    %286 = vmatprep.subr.mxu0 0.0
    %287 = vmatpush2.msra.mxu0 0.0
    %288 = vmatprep.subr.mxu0 0.0
    %289 = vmatpush2.msra.mxu0 0.0
    %290 = vmatprep.subr.mxu0 0.0
    %291 = vmatpush2.msra.mxu0 0.0
    %292 = vmatprep.subr.mxu0 0.0
    %293 = vmatpush2.msra.mxu0 0.0
    %294 = vmatprep.subr.mxu0 0.0
    %295 = vmatpush2.msra.mxu0 0.0
    %296 = vmatprep.mubr.f32.mxu0 0.0
    %297 = vmatmul.mubr.f32.gmra.mxu0 %v230
    %v298 = vpop.f32.mrf.mxu0
    %v299 = vadd.f32 %v227, %v298
    %v300 = vpop.f32.mrf.mxu0
    %301 = vdwg.mxu0
    %v302 = vmul.f32 %v299, %v299
    %v303 = vsel %vm117, %v302, 0.0
    %304 = vadd.xlane.f32.xlu0 %v303
    %v305 = vpop.xlane.xlu0 %304
    %v306 = vrsqrt.pop %v305
    %v307 = vmul.f32 %v305, %v306
    %vm308 = vcmp.eq.f32.partialorder %v305, inf
    %v309 = vsel %vm308, %v305, %v307
    %vm310 = vcmp.eq.f32.partialorder %v305, 0.0
    %v311 = vand.u32 %v305, 2147483648
    %v312 = vsel %vm310, %v311, %v309
    %v313 = vadd.f32 %v312, 1e-08
    %v314 = vrcp.pop %v313
    %v315 = vmul.f32 1.0, %v314
    %v316 = vmul.f32 %v299, %v315
    %321 = vrot.lane.b32.xlu0 %v218, 96
    %v322 = vpop.permute.xlu0 %321
    %323 = vrot.lane.b32.xlu0 %v219, 96
    %v324 = vpop.permute.xlu0 %323
    %325 = vrot.lane.b32.xlu0 %v220, 96
    %v326 = vpop.permute.xlu0 %325
    %327 = vrot.lane.b32.xlu0 %v221, 96
    %v328 = vpop.permute.xlu0 %327
    %333 = vrot.lane.b32.xlu0 %v227, 96
    %v334 = vpop.permute.xlu0 %333
    %336 = vmatprep.subr.mxu0 0.0
    %337 = vmatpush1.msra.mxu0 0.0
    %338 = vmatprep.subr.mxu0 0.0
    %339 = vmatpush1.msra.mxu0 0.0
    %340 = vmatprep.subr.mxu0 0.0
    %341 = vmatpush1.msra.mxu0 0.0
    %342 = vmatprep.subr.mxu0 0.0
    %343 = vmatpush1.msra.mxu0 0.0
    %344 = vmatprep.subr.mxu0 0.0
    %345 = vmatpush1.msra.mxu0 0.0
    %346 = vmatprep.subr.mxu0 0.0
    %347 = vmatpush1.msra.mxu0 0.0
    %348 = vmatprep.subr.mxu0 0.0
    %349 = vmatpush1.msra.mxu0 0.0
    %350 = vmatprep.subr.mxu0 0.0
    %351 = vmatpush1.msra.mxu0 0.0
    %352 = vmatprep.subr.mxu0 0.0
    %353 = vmatpush1.msra.mxu0 0.0
    %354 = vmatprep.subr.mxu0 0.0
    %355 = vmatpush1.msra.mxu0 0.0
    %356 = vmatprep.subr.mxu0 0.0
    %357 = vmatpush1.msra.mxu0 0.0
    %358 = vmatprep.subr.mxu0 0.0
    %359 = vmatpush1.msra.mxu0 0.0
    %360 = vmatprep.subr.mxu0 0.0
    %361 = vmatpush1.msra.mxu0 %v328
    %362 = vmatprep.subr.mxu0 0.0
    %363 = vmatpush1.msra.mxu0 %v326
    %364 = vmatprep.subr.mxu0 0.0
    %365 = vmatpush1.msra.mxu0 %v324
    %366 = vmatprep.subr.mxu0 0.0
    %367 = vmatpush1.msra.mxu0 %v322
    %368 = vmatprep.subr.mxu0 0.0
    %369 = vmatpush2.msra.mxu0 0.0
    %370 = vmatprep.subr.mxu0 0.0
    %371 = vmatpush2.msra.mxu0 0.0
    %372 = vmatprep.subr.mxu0 0.0
    %373 = vmatpush2.msra.mxu0 0.0
    %374 = vmatprep.subr.mxu0 0.0
    %375 = vmatpush2.msra.mxu0 0.0
    %376 = vmatprep.subr.mxu0 0.0
    %377 = vmatpush2.msra.mxu0 0.0
    %378 = vmatprep.subr.mxu0 0.0
    %379 = vmatpush2.msra.mxu0 0.0
    %380 = vmatprep.subr.mxu0 0.0
    %381 = vmatpush2.msra.mxu0 0.0
    %382 = vmatprep.subr.mxu0 0.0
    %383 = vmatpush2.msra.mxu0 0.0
    %384 = vmatprep.subr.mxu0 0.0
    %385 = vmatpush2.msra.mxu0 0.0
    %386 = vmatprep.subr.mxu0 0.0
    %387 = vmatpush2.msra.mxu0 0.0
    %388 = vmatprep.subr.mxu0 0.0
    %389 = vmatpush2.msra.mxu0 0.0
    %390 = vmatprep.subr.mxu0 0.0
    %391 = vmatpush2.msra.mxu0 0.0
    %392 = vmatprep.subr.mxu0 0.0
    %393 = vmatpush2.msra.mxu0 0.0
    %394 = vmatprep.subr.mxu0 0.0
    %395 = vmatpush2.msra.mxu0 0.0
    %396 = vmatprep.subr.mxu0 0.0
    %397 = vmatpush2.msra.mxu0 0.0
    %398 = vmatprep.subr.mxu0 0.0
    %399 = vmatpush2.msra.mxu0 0.0
    %400 = vmatprep.mubr.f32.mxu0 0.0
    %401 = vmatmul.mubr.f32.gmra.mxu0 %v230
    %v402 = vpop.f32.mrf.mxu0
    %v403 = vadd.f32 %v334, %v402
    %v404 = vpop.f32.mrf.mxu0
    %405 = vdwg.mxu0
    %v406 = vmul.f32 %v403, %v403
    %v407 = vsel %vm117, %v406, 0.0
    %408 = vadd.xlane.f32.xlu0 %v407
    %v409 = vpop.xlane.xlu0 %408
    %v410 = vrsqrt.pop %v409
    %v411 = vmul.f32 %v409, %v410
    %vm412 = vcmp.eq.f32.partialorder %v409, inf
    %v413 = vsel %vm412, %v409, %v411
    %vm414 = vcmp.eq.f32.partialorder %v409, 0.0
    %v415 = vand.u32 %v409, 2147483648
    %v416 = vsel %vm414, %v415, %v413
    %v417 = vadd.f32 %v416, 1e-08
    %v418 = vrcp.pop %v417
    %v419 = vmul.f32 1.0, %v418
    %v420 = vmul.f32 %v403, %v419
    %421 = vrot.lane.b32.xlu0 %v218, 64
    %v422 = vpop.permute.xlu0 %421
    %423 = vrot.lane.b32.xlu0 %v219, 64
    %v424 = vpop.permute.xlu0 %423
    %425 = vrot.lane.b32.xlu0 %v220, 64
    %v426 = vpop.permute.xlu0 %425
    %427 = vrot.lane.b32.xlu0 %v221, 64
    %v428 = vpop.permute.xlu0 %427
    %433 = vrot.lane.b32.xlu0 %v227, 64
    %v434 = vpop.permute.xlu0 %433
    %436 = vmatprep.subr.mxu0 0.0
    %437 = vmatpush1.msra.mxu0 0.0
    %438 = vmatprep.subr.mxu0 0.0
    %439 = vmatpush1.msra.mxu0 0.0
    %440 = vmatprep.subr.mxu0 0.0
    %441 = vmatpush1.msra.mxu0 0.0
    %442 = vmatprep.subr.mxu0 0.0
    %443 = vmatpush1.msra.mxu0 0.0
    %444 = vmatprep.subr.mxu0 0.0
    %445 = vmatpush1.msra.mxu0 0.0
    %446 = vmatprep.subr.mxu0 0.0
    %447 = vmatpush1.msra.mxu0 0.0
    %448 = vmatprep.subr.mxu0 0.0
    %449 = vmatpush1.msra.mxu0 0.0
    %450 = vmatprep.subr.mxu0 0.0
    %451 = vmatpush1.msra.mxu0 0.0
    %452 = vmatprep.subr.mxu0 0.0
    %453 = vmatpush1.msra.mxu0 0.0
    %454 = vmatprep.subr.mxu0 0.0
    %455 = vmatpush1.msra.mxu0 0.0
    %456 = vmatprep.subr.mxu0 0.0
    %457 = vmatpush1.msra.mxu0 0.0
    %458 = vmatprep.subr.mxu0 0.0
    %459 = vmatpush1.msra.mxu0 0.0
    %460 = vmatprep.subr.mxu0 0.0
    %461 = vmatpush1.msra.mxu0 %v428
    %462 = vmatprep.subr.mxu0 0.0
    %463 = vmatpush1.msra.mxu0 %v426
    %464 = vmatprep.subr.mxu0 0.0
    %465 = vmatpush1.msra.mxu0 %v424
    %466 = vmatprep.subr.mxu0 0.0
    %467 = vmatpush1.msra.mxu0 %v422
    %468 = vmatprep.subr.mxu0 0.0
    %469 = vmatpush2.msra.mxu0 0.0
    %470 = vmatprep.subr.mxu0 0.0
    %471 = vmatpush2.msra.mxu0 0.0
    %472 = vmatprep.subr.mxu0 0.0
    %473 = vmatpush2.msra.mxu0 0.0
    %474 = vmatprep.subr.mxu0 0.0
    %475 = vmatpush2.msra.mxu0 0.0
    %476 = vmatprep.subr.mxu0 0.0
    %477 = vmatpush2.msra.mxu0 0.0
    %478 = vmatprep.subr.mxu0 0.0
    %479 = vmatpush2.msra.mxu0 0.0
    %480 = vmatprep.subr.mxu0 0.0
    %481 = vmatpush2.msra.mxu0 0.0
    %482 = vmatprep.subr.mxu0 0.0
    %483 = vmatpush2.msra.mxu0 0.0
    %484 = vmatprep.subr.mxu0 0.0
    %485 = vmatpush2.msra.mxu0 0.0
    %486 = vmatprep.subr.mxu0 0.0
    %487 = vmatpush2.msra.mxu0 0.0
    %488 = vmatprep.subr.mxu0 0.0
    %489 = vmatpush2.msra.mxu0 0.0
    %490 = vmatprep.subr.mxu0 0.0
    %491 = vmatpush2.msra.mxu0 0.0
    %492 = vmatprep.subr.mxu0 0.0
    %493 = vmatpush2.msra.mxu0 0.0
    %494 = vmatprep.subr.mxu0 0.0
    %495 = vmatpush2.msra.mxu0 0.0
    %496 = vmatprep.subr.mxu0 0.0
    %497 = vmatpush2.msra.mxu0 0.0
    %498 = vmatprep.subr.mxu0 0.0
    %499 = vmatpush2.msra.mxu0 0.0
    %500 = vmatprep.mubr.f32.mxu0 0.0
    %501 = vmatmul.mubr.f32.gmra.mxu0 %v230
    %v502 = vpop.f32.mrf.mxu0
    %v503 = vadd.f32 %v434, %v502
    %v504 = vpop.f32.mrf.mxu0
    %505 = vdwg.mxu0
    %v506 = vmul.f32 %v503, %v503
    %v507 = vsel %vm117, %v506, 0.0
    %508 = vadd.xlane.f32.xlu0 %v507
    %v509 = vpop.xlane.xlu0 %508
    %v510 = vrsqrt.pop %v509
    %v511 = vmul.f32 %v509, %v510
    %vm512 = vcmp.eq.f32.partialorder %v509, inf
    %v513 = vsel %vm512, %v509, %v511
    %vm514 = vcmp.eq.f32.partialorder %v509, 0.0
    %v515 = vand.u32 %v509, 2147483648
    %v516 = vsel %vm514, %v515, %v513
    %v517 = vadd.f32 %v516, 1e-08
    %v518 = vrcp.pop %v517
    %v519 = vmul.f32 1.0, %v518
    %v520 = vmul.f32 %v503, %v519
    %521 = vrot.lane.b32.xlu0 %v218, 32
    %v522 = vpop.permute.xlu0 %521
    %523 = vrot.lane.b32.xlu0 %v219, 32
    %v524 = vpop.permute.xlu0 %523
    %525 = vrot.lane.b32.xlu0 %v220, 32
    %v526 = vpop.permute.xlu0 %525
    %527 = vrot.lane.b32.xlu0 %v221, 32
    %v528 = vpop.permute.xlu0 %527
    %533 = vrot.lane.b32.xlu0 %v227, 32
    %v534 = vpop.permute.xlu0 %533
    %536 = vmatprep.subr.mxu0 0.0
    %537 = vmatpush1.msra.mxu0 0.0
    %538 = vmatprep.subr.mxu0 0.0
    %539 = vmatpush1.msra.mxu0 0.0
    %540 = vmatprep.subr.mxu0 0.0
    %541 = vmatpush1.msra.mxu0 0.0
    %542 = vmatprep.subr.mxu0 0.0
    %543 = vmatpush1.msra.mxu0 0.0
    %544 = vmatprep.subr.mxu0 0.0
    %545 = vmatpush1.msra.mxu0 0.0
    %546 = vmatprep.subr.mxu0 0.0
    %547 = vmatpush1.msra.mxu0 0.0
    %548 = vmatprep.subr.mxu0 0.0
    %549 = vmatpush1.msra.mxu0 0.0
    %550 = vmatprep.subr.mxu0 0.0
    %551 = vmatpush1.msra.mxu0 0.0
    %552 = vmatprep.subr.mxu0 0.0
    %553 = vmatpush1.msra.mxu0 0.0
    %554 = vmatprep.subr.mxu0 0.0
    %555 = vmatpush1.msra.mxu0 0.0
    %556 = vmatprep.subr.mxu0 0.0
    %557 = vmatpush1.msra.mxu0 0.0
    %558 = vmatprep.subr.mxu0 0.0
    %559 = vmatpush1.msra.mxu0 0.0
    %560 = vmatprep.subr.mxu0 0.0
    %561 = vmatpush1.msra.mxu0 %v528
    %562 = vmatprep.subr.mxu0 0.0
    %563 = vmatpush1.msra.mxu0 %v526
    %564 = vmatprep.subr.mxu0 0.0
    %565 = vmatpush1.msra.mxu0 %v524
    %566 = vmatprep.subr.mxu0 0.0
    %567 = vmatpush1.msra.mxu0 %v522
    %568 = vmatprep.subr.mxu0 0.0
    %569 = vmatpush2.msra.mxu0 0.0
    %570 = vmatprep.subr.mxu0 0.0
    %571 = vmatpush2.msra.mxu0 0.0
    %572 = vmatprep.subr.mxu0 0.0
    %573 = vmatpush2.msra.mxu0 0.0
    %574 = vmatprep.subr.mxu0 0.0
    %575 = vmatpush2.msra.mxu0 0.0
    %576 = vmatprep.subr.mxu0 0.0
    %577 = vmatpush2.msra.mxu0 0.0
    %578 = vmatprep.subr.mxu0 0.0
    %579 = vmatpush2.msra.mxu0 0.0
    %580 = vmatprep.subr.mxu0 0.0
    %581 = vmatpush2.msra.mxu0 0.0
    %582 = vmatprep.subr.mxu0 0.0
    %583 = vmatpush2.msra.mxu0 0.0
    %584 = vmatprep.subr.mxu0 0.0
    %585 = vmatpush2.msra.mxu0 0.0
    %586 = vmatprep.subr.mxu0 0.0
    %587 = vmatpush2.msra.mxu0 0.0
    %588 = vmatprep.subr.mxu0 0.0
    %589 = vmatpush2.msra.mxu0 0.0
    %590 = vmatprep.subr.mxu0 0.0
    %591 = vmatpush2.msra.mxu0 0.0
    %592 = vmatprep.subr.mxu0 0.0
    %593 = vmatpush2.msra.mxu0 0.0
    %594 = vmatprep.subr.mxu0 0.0
    %595 = vmatpush2.msra.mxu0 0.0
    %596 = vmatprep.subr.mxu0 0.0
    %597 = vmatpush2.msra.mxu0 0.0
    %598 = vmatprep.subr.mxu0 0.0
    %599 = vmatpush2.msra.mxu0 0.0
    %600 = vmatprep.mubr.f32.mxu0 0.0
    %601 = vmatmul.mubr.f32.gmra.mxu0 %v230
    %v602 = vpop.f32.mrf.mxu0
    %v603 = vadd.f32 %v534, %v602
    %v604 = vpop.f32.mrf.mxu0
    %605 = vdwg.mxu0
    %v606 = vmul.f32 %v603, %v603
    %v607 = vsel %vm117, %v606, 0.0
    %608 = vadd.xlane.f32.xlu0 %v607
    %v609 = vpop.xlane.xlu0 %608
    %v610 = vrsqrt.pop %v609
    %v611 = vmul.f32 %v609, %v610
    %vm612 = vcmp.eq.f32.partialorder %v609, inf
    %v613 = vsel %vm612, %v609, %v611
    %vm614 = vcmp.eq.f32.partialorder %v609, 0.0
    %v615 = vand.u32 %v609, 2147483648
    %v616 = vsel %vm614, %v615, %v613
    %v617 = vadd.f32 %v616, 1e-08
    %v618 = vrcp.pop %v617
    %v619 = vmul.f32 1.0, %v618
    %v620 = vmul.f32 %v603, %v619
    %v621 = vld [vmem:[#allocation10 + $0x8] sm:$0xff]
    %v622 = vld [vmem:[#allocation10 + $0x20] sm:$0xff]
    %v623 = vld [vmem:[#allocation10 + $0x38] sm:$0xff]
    %v624 = vld [vmem:[#allocation10 + $0x50] sm:$0xff]
    %v625 = vld [vmem:[#allocation11 + $0x1] sm:$0x1]
    %v627 = vlaneseq
    %v628 = vshrl.u32 %v627, 7
    %v629 = vsub.s32 0, %v628
    %v630 = vrot.slane %v625, %v629
    %632 = vmatprep.subr.mxu0 0.0
    %633 = vmatpush1.msra.mxu0 0.0
    %634 = vmatprep.subr.mxu0 0.0
    %635 = vmatpush1.msra.mxu0 0.0
    %636 = vmatprep.subr.mxu0 0.0
    %637 = vmatpush1.msra.mxu0 0.0
    %638 = vmatprep.subr.mxu0 0.0
    %639 = vmatpush1.msra.mxu0 0.0
    %640 = vmatprep.subr.mxu0 0.0
    %641 = vmatpush1.msra.mxu0 0.0
    %642 = vmatprep.subr.mxu0 0.0
    %643 = vmatpush1.msra.mxu0 0.0
    %644 = vmatprep.subr.mxu0 0.0
    %645 = vmatpush1.msra.mxu0 0.0
    %646 = vmatprep.subr.mxu0 0.0
    %647 = vmatpush1.msra.mxu0 0.0
    %648 = vmatprep.subr.mxu0 0.0
    %649 = vmatpush1.msra.mxu0 0.0
    %650 = vmatprep.subr.mxu0 0.0
    %651 = vmatpush1.msra.mxu0 0.0
    %652 = vmatprep.subr.mxu0 0.0
    %653 = vmatpush1.msra.mxu0 0.0
    %654 = vmatprep.subr.mxu0 0.0
    %655 = vmatpush1.msra.mxu0 0.0
    %656 = vmatprep.subr.mxu0 0.0
    %657 = vmatpush1.msra.mxu0 %v624
    %658 = vmatprep.subr.mxu0 0.0
    %659 = vmatpush1.msra.mxu0 %v623
    %660 = vmatprep.subr.mxu0 0.0
    %661 = vmatpush1.msra.mxu0 %v622
    %662 = vmatprep.subr.mxu0 0.0
    %663 = vmatpush1.msra.mxu0 %v621
    %664 = vmatprep.subr.mxu0 0.0
    %665 = vmatpush2.msra.mxu0 0.0
    %666 = vmatprep.subr.mxu0 0.0
    %667 = vmatpush2.msra.mxu0 0.0
    %668 = vmatprep.subr.mxu0 0.0
    %669 = vmatpush2.msra.mxu0 0.0
    %670 = vmatprep.subr.mxu0 0.0
    %671 = vmatpush2.msra.mxu0 0.0
    %672 = vmatprep.subr.mxu0 0.0
    %673 = vmatpush2.msra.mxu0 0.0
    %674 = vmatprep.subr.mxu0 0.0
    %675 = vmatpush2.msra.mxu0 0.0
    %676 = vmatprep.subr.mxu0 0.0
    %677 = vmatpush2.msra.mxu0 0.0
    %678 = vmatprep.subr.mxu0 0.0
    %679 = vmatpush2.msra.mxu0 0.0
    %680 = vmatprep.subr.mxu0 0.0
    %681 = vmatpush2.msra.mxu0 0.0
    %682 = vmatprep.subr.mxu0 0.0
    %683 = vmatpush2.msra.mxu0 0.0
    %684 = vmatprep.subr.mxu0 0.0
    %685 = vmatpush2.msra.mxu0 0.0
    %686 = vmatprep.subr.mxu0 0.0
    %687 = vmatpush2.msra.mxu0 0.0
    %688 = vmatprep.subr.mxu0 0.0
    %689 = vmatpush2.msra.mxu0 0.0
    %690 = vmatprep.subr.mxu0 0.0
    %691 = vmatpush2.msra.mxu0 0.0
    %692 = vmatprep.subr.mxu0 0.0
    %693 = vmatpush2.msra.mxu0 0.0
    %694 = vmatprep.subr.mxu0 0.0
    %695 = vmatpush2.msra.mxu0 0.0
    %696 = vmatprep.mubr.f32.mxu0 0.0
    %697 = vmatmul.mubr.f32.gmra.mxu0 %v230
    %v698 = vpop.f32.mrf.mxu0
    %v699 = vadd.f32 %v630, %v698
    %v700 = vpop.f32.mrf.mxu0
    %701 = vdwg.mxu0
    %v702 = vmul.f32 %v699, %v699
    %v703 = vsel %vm117, %v702, 0.0
    %704 = vadd.xlane.f32.xlu0 %v703
    %v705 = vpop.xlane.xlu0 %704
    %v706 = vrsqrt.pop %v705
    %v707 = vmul.f32 %v705, %v706
    %vm708 = vcmp.eq.f32.partialorder %v705, inf
    %v709 = vsel %vm708, %v705, %v707
    %vm710 = vcmp.eq.f32.partialorder %v705, 0.0
    %v711 = vand.u32 %v705, 2147483648
    %v712 = vsel %vm710, %v711, %v709
    %v713 = vadd.f32 %v712, 1e-08
    %v714 = vrcp.pop %v713
    %v715 = vmul.f32 1.0, %v714
    %v716 = vmul.f32 %v699, %v715
    %721 = vrot.lane.b32.xlu0 %v621, 96
    %v722 = vpop.permute.xlu0 %721
    %723 = vrot.lane.b32.xlu0 %v622, 96
    %v724 = vpop.permute.xlu0 %723
    %725 = vrot.lane.b32.xlu0 %v623, 96
    %v726 = vpop.permute.xlu0 %725
    %727 = vrot.lane.b32.xlu0 %v624, 96
    %v728 = vpop.permute.xlu0 %727
    %733 = vrot.lane.b32.xlu0 %v630, 96
    %v734 = vpop.permute.xlu0 %733
    %736 = vmatprep.subr.mxu0 0.0
    %737 = vmatpush1.msra.mxu0 0.0
    %738 = vmatprep.subr.mxu0 0.0
    %739 = vmatpush1.msra.mxu0 0.0
    %740 = vmatprep.subr.mxu0 0.0
    %741 = vmatpush1.msra.mxu0 0.0
    %742 = vmatprep.subr.mxu0 0.0
    %743 = vmatpush1.msra.mxu0 0.0
    %744 = vmatprep.subr.mxu0 0.0
    %745 = vmatpush1.msra.mxu0 0.0
    %746 = vmatprep.subr.mxu0 0.0
    %747 = vmatpush1.msra.mxu0 0.0
    %748 = vmatprep.subr.mxu0 0.0
    %749 = vmatpush1.msra.mxu0 0.0
    %750 = vmatprep.subr.mxu0 0.0
    %751 = vmatpush1.msra.mxu0 0.0
    %752 = vmatprep.subr.mxu0 0.0
    %753 = vmatpush1.msra.mxu0 0.0
    %754 = vmatprep.subr.mxu0 0.0
    %755 = vmatpush1.msra.mxu0 0.0
    %756 = vmatprep.subr.mxu0 0.0
    %757 = vmatpush1.msra.mxu0 0.0
    %758 = vmatprep.subr.mxu0 0.0
    %759 = vmatpush1.msra.mxu0 0.0
    %760 = vmatprep.subr.mxu0 0.0
    %761 = vmatpush1.msra.mxu0 %v728
    %762 = vmatprep.subr.mxu0 0.0
    %763 = vmatpush1.msra.mxu0 %v726
    %764 = vmatprep.subr.mxu0 0.0
    %765 = vmatpush1.msra.mxu0 %v724
    %766 = vmatprep.subr.mxu0 0.0
    %767 = vmatpush1.msra.mxu0 %v722
    %768 = vmatprep.subr.mxu0 0.0
    %769 = vmatpush2.msra.mxu0 0.0
    %770 = vmatprep.subr.mxu0 0.0
    %771 = vmatpush2.msra.mxu0 0.0
    %772 = vmatprep.subr.mxu0 0.0
    %773 = vmatpush2.msra.mxu0 0.0
    %774 = vmatprep.subr.mxu0 0.0
    %775 = vmatpush2.msra.mxu0 0.0
    %776 = vmatprep.subr.mxu0 0.0
    %777 = vmatpush2.msra.mxu0 0.0
    %778 = vmatprep.subr.mxu0 0.0
    %779 = vmatpush2.msra.mxu0 0.0
    %780 = vmatprep.subr.mxu0 0.0
    %781 = vmatpush2.msra.mxu0 0.0
    %782 = vmatprep.subr.mxu0 0.0
    %783 = vmatpush2.msra.mxu0 0.0
    %784 = vmatprep.subr.mxu0 0.0
    %785 = vmatpush2.msra.mxu0 0.0
    %786 = vmatprep.subr.mxu0 0.0
    %787 = vmatpush2.msra.mxu0 0.0
    %788 = vmatprep.subr.mxu0 0.0
    %789 = vmatpush2.msra.mxu0 0.0
    %790 = vmatprep.subr.mxu0 0.0
    %791 = vmatpush2.msra.mxu0 0.0
    %792 = vmatprep.subr.mxu0 0.0
    %793 = vmatpush2.msra.mxu0 0.0
    %794 = vmatprep.subr.mxu0 0.0
    %795 = vmatpush2.msra.mxu0 0.0
    %796 = vmatprep.subr.mxu0 0.0
    %797 = vmatpush2.msra.mxu0 0.0
    %798 = vmatprep.subr.mxu0 0.0
    %799 = vmatpush2.msra.mxu0 0.0
    %800 = vmatprep.mubr.f32.mxu0 0.0
    %801 = vmatmul.mubr.f32.gmra.mxu0 %v230
    %v802 = vpop.f32.mrf.mxu0
    %v803 = vadd.f32 %v734, %v802
    %v804 = vpop.f32.mrf.mxu0
    %805 = vdwg.mxu0
    %v806 = vmul.f32 %v803, %v803
    %v807 = vsel %vm117, %v806, 0.0
    %808 = vadd.xlane.f32.xlu0 %v807
    %v809 = vpop.xlane.xlu0 %808
    %v810 = vrsqrt.pop %v809
    %v811 = vmul.f32 %v809, %v810
    %vm812 = vcmp.eq.f32.partialorder %v809, inf
    %v813 = vsel %vm812, %v809, %v811
    %vm814 = vcmp.eq.f32.partialorder %v809, 0.0
    %v815 = vand.u32 %v809, 2147483648
    %v816 = vsel %vm814, %v815, %v813
    %v817 = vadd.f32 %v816, 1e-08
    %v818 = vrcp.pop %v817
    %v819 = vmul.f32 1.0, %v818
    %v820 = vmul.f32 %v803, %v819
    %821 = vrot.lane.b32.xlu0 %v621, 64
    %v822 = vpop.permute.xlu0 %821
    %823 = vrot.lane.b32.xlu0 %v622, 64
    %v824 = vpop.permute.xlu0 %823
    %825 = vrot.lane.b32.xlu0 %v623, 64
    %v826 = vpop.permute.xlu0 %825
    %827 = vrot.lane.b32.xlu0 %v624, 64
    %v828 = vpop.permute.xlu0 %827
    %833 = vrot.lane.b32.xlu0 %v630, 64
    %v834 = vpop.permute.xlu0 %833
    %836 = vmatprep.subr.mxu0 0.0
    %837 = vmatpush1.msra.mxu0 0.0
    %838 = vmatprep.subr.mxu0 0.0
    %839 = vmatpush1.msra.mxu0 0.0
    %840 = vmatprep.subr.mxu0 0.0
    %841 = vmatpush1.msra.mxu0 0.0
    %842 = vmatprep.subr.mxu0 0.0
    %843 = vmatpush1.msra.mxu0 0.0
    %844 = vmatprep.subr.mxu0 0.0
    %845 = vmatpush1.msra.mxu0 0.0
    %846 = vmatprep.subr.mxu0 0.0
    %847 = vmatpush1.msra.mxu0 0.0
    %848 = vmatprep.subr.mxu0 0.0
    %849 = vmatpush1.msra.mxu0 0.0
    %850 = vmatprep.subr.mxu0 0.0
    %851 = vmatpush1.msra.mxu0 0.0
    %852 = vmatprep.subr.mxu0 0.0
    %853 = vmatpush1.msra.mxu0 0.0
    %854 = vmatprep.subr.mxu0 0.0
    %855 = vmatpush1.msra.mxu0 0.0
    %856 = vmatprep.subr.mxu0 0.0
    %857 = vmatpush1.msra.mxu0 0.0
    %858 = vmatprep.subr.mxu0 0.0
    %859 = vmatpush1.msra.mxu0 0.0
    %860 = vmatprep.subr.mxu0 0.0
    %861 = vmatpush1.msra.mxu0 %v828
    %862 = vmatprep.subr.mxu0 0.0
    %863 = vmatpush1.msra.mxu0 %v826
    %864 = vmatprep.subr.mxu0 0.0
    %865 = vmatpush1.msra.mxu0 %v824
    %866 = vmatprep.subr.mxu0 0.0
    %867 = vmatpush1.msra.mxu0 %v822
    %868 = vmatprep.subr.mxu0 0.0
    %869 = vmatpush2.msra.mxu0 0.0
    %870 = vmatprep.subr.mxu0 0.0
    %871 = vmatpush2.msra.mxu0 0.0
    %872 = vmatprep.subr.mxu0 0.0
    %873 = vmatpush2.msra.mxu0 0.0
    %874 = vmatprep.subr.mxu0 0.0
    %875 = vmatpush2.msra.mxu0 0.0
    %876 = vmatprep.subr.mxu0 0.0
    %877 = vmatpush2.msra.mxu0 0.0
    %878 = vmatprep.subr.mxu0 0.0
    %879 = vmatpush2.msra.mxu0 0.0
    %880 = vmatprep.subr.mxu0 0.0
    %881 = vmatpush2.msra.mxu0 0.0
    %882 = vmatprep.subr.mxu0 0.0
    %883 = vmatpush2.msra.mxu0 0.0
    %884 = vmatprep.subr.mxu0 0.0
    %885 = vmatpush2.msra.mxu0 0.0
    %886 = vmatprep.subr.mxu0 0.0
    %887 = vmatpush2.msra.mxu0 0.0
    %888 = vmatprep.subr.mxu0 0.0
    %889 = vmatpush2.msra.mxu0 0.0
    %890 = vmatprep.subr.mxu0 0.0
    %891 = vmatpush2.msra.mxu0 0.0
    %892 = vmatprep.subr.mxu0 0.0
    %893 = vmatpush2.msra.mxu0 0.0
    %894 = vmatprep.subr.mxu0 0.0
    %895 = vmatpush2.msra.mxu0 0.0
    %896 = vmatprep.subr.mxu0 0.0
    %897 = vmatpush2.msra.mxu0 0.0
    %898 = vmatprep.subr.mxu0 0.0
    %899 = vmatpush2.msra.mxu0 0.0
    %900 = vmatprep.mubr.f32.mxu0 0.0
    %901 = vmatmul.mubr.f32.gmra.mxu0 %v230
    %v902 = vpop.f32.mrf.mxu0
    %v903 = vadd.f32 %v834, %v902
    %v904 = vpop.f32.mrf.mxu0
    %905 = vdwg.mxu0
    %v906 = vmul.f32 %v903, %v903
    %v907 = vsel %vm117, %v906, 0.0
    %908 = vadd.xlane.f32.xlu0 %v907
    %v909 = vpop.xlane.xlu0 %908
    %v910 = vrsqrt.pop %v909
    %v911 = vmul.f32 %v909, %v910
    %vm912 = vcmp.eq.f32.partialorder %v909, inf
    %v913 = vsel %vm912, %v909, %v911
    %vm914 = vcmp.eq.f32.partialorder %v909, 0.0
    %v915 = vand.u32 %v909, 2147483648
    %v916 = vsel %vm914, %v915, %v913
    %v917 = vadd.f32 %v916, 1e-08
    %v918 = vrcp.pop %v917
    %v919 = vmul.f32 1.0, %v918
    %v920 = vmul.f32 %v903, %v919
    %921 = vrot.lane.b32.xlu0 %v621, 32
    %v922 = vpop.permute.xlu0 %921
    %923 = vrot.lane.b32.xlu0 %v622, 32
    %v924 = vpop.permute.xlu0 %923
    %925 = vrot.lane.b32.xlu0 %v623, 32
    %v926 = vpop.permute.xlu0 %925
    %927 = vrot.lane.b32.xlu0 %v624, 32
    %v928 = vpop.permute.xlu0 %927
    %933 = vrot.lane.b32.xlu0 %v630, 32
    %v934 = vpop.permute.xlu0 %933
    %936 = vmatprep.subr.mxu0 0.0
    %937 = vmatpush1.msra.mxu0 0.0
    %938 = vmatprep.subr.mxu0 0.0
    %939 = vmatpush1.msra.mxu0 0.0
    %940 = vmatprep.subr.mxu0 0.0
    %941 = vmatpush1.msra.mxu0 0.0
    %942 = vmatprep.subr.mxu0 0.0
    %943 = vmatpush1.msra.mxu0 0.0
    %944 = vmatprep.subr.mxu0 0.0
    %945 = vmatpush1.msra.mxu0 0.0
    %946 = vmatprep.subr.mxu0 0.0
    %947 = vmatpush1.msra.mxu0 0.0
    %948 = vmatprep.subr.mxu0 0.0
    %949 = vmatpush1.msra.mxu0 0.0
    %950 = vmatprep.subr.mxu0 0.0
    %951 = vmatpush1.msra.mxu0 0.0
    %952 = vmatprep.subr.mxu0 0.0
    %953 = vmatpush1.msra.mxu0 0.0
    %954 = vmatprep.subr.mxu0 0.0
    %955 = vmatpush1.msra.mxu0 0.0
    %956 = vmatprep.subr.mxu0 0.0
    %957 = vmatpush1.msra.mxu0 0.0
    %958 = vmatprep.subr.mxu0 0.0
    %959 = vmatpush1.msra.mxu0 0.0
    %960 = vmatprep.subr.mxu0 0.0
    %961 = vmatpush1.msra.mxu0 %v928
    %962 = vmatprep.subr.mxu0 0.0
    %963 = vmatpush1.msra.mxu0 %v926
    %964 = vmatprep.subr.mxu0 0.0
    %965 = vmatpush1.msra.mxu0 %v924
    %966 = vmatprep.subr.mxu0 0.0
    %967 = vmatpush1.msra.mxu0 %v922
    %968 = vmatprep.subr.mxu0 0.0
    %969 = vmatpush2.msra.mxu0 0.0
    %970 = vmatprep.subr.mxu0 0.0
    %971 = vmatpush2.msra.mxu0 0.0
    %972 = vmatprep.subr.mxu0 0.0
    %973 = vmatpush2.msra.mxu0 0.0
    %974 = vmatprep.subr.mxu0 0.0
    %975 = vmatpush2.msra.mxu0 0.0
    %976 = vmatprep.subr.mxu0 0.0
    %977 = vmatpush2.msra.mxu0 0.0
    %978 = vmatprep.subr.mxu0 0.0
    %979 = vmatpush2.msra.mxu0 0.0
    %980 = vmatprep.subr.mxu0 0.0
    %981 = vmatpush2.msra.mxu0 0.0
    %982 = vmatprep.subr.mxu0 0.0
    %983 = vmatpush2.msra.mxu0 0.0
    %984 = vmatprep.subr.mxu0 0.0
    %985 = vmatpush2.msra.mxu0 0.0
    %986 = vmatprep.subr.mxu0 0.0
    %987 = vmatpush2.msra.mxu0 0.0
    %988 = vmatprep.subr.mxu0 0.0
    %989 = vmatpush2.msra.mxu0 0.0
    %990 = vmatprep.subr.mxu0 0.0
    %991 = vmatpush2.msra.mxu0 0.0
    %992 = vmatprep.subr.mxu0 0.0
    %993 = vmatpush2.msra.mxu0 0.0
    %994 = vmatprep.subr.mxu0 0.0
    %995 = vmatpush2.msra.mxu0 0.0
    %996 = vmatprep.subr.mxu0 0.0
    %997 = vmatpush2.msra.mxu0 0.0
    %998 = vmatprep.subr.mxu0 0.0
    %999 = vmatpush2.msra.mxu0 0.0
    %1000 = vmatprep.mubr.f32.mxu0 0.0
    %1001 = vmatmul.mubr.f32.gmra.mxu0 %v230
    %v1002 = vpop.f32.mrf.mxu0
    %v1003 = vadd.f32 %v934, %v1002
    %v1004 = vpop.f32.mrf.mxu0
    %1005 = vdwg.mxu0
    %v1006 = vmul.f32 %v1003, %v1003
    %v1007 = vsel %vm117, %v1006, 0.0
    %1008 = vadd.xlane.f32.xlu0 %v1007
    %v1009 = vpop.xlane.xlu0 %1008
    %v1010 = vrsqrt.pop %v1009
    %v1011 = vmul.f32 %v1009, %v1010
    %vm1012 = vcmp.eq.f32.partialorder %v1009, inf
    %v1013 = vsel %vm1012, %v1009, %v1011
    %vm1014 = vcmp.eq.f32.partialorder %v1009, 0.0
    %v1015 = vand.u32 %v1009, 2147483648
    %v1016 = vsel %vm1014, %v1015, %v1013
    %v1017 = vadd.f32 %v1016, 1e-08
    %v1018 = vrcp.pop %v1017
    %v1019 = vmul.f32 1.0, %v1018
    %v1020 = vmul.f32 %v1003, %v1019
    %v1021 = vld [vmem:[#allocation10 + $0x10] sm:$0xff]
    %v1022 = vld [vmem:[#allocation10 + $0x28] sm:$0xff]
    %v1023 = vld [vmem:[#allocation10 + $0x40] sm:$0xff]
    %v1024 = vld [vmem:[#allocation10 + $0x58] sm:$0xff]
    %v1025 = vld [vmem:[#allocation11 + $0x2] sm:$0x1]
    %v1027 = vlaneseq
    %v1028 = vshrl.u32 %v1027, 7
    %v1029 = vsub.s32 0, %v1028
    %v1030 = vrot.slane %v1025, %v1029
    %1032 = vmatprep.subr.mxu0 0.0
    %1033 = vmatpush1.msra.mxu0 0.0
    %1034 = vmatprep.subr.mxu0 0.0
    %1035 = vmatpush1.msra.mxu0 0.0
    %1036 = vmatprep.subr.mxu0 0.0
    %1037 = vmatpush1.msra.mxu0 0.0
    %1038 = vmatprep.subr.mxu0 0.0
    %1039 = vmatpush1.msra.mxu0 0.0
    %1040 = vmatprep.subr.mxu0 0.0
    %1041 = vmatpush1.msra.mxu0 0.0
    %1042 = vmatprep.subr.mxu0 0.0
    %1043 = vmatpush1.msra.mxu0 0.0
    %1044 = vmatprep.subr.mxu0 0.0
    %1045 = vmatpush1.msra.mxu0 0.0
    %1046 = vmatprep.subr.mxu0 0.0
    %1047 = vmatpush1.msra.mxu0 0.0
    %1048 = vmatprep.subr.mxu0 0.0
    %1049 = vmatpush1.msra.mxu0 0.0
    %1050 = vmatprep.subr.mxu0 0.0
    %1051 = vmatpush1.msra.mxu0 0.0
    %1052 = vmatprep.subr.mxu0 0.0
    %1053 = vmatpush1.msra.mxu0 0.0
    %1054 = vmatprep.subr.mxu0 0.0
    %1055 = vmatpush1.msra.mxu0 0.0
    %1056 = vmatprep.subr.mxu0 0.0
    %1057 = vmatpush1.msra.mxu0 %v1024
    %1058 = vmatprep.subr.mxu0 0.0
    %1059 = vmatpush1.msra.mxu0 %v1023
    %1060 = vmatprep.subr.mxu0 0.0
    %1061 = vmatpush1.msra.mxu0 %v1022
    %1062 = vmatprep.subr.mxu0 0.0
    %1063 = vmatpush1.msra.mxu0 %v1021
    %1064 = vmatprep.subr.mxu0 0.0
    %1065 = vmatpush2.msra.mxu0 0.0
    %1066 = vmatprep.subr.mxu0 0.0
    %1067 = vmatpush2.msra.mxu0 0.0
    %1068 = vmatprep.subr.mxu0 0.0
    %1069 = vmatpush2.msra.mxu0 0.0
    %1070 = vmatprep.subr.mxu0 0.0
    %1071 = vmatpush2.msra.mxu0 0.0
    %1072 = vmatprep.subr.mxu0 0.0
    %1073 = vmatpush2.msra.mxu0 0.0
    %1074 = vmatprep.subr.mxu0 0.0
    %1075 = vmatpush2.msra.mxu0 0.0
    %1076 = vmatprep.subr.mxu0 0.0
    %1077 = vmatpush2.msra.mxu0 0.0
    %1078 = vmatprep.subr.mxu0 0.0
    %1079 = vmatpush2.msra.mxu0 0.0
    %1080 = vmatprep.subr.mxu0 0.0
    %1081 = vmatpush2.msra.mxu0 0.0
    %1082 = vmatprep.subr.mxu0 0.0
    %1083 = vmatpush2.msra.mxu0 0.0
    %1084 = vmatprep.subr.mxu0 0.0
    %1085 = vmatpush2.msra.mxu0 0.0
    %1086 = vmatprep.subr.mxu0 0.0
    %1087 = vmatpush2.msra.mxu0 0.0
    %1088 = vmatprep.subr.mxu0 0.0
    %1089 = vmatpush2.msra.mxu0 0.0
    %1090 = vmatprep.subr.mxu0 0.0
    %1091 = vmatpush2.msra.mxu0 0.0
    %1092 = vmatprep.subr.mxu0 0.0
    %1093 = vmatpush2.msra.mxu0 0.0
    %1094 = vmatprep.subr.mxu0 0.0
    %1095 = vmatpush2.msra.mxu0 0.0
    %1096 = vmatprep.mubr.f32.mxu0 0.0
    %1097 = vmatmul.mubr.f32.gmra.mxu0 %v230
    %v1098 = vpop.f32.mrf.mxu0
    %v1099 = vadd.f32 %v1030, %v1098
    %v1100 = vpop.f32.mrf.mxu0
    %1101 = vdwg.mxu0
    %v1102 = vmul.f32 %v1099, %v1099
    %v1103 = vsel %vm117, %v1102, 0.0
    %1104 = vadd.xlane.f32.xlu0 %v1103
    %v1105 = vpop.xlane.xlu0 %1104
    %v1106 = vrsqrt.pop %v1105
    %v1107 = vmul.f32 %v1105, %v1106
    %vm1108 = vcmp.eq.f32.partialorder %v1105, inf
    %v1109 = vsel %vm1108, %v1105, %v1107
    %vm1110 = vcmp.eq.f32.partialorder %v1105, 0.0
    %v1111 = vand.u32 %v1105, 2147483648
    %v1112 = vsel %vm1110, %v1111, %v1109
    %v1113 = vadd.f32 %v1112, 1e-08
    %v1114 = vrcp.pop %v1113
    %v1115 = vmul.f32 1.0, %v1114
    %v1116 = vmul.f32 %v1099, %v1115
    %v1117 = vld [vmem:[#allocation13] sm:$0xff]
    %v1118 = vld [vmem:[#allocation13 + $0x8] sm:$0xff]
    %v1119 = vld [vmem:[#allocation13 + $0x10] sm:$0xff]
    %v1120 = vld [vmem:[#allocation13 + $0x18] sm:$0xff]
    %v1121 = vld [vmem:[#allocation13 + $0x20] sm:$0xff]
    %v1122 = vld [vmem:[#allocation13 + $0x28] sm:$0xff]
    %v1123 = vld [vmem:[#allocation13 + $0x30] sm:$0xff]
    %v1124 = vld [vmem:[#allocation13 + $0x38] sm:$0xff]
    %v1125 = vld [vmem:[#allocation13 + $0x40] sm:$0xff]
    %v1126 = vld [vmem:[#allocation13 + $0x48] sm:$0xff]
    %v1127 = vld [vmem:[#allocation13 + $0x50] sm:$0xff]
    %v1128 = vld [vmem:[#allocation13 + $0x58] sm:$0xff]
    %v1129 = vld [vmem:[#allocation13 + $0x60] sm:$0xff]
    %v1130 = vld [vmem:[#allocation13 + $0x68] sm:$0xff]
    %v1131 = vld [vmem:[#allocation13 + $0x70] sm:$0xff]
    %v1132 = vld [vmem:[#allocation13 + $0x78] sm:$0xff]
    %v1133 = vld [vmem:[#allocation13 + $0x80] sm:$0xff]
    %v1134 = vld [vmem:[#allocation13 + $0x88] sm:$0xff]
    %v1135 = vld [vmem:[#allocation13 + $0x90] sm:$0xff]
    %v1136 = vld [vmem:[#allocation13 + $0x98] sm:$0xff]
    %v1137 = vld [vmem:[#allocation13 + $0xa0] sm:$0xff]
    %v1138 = vld [vmem:[#allocation13 + $0xa8] sm:$0xff]
    %v1139 = vld [vmem:[#allocation13 + $0xb0] sm:$0xff]
    %v1140 = vld [vmem:[#allocation13 + $0xb8] sm:$0xff]
    %v1141 = vmul.f32 %v1117, %v1117
    %v1142 = vmul.f32 %v1118, %v1118
    %v1143 = vmul.f32 %v1119, %v1119
    %v1144 = vmul.f32 %v1120, %v1120
    %v1145 = vmul.f32 %v1121, %v1121
    %v1146 = vmul.f32 %v1122, %v1122
    %v1147 = vmul.f32 %v1123, %v1123
    %v1148 = vmul.f32 %v1124, %v1124
    %v1149 = vmul.f32 %v1125, %v1125
    %v1150 = vmul.f32 %v1126, %v1126
    %v1151 = vmul.f32 %v1127, %v1127
    %v1152 = vmul.f32 %v1128, %v1128
    %v1153 = vmul.f32 %v1129, %v1129
    %v1154 = vmul.f32 %v1130, %v1130
    %v1155 = vmul.f32 %v1131, %v1131
    %v1156 = vmul.f32 %v1132, %v1132
    %v1157 = vmul.f32 %v1133, %v1133
    %v1158 = vmul.f32 %v1134, %v1134
    %v1159 = vmul.f32 %v1135, %v1135
    %v1160 = vmul.f32 %v1136, %v1136
    %v1161 = vmul.f32 %v1137, %v1137
    %v1162 = vmul.f32 %v1138, %v1138
    %v1163 = vmul.f32 %v1139, %v1139
    %v1164 = vmul.f32 %v1140, %v1140
    %v1165 = vadd.f32 %v1141, %v1144
    %v1166 = vadd.f32 %v1165, %v1147
    %v1167 = vadd.f32 %v1166, %v1150
    %v1168 = vrot.slane %v1167, 4
    %v1169 = vadd.f32 %v1167, %v1168
    %v1170 = vrot.slane %v1169, 2
    %v1171 = vadd.f32 %v1169, %v1170
    %v1172 = vrot.slane %v1171, 1
    %v1173 = vadd.f32 %v1171, %v1172
    %v1174 = vadd.f32 %v1142, %v1145
    %v1175 = vadd.f32 %v1174, %v1148
    %v1176 = vadd.f32 %v1175, %v1151
    %v1177 = vrot.slane %v1176, 4
    %v1178 = vadd.f32 %v1176, %v1177
    %v1179 = vrot.slane %v1178, 2
    %v1180 = vadd.f32 %v1178, %v1179
    %v1181 = vrot.slane %v1180, 1
    %v1182 = vadd.f32 %v1180, %v1181
    %vm1183 = vcmask 277504
    %v1184 = vsel %vm1183, %v1143, 0.0
    %v1185 = vsel %vm1183, %v1146, 0.0
    %v1186 = vadd.f32 %v1184, %v1185
    %v1187 = vsel %vm1183, %v1149, 0.0
    %v1188 = vadd.f32 %v1186, %v1187
    %v1189 = vsel %vm1183, %v1152, 0.0
    %v1190 = vadd.f32 %v1188, %v1189
    %v1191 = vrot.slane %v1190, 4
    %v1192 = vadd.f32 %v1190, %v1191
    %v1193 = vrot.slane %v1192, 2
    %v1194 = vadd.f32 %v1192, %v1193
    %v1195 = vrot.slane %v1194, 1
    %v1196 = vadd.f32 %v1194, %v1195
    %v1197 = vadd.f32 %v1153, %v1156
    %v1198 = vadd.f32 %v1197, %v1159
    %v1199 = vadd.f32 %v1198, %v1162
    %v1200 = vrot.slane %v1199, 4
    %v1201 = vadd.f32 %v1199, %v1200
    %v1202 = vrot.slane %v1201, 2
    %v1203 = vadd.f32 %v1201, %v1202
    %v1204 = vrot.slane %v1203, 1
    %v1205 = vadd.f32 %v1203, %v1204
    %v1206 = vadd.f32 %v1154, %v1157
    %v1207 = vadd.f32 %v1206, %v1160
    %v1208 = vadd.f32 %v1207, %v1163
    %v1209 = vrot.slane %v1208, 4
    %v1210 = vadd.f32 %v1208, %v1209
    %v1211 = vrot.slane %v1210, 2
    %v1212 = vadd.f32 %v1210, %v1211
    %v1213 = vrot.slane %v1212, 1
    %v1214 = vadd.f32 %v1212, %v1213
    %v1215 = vsel %vm1183, %v1155, 0.0
    %v1216 = vsel %vm1183, %v1158, 0.0
    %v1217 = vadd.f32 %v1215, %v1216
    %v1218 = vsel %vm1183, %v1161, 0.0
    %v1219 = vadd.f32 %v1217, %v1218
    %v1220 = vsel %vm1183, %v1164, 0.0
    %v1221 = vadd.f32 %v1219, %v1220
    %v1222 = vrot.slane %v1221, 4
    %v1223 = vadd.f32 %v1221, %v1222
    %v1224 = vrot.slane %v1223, 2
    %v1225 = vadd.f32 %v1223, %v1224
    %v1226 = vrot.slane %v1225, 1
    %v1227 = vadd.f32 %v1225, %v1226
    %v1228 = vrsqrt.pop %v1173
    %v1229 = vmul.f32 %v1173, %v1228
    %vm1230 = vcmp.eq.f32.partialorder %v1173, inf
    %v1231 = vsel %vm1230, %v1173, %v1229
    %vm1232 = vcmp.eq.f32.partialorder %v1173, 0.0
    %v1233 = vand.u32 %v1173, 2147483648
    %v1234 = vsel %vm1232, %v1233, %v1231
    %v1235 = vrsqrt.pop %v1182
    %v1236 = vmul.f32 %v1182, %v1235
    %vm1237 = vcmp.eq.f32.partialorder %v1182, inf
    %v1238 = vsel %vm1237, %v1182, %v1236
    %vm1239 = vcmp.eq.f32.partialorder %v1182, 0.0
    %v1240 = vand.u32 %v1182, 2147483648
    %v1241 = vsel %vm1239, %v1240, %v1238
    %v1242 = vrsqrt.pop %v1196
    %v1243 = vmul.f32 %v1196, %v1242
    %vm1244 = vcmp.eq.f32.partialorder %v1196, inf
    %v1245 = vsel %vm1244, %v1196, %v1243
    %vm1246 = vcmp.eq.f32.partialorder %v1196, 0.0
    %v1247 = vand.u32 %v1196, 2147483648
    %v1248 = vsel %vm1246, %v1247, %v1245
    %v1249 = vrsqrt.pop %v1205
    %v1250 = vmul.f32 %v1205, %v1249
    %vm1251 = vcmp.eq.f32.partialorder %v1205, inf
    %v1252 = vsel %vm1251, %v1205, %v1250
    %vm1253 = vcmp.eq.f32.partialorder %v1205, 0.0
    %v1254 = vand.u32 %v1205, 2147483648
    %v1255 = vsel %vm1253, %v1254, %v1252
    %v1256 = vrsqrt.pop %v1214
    %v1257 = vmul.f32 %v1214, %v1256
    %vm1258 = vcmp.eq.f32.partialorder %v1214, inf
    %v1259 = vsel %vm1258, %v1214, %v1257
    %vm1260 = vcmp.eq.f32.partialorder %v1214, 0.0
    %v1261 = vand.u32 %v1214, 2147483648
    %v1262 = vsel %vm1260, %v1261, %v1259
    %v1263 = vrsqrt.pop %v1227
    %v1264 = vmul.f32 %v1227, %v1263
    %vm1265 = vcmp.eq.f32.partialorder %v1227, inf
    %v1266 = vsel %vm1265, %v1227, %v1264
    %vm1267 = vcmp.eq.f32.partialorder %v1227, 0.0
    %v1268 = vand.u32 %v1227, 2147483648
    %v1269 = vsel %vm1267, %v1268, %v1266
    %v1270 = vadd.f32 %v1234, 1e-08
    %v1271 = vadd.f32 %v1241, 1e-08
    %v1272 = vadd.f32 %v1248, 1e-08
    %v1273 = vadd.f32 %v1255, 1e-08
    %v1274 = vadd.f32 %v1262, 1e-08
    %v1275 = vadd.f32 %v1269, 1e-08
    %v1276 = vrcp.pop %v1270
    %v1277 = vmul.f32 1.0, %v1276
    %v1278 = vrcp.pop %v1271
    %v1279 = vmul.f32 1.0, %v1278
    %v1280 = vrcp.pop %v1272
    %v1281 = vmul.f32 1.0, %v1280
    %v1282 = vrcp.pop %v1273
    %v1283 = vmul.f32 1.0, %v1282
    %v1284 = vrcp.pop %v1274
    %v1285 = vmul.f32 1.0, %v1284
    %v1286 = vrcp.pop %v1275
    %v1287 = vmul.f32 1.0, %v1286
    %v1288 = vmul.f32 %v1117, %v1277
    %v1289 = vmul.f32 %v1118, %v1279
    %v1290 = vmul.f32 %v1119, %v1281
    %v1291 = vmul.f32 %v1120, %v1277
    %v1292 = vmul.f32 %v1121, %v1279
    %v1293 = vmul.f32 %v1122, %v1281
    %v1294 = vmul.f32 %v1123, %v1277
    %v1295 = vmul.f32 %v1124, %v1279
    %v1296 = vmul.f32 %v1125, %v1281
    %v1297 = vmul.f32 %v1126, %v1277
    %v1298 = vmul.f32 %v1127, %v1279
    %v1299 = vmul.f32 %v1128, %v1281
    %v1300 = vmul.f32 %v1129, %v1283
    %v1301 = vmul.f32 %v1130, %v1285
    %v1302 = vmul.f32 %v1131, %v1287
    %v1303 = vmul.f32 %v1132, %v1283
    %v1304 = vmul.f32 %v1133, %v1285
    %v1305 = vmul.f32 %v1134, %v1287
    %v1306 = vmul.f32 %v1135, %v1283
    %v1307 = vmul.f32 %v1136, %v1285
    %v1308 = vmul.f32 %v1137, %v1287
    %v1309 = vmul.f32 %v1138, %v1283
    %v1310 = vmul.f32 %v1139, %v1285
    %v1311 = vmul.f32 %v1140, %v1287
    %1312 = vst [vmem:[#allocation2] sm:$0xff] %v1288
    %1313 = vst [vmem:[#allocation2 + $0x8] sm:$0xff] %v1289
    %1314 = vst.msk [vmem:[#allocation2 + $0x10] sm:$0xff] %vm1183, %v1290
    %1315 = vst [vmem:[#allocation2 + $0x18] sm:$0xff] %v1291
    %1316 = vst [vmem:[#allocation2 + $0x20] sm:$0xff] %v1292
    %1317 = vst.msk [vmem:[#allocation2 + $0x28] sm:$0xff] %vm1183, %v1293
    %1318 = vst [vmem:[#allocation2 + $0x30] sm:$0xff] %v1294
    %1319 = vst [vmem:[#allocation2 + $0x38] sm:$0xff] %v1295
    %1320 = vst.msk [vmem:[#allocation2 + $0x40] sm:$0xff] %vm1183, %v1296
    %1321 = vst [vmem:[#allocation2 + $0x48] sm:$0xff] %v1297
    %1322 = vst [vmem:[#allocation2 + $0x50] sm:$0xff] %v1298
    %1323 = vst.msk [vmem:[#allocation2 + $0x58] sm:$0xff] %vm1183, %v1299
    %1324 = vst [vmem:[#allocation2 + $0x60] sm:$0xff] %v1300
    %1325 = vst [vmem:[#allocation2 + $0x68] sm:$0xff] %v1301
    %1326 = vst.msk [vmem:[#allocation2 + $0x70] sm:$0xff] %vm1183, %v1302
    %1327 = vst [vmem:[#allocation2 + $0x78] sm:$0xff] %v1303
    %1328 = vst [vmem:[#allocation2 + $0x80] sm:$0xff] %v1304
    %1329 = vst.msk [vmem:[#allocation2 + $0x88] sm:$0xff] %vm1183, %v1305
    %1330 = vst [vmem:[#allocation2 + $0x90] sm:$0xff] %v1306
    %1331 = vst [vmem:[#allocation2 + $0x98] sm:$0xff] %v1307
    %1332 = vst.msk [vmem:[#allocation2 + $0xa0] sm:$0xff] %vm1183, %v1308
    %1333 = vst [vmem:[#allocation2 + $0xa8] sm:$0xff] %v1309
    %1334 = vst [vmem:[#allocation2 + $0xb0] sm:$0xff] %v1310
    %1335 = vst.msk [vmem:[#allocation2 + $0xb8] sm:$0xff] %vm1183, %v1311
    %s1336 = sld [smem:[#allocation3]]
    %s1337 = sld [smem:[#allocation3 + $0x1]]
    %v1338 = vld [vmem:[#allocation2] sm:$0xff]
    %v1339 = vld [vmem:[#allocation2 + $0x8] sm:$0xff]
    %v1340 = vld [vmem:[#allocation2 + $0x18] sm:$0xff]
    %v1341 = vld [vmem:[#allocation2 + $0x20] sm:$0xff]
    %v1342 = vld [vmem:[#allocation2 + $0x30] sm:$0xff]
    %v1343 = vld [vmem:[#allocation2 + $0x38] sm:$0xff]
    %v1344 = vld [vmem:[#allocation2 + $0x48] sm:$0xff]
    %v1345 = vld [vmem:[#allocation2 + $0x50] sm:$0xff]
    %v1346 = vld [vmem:[#allocation2 + $0x10] sm:$0xff]
    %v1347 = vld [vmem:[#allocation2 + $0x28] sm:$0xff]
    %v1348 = vld [vmem:[#allocation2 + $0x40] sm:$0xff]
    %v1349 = vld [vmem:[#allocation2 + $0x58] sm:$0xff]
    %1362 = vrot.lane.b32.xlu0 %v1338, 112
    %v1363 = vpop.permute.xlu0 %1362
    %1364 = vrot.lane.b32.xlu0 %v1339, 112
    %v1365 = vpop.permute.xlu0 %1364
    %1366 = vrot.lane.b32.xlu0 %v1346, 112
    %v1367 = vpop.permute.xlu0 %1366
    %1368 = vrot.lane.b32.xlu0 %v1340, 112
    %v1369 = vpop.permute.xlu0 %1368
    %1370 = vrot.lane.b32.xlu0 %v1341, 112
    %v1371 = vpop.permute.xlu0 %1370
    %1372 = vrot.lane.b32.xlu0 %v1347, 112
    %v1373 = vpop.permute.xlu0 %1372
    %1374 = vrot.lane.b32.xlu0 %v1342, 112
    %v1375 = vpop.permute.xlu0 %1374
    %1376 = vrot.lane.b32.xlu0 %v1343, 112
    %v1377 = vpop.permute.xlu0 %1376
    %1378 = vrot.lane.b32.xlu0 %v1348, 112
    %v1379 = vpop.permute.xlu0 %1378
    %1380 = vrot.lane.b32.xlu0 %v1344, 112
    %v1381 = vpop.permute.xlu0 %1380
    %1382 = vrot.lane.b32.xlu0 %v1345, 112
    %v1383 = vpop.permute.xlu0 %1382
    %1384 = vrot.lane.b32.xlu0 %v1349, 112
    %v1385 = vpop.permute.xlu0 %1384
    %vm1386 = vcmask 916480
    %v1387 = vsel %vm1386, %v1363, %v1365
    %v1388 = vsel %vm1386, %v1365, %v1367
    %v1389 = vsel %vm1386, %v1369, %v1371
    %v1390 = vsel %vm1386, %v1371, %v1373
    %v1391 = vsel %vm1386, %v1375, %v1377
    %v1392 = vsel %vm1386, %v1377, %v1379
    %v1393 = vsel %vm1386, %v1381, %v1383
    %v1394 = vsel %vm1386, %v1383, %v1385
    %v1404 = vsel %vm117, %v620, 0
    %1406 = vmatprep.subr.mxu0 0.0
    %1407 = vmatpush1.msra.mxu0 0.0
    %1408 = vmatprep.subr.mxu0 0.0
    %1409 = vmatpush1.msra.mxu0 0.0
    %1410 = vmatprep.subr.mxu0 0.0
    %1411 = vmatpush1.msra.mxu0 0.0
    %1412 = vmatprep.subr.mxu0 0.0
    %1413 = vmatpush1.msra.mxu0 0.0
    %1414 = vmatprep.subr.mxu0 0.0
    %1415 = vmatpush1.msra.mxu0 0.0
    %1416 = vmatprep.subr.mxu0 0.0
    %1417 = vmatpush1.msra.mxu0 0.0
    %1418 = vmatprep.subr.mxu0 0.0
    %1419 = vmatpush1.msra.mxu0 0.0
    %1420 = vmatprep.subr.mxu0 0.0
    %1421 = vmatpush1.msra.mxu0 0.0
    %1422 = vmatprep.subr.mxu0 0.0
    %1423 = vmatpush1.msra.mxu0 0.0
    %1424 = vmatprep.subr.mxu0 0.0
    %1425 = vmatpush1.msra.mxu0 0.0
    %1426 = vmatprep.subr.mxu0 0.0
    %1427 = vmatpush1.msra.mxu0 0.0
    %1428 = vmatprep.subr.mxu0 0.0
    %1429 = vmatpush1.msra.mxu0 0.0
    %1430 = vmatprep.subr.mxu0 %v1394
    %1431 = vmatpush1.msra.mxu0 %v1393
    %1432 = vmatprep.subr.mxu0 %v1392
    %1433 = vmatpush1.msra.mxu0 %v1391
    %1434 = vmatprep.subr.mxu0 %v1390
    %1435 = vmatpush1.msra.mxu0 %v1389
    %1436 = vmatprep.subr.mxu0 %v1388
    %1437 = vmatpush1.msra.mxu0 %v1387
    %1438 = vmatprep.subr.mxu0 0.0
    %1439 = vmatpush2.msra.mxu0 0.0
    %1440 = vmatprep.subr.mxu0 0.0
    %1441 = vmatpush2.msra.mxu0 0.0
    %1442 = vmatprep.subr.mxu0 0.0
    %1443 = vmatpush2.msra.mxu0 0.0
    %1444 = vmatprep.subr.mxu0 0.0
    %1445 = vmatpush2.msra.mxu0 0.0
    %1446 = vmatprep.subr.mxu0 0.0
    %1447 = vmatpush2.msra.mxu0 0.0
    %1448 = vmatprep.subr.mxu0 0.0
    %1449 = vmatpush2.msra.mxu0 0.0
    %1450 = vmatprep.subr.mxu0 0.0
    %1451 = vmatpush2.msra.mxu0 0.0
    %1452 = vmatprep.subr.mxu0 0.0
    %1453 = vmatpush2.msra.mxu0 0.0
    %1454 = vmatprep.subr.mxu0 0.0
    %1455 = vmatpush2.msra.mxu0 0.0
    %1456 = vmatprep.subr.mxu0 0.0
    %1457 = vmatpush2.msra.mxu0 0.0
    %1458 = vmatprep.subr.mxu0 0.0
    %1459 = vmatpush2.msra.mxu0 0.0
    %1460 = vmatprep.subr.mxu0 0.0
    %1461 = vmatpush2.msra.mxu0 0.0
    %1462 = vmatprep.subr.mxu0 0.0
    %1463 = vmatpush2.msra.mxu0 0.0
    %1464 = vmatprep.subr.mxu0 0.0
    %1465 = vmatpush2.msra.mxu0 0.0
    %1466 = vmatprep.subr.mxu0 0.0
    %1467 = vmatpush2.msra.mxu0 0.0
    %1468 = vmatprep.subr.mxu0 0.0
    %1469 = vmatpush2.msra.mxu0 0.0
    %1470 = vmatprep.mubr.f32.mxu0 0.0
    %1471 = vmatmul.mubr.f32.gmra.mxu0 %v1404
    %v1472 = vpop.f32.mrf.mxu0
    %v1473 = vadd.f32 0.0, %v1472
    %v1474 = vpop.f32.mrf.mxu0
    %v1475 = vadd.f32 0.0, %v1474
    %1476 = vdwg.mxu0
    %v1478 = vsel %vm117, %v316, 0
    %1480 = vmatprep.subr.mxu0 0.0
    %1481 = vmatpush1.msra.mxu0 0.0
    %1482 = vmatprep.subr.mxu0 0.0
    %1483 = vmatpush1.msra.mxu0 0.0
    %1484 = vmatprep.subr.mxu0 0.0
    %1485 = vmatpush1.msra.mxu0 0.0
    %1486 = vmatprep.subr.mxu0 0.0
    %1487 = vmatpush1.msra.mxu0 0.0
    %1488 = vmatprep.subr.mxu0 0.0
    %1489 = vmatpush1.msra.mxu0 0.0
    %1490 = vmatprep.subr.mxu0 0.0
    %1491 = vmatpush1.msra.mxu0 0.0
    %1492 = vmatprep.subr.mxu0 0.0
    %1493 = vmatpush1.msra.mxu0 0.0
    %1494 = vmatprep.subr.mxu0 0.0
    %1495 = vmatpush1.msra.mxu0 0.0
    %1496 = vmatprep.subr.mxu0 0.0
    %1497 = vmatpush1.msra.mxu0 0.0
    %1498 = vmatprep.subr.mxu0 0.0
    %1499 = vmatpush1.msra.mxu0 0.0
    %1500 = vmatprep.subr.mxu0 0.0
    %1501 = vmatpush1.msra.mxu0 0.0
    %1502 = vmatprep.subr.mxu0 0.0
    %1503 = vmatpush1.msra.mxu0 0.0
    %1504 = vmatprep.subr.mxu0 %v1345
    %1505 = vmatpush1.msra.mxu0 %v1344
    %1506 = vmatprep.subr.mxu0 %v1343
    %1507 = vmatpush1.msra.mxu0 %v1342
    %1508 = vmatprep.subr.mxu0 %v1341
    %1509 = vmatpush1.msra.mxu0 %v1340
    %1510 = vmatprep.subr.mxu0 %v1339
    %1511 = vmatpush1.msra.mxu0 %v1338
    %1512 = vmatprep.subr.mxu0 0.0
    %1513 = vmatpush2.msra.mxu0 0.0
    %1514 = vmatprep.subr.mxu0 0.0
    %1515 = vmatpush2.msra.mxu0 0.0
    %1516 = vmatprep.subr.mxu0 0.0
    %1517 = vmatpush2.msra.mxu0 0.0
    %1518 = vmatprep.subr.mxu0 0.0
    %1519 = vmatpush2.msra.mxu0 0.0
    %1520 = vmatprep.subr.mxu0 0.0
    %1521 = vmatpush2.msra.mxu0 0.0
    %1522 = vmatprep.subr.mxu0 0.0
    %1523 = vmatpush2.msra.mxu0 0.0
    %1524 = vmatprep.subr.mxu0 0.0
    %1525 = vmatpush2.msra.mxu0 0.0
    %1526 = vmatprep.subr.mxu0 0.0
    %1527 = vmatpush2.msra.mxu0 0.0
    %1528 = vmatprep.subr.mxu0 0.0
    %1529 = vmatpush2.msra.mxu0 0.0
    %1530 = vmatprep.subr.mxu0 0.0
    %1531 = vmatpush2.msra.mxu0 0.0
    %1532 = vmatprep.subr.mxu0 0.0
    %1533 = vmatpush2.msra.mxu0 0.0
    %1534 = vmatprep.subr.mxu0 0.0
    %1535 = vmatpush2.msra.mxu0 0.0
    %1536 = vmatprep.subr.mxu0 0.0
    %1537 = vmatpush2.msra.mxu0 0.0
    %1538 = vmatprep.subr.mxu0 0.0
    %1539 = vmatpush2.msra.mxu0 0.0
    %1540 = vmatprep.subr.mxu0 0.0
    %1541 = vmatpush2.msra.mxu0 0.0
    %1542 = vmatprep.subr.mxu0 0.0
    %1543 = vmatpush2.msra.mxu0 0.0
    %1544 = vmatprep.mubr.f32.mxu0 0.0
    %1545 = vmatmul.mubr.f32.gmra.mxu0 %v1478
    %v1546 = vpop.f32.mrf.mxu0
    %v1547 = vadd.f32 %v1473, %v1546
    %v1548 = vpop.f32.mrf.mxu0
    %v1549 = vadd.f32 %v1475, %v1548
    %1550 = vdwg.mxu0
    %1551 = vrot.lane.b32.xlu0 %v1338, 96
    %v1552 = vpop.permute.xlu0 %1551
    %1553 = vrot.lane.b32.xlu0 %v1339, 96
    %v1554 = vpop.permute.xlu0 %1553
    %1555 = vrot.lane.b32.xlu0 %v1346, 96
    %v1556 = vpop.permute.xlu0 %1555
    %1557 = vrot.lane.b32.xlu0 %v1340, 96
    %v1558 = vpop.permute.xlu0 %1557
    %1559 = vrot.lane.b32.xlu0 %v1341, 96
    %v1560 = vpop.permute.xlu0 %1559
    %1561 = vrot.lane.b32.xlu0 %v1347, 96
    %v1562 = vpop.permute.xlu0 %1561
    %1563 = vrot.lane.b32.xlu0 %v1342, 96
    %v1564 = vpop.permute.xlu0 %1563
    %1565 = vrot.lane.b32.xlu0 %v1343, 96
    %v1566 = vpop.permute.xlu0 %1565
    %1567 = vrot.lane.b32.xlu0 %v1348, 96
    %v1568 = vpop.permute.xlu0 %1567
    %1569 = vrot.lane.b32.xlu0 %v1344, 96
    %v1570 = vpop.permute.xlu0 %1569
    %1571 = vrot.lane.b32.xlu0 %v1345, 96
    %v1572 = vpop.permute.xlu0 %1571
    %1573 = vrot.lane.b32.xlu0 %v1349, 96
    %v1574 = vpop.permute.xlu0 %1573
    %vm1575 = vcmask 785408
    %v1576 = vsel %vm1575, %v1552, %v1554
    %v1577 = vsel %vm1575, %v1554, %v1556
    %v1578 = vsel %vm1575, %v1558, %v1560
    %v1579 = vsel %vm1575, %v1560, %v1562
    %v1580 = vsel %vm1575, %v1564, %v1566
    %v1581 = vsel %vm1575, %v1566, %v1568
    %v1582 = vsel %vm1575, %v1570, %v1572
    %v1583 = vsel %vm1575, %v1572, %v1574
    %v1593 = vsel %vm117, %v920, 0
    %1595 = vmatprep.subr.mxu0 0.0
    %1596 = vmatpush1.msra.mxu0 0.0
    %1597 = vmatprep.subr.mxu0 0.0
    %1598 = vmatpush1.msra.mxu0 0.0
    %1599 = vmatprep.subr.mxu0 0.0
    %1600 = vmatpush1.msra.mxu0 0.0
    %1601 = vmatprep.subr.mxu0 0.0
    %1602 = vmatpush1.msra.mxu0 0.0
    %1603 = vmatprep.subr.mxu0 0.0
    %1604 = vmatpush1.msra.mxu0 0.0
    %1605 = vmatprep.subr.mxu0 0.0
    %1606 = vmatpush1.msra.mxu0 0.0
    %1607 = vmatprep.subr.mxu0 0.0
    %1608 = vmatpush1.msra.mxu0 0.0
    %1609 = vmatprep.subr.mxu0 0.0
    %1610 = vmatpush1.msra.mxu0 0.0
    %1611 = vmatprep.subr.mxu0 0.0
    %1612 = vmatpush1.msra.mxu0 0.0
    %1613 = vmatprep.subr.mxu0 0.0
    %1614 = vmatpush1.msra.mxu0 0.0
    %1615 = vmatprep.subr.mxu0 0.0
    %1616 = vmatpush1.msra.mxu0 0.0
    %1617 = vmatprep.subr.mxu0 0.0
    %1618 = vmatpush1.msra.mxu0 0.0
    %1619 = vmatprep.subr.mxu0 %v1583
    %1620 = vmatpush1.msra.mxu0 %v1582
    %1621 = vmatprep.subr.mxu0 %v1581
    %1622 = vmatpush1.msra.mxu0 %v1580
    %1623 = vmatprep.subr.mxu0 %v1579
    %1624 = vmatpush1.msra.mxu0 %v1578
    %1625 = vmatprep.subr.mxu0 %v1577
    %1626 = vmatpush1.msra.mxu0 %v1576
    %1627 = vmatprep.subr.mxu0 0.0
    %1628 = vmatpush2.msra.mxu0 0.0
    %1629 = vmatprep.subr.mxu0 0.0
    %1630 = vmatpush2.msra.mxu0 0.0
    %1631 = vmatprep.subr.mxu0 0.0
    %1632 = vmatpush2.msra.mxu0 0.0
    %1633 = vmatprep.subr.mxu0 0.0
    %1634 = vmatpush2.msra.mxu0 0.0
    %1635 = vmatprep.subr.mxu0 0.0
    %1636 = vmatpush2.msra.mxu0 0.0
    %1637 = vmatprep.subr.mxu0 0.0
    %1638 = vmatpush2.msra.mxu0 0.0
    %1639 = vmatprep.subr.mxu0 0.0
    %1640 = vmatpush2.msra.mxu0 0.0
    %1641 = vmatprep.subr.mxu0 0.0
    %1642 = vmatpush2.msra.mxu0 0.0
    %1643 = vmatprep.subr.mxu0 0.0
    %1644 = vmatpush2.msra.mxu0 0.0
    %1645 = vmatprep.subr.mxu0 0.0
    %1646 = vmatpush2.msra.mxu0 0.0
    %1647 = vmatprep.subr.mxu0 0.0
    %1648 = vmatpush2.msra.mxu0 0.0
    %1649 = vmatprep.subr.mxu0 0.0
    %1650 = vmatpush2.msra.mxu0 0.0
    %1651 = vmatprep.subr.mxu0 0.0
    %1652 = vmatpush2.msra.mxu0 0.0
    %1653 = vmatprep.subr.mxu0 0.0
    %1654 = vmatpush2.msra.mxu0 0.0
    %1655 = vmatprep.subr.mxu0 0.0
    %1656 = vmatpush2.msra.mxu0 0.0
    %1657 = vmatprep.subr.mxu0 0.0
    %1658 = vmatpush2.msra.mxu0 0.0
    %1659 = vmatprep.mubr.f32.mxu0 0.0
    %1660 = vmatmul.mubr.f32.gmra.mxu0 %v1593
    %v1661 = vpop.f32.mrf.mxu0
    %v1662 = vadd.f32 0.0, %v1661
    %v1663 = vpop.f32.mrf.mxu0
    %v1664 = vadd.f32 0.0, %v1663
    %1665 = vdwg.mxu0
    %v1666 = vadd.f32 %v1547, %v1662
    %v1667 = vadd.f32 %v1549, %v1664
    %v1668 = vld [vmem:[%s6] ss:$4 sm:$0x3]
    %v1670 = vlaneseq
    %v1671 = vshrl.u32 %v1670, 7
    %v1672 = vsub.s32 0, %v1671
    %v1673 = vrot.slane %v1668, %v1672
    %v1674 = vlaneseq
    %v1675 = vshrl.u32 %v1674, 7
    %v1676 = vsub.s32 1, %v1675
    %v1677 = vrot.slane %v1668, %v1676
    %v1680 = vmul.f32 %v1666, %v1673
    %v1681 = vmul.f32 %v1667, %v1677
    %v1682 = vadd.f32 %v1680, 0.0
    %v1683 = vadd.f32 %v1681, 0.0
    %1684 = vrot.lane.b32.xlu0 %v1338, 111
    %v1685 = vpop.permute.xlu0 %1684
    %1686 = vrot.lane.b32.xlu0 %v1339, 111
    %v1687 = vpop.permute.xlu0 %1686
    %1688 = vrot.lane.b32.xlu0 %v1346, 111
    %v1689 = vpop.permute.xlu0 %1688
    %1690 = vrot.lane.b32.xlu0 %v1340, 111
    %v1691 = vpop.permute.xlu0 %1690
    %1692 = vrot.lane.b32.xlu0 %v1341, 111
    %v1693 = vpop.permute.xlu0 %1692
    %1694 = vrot.lane.b32.xlu0 %v1347, 111
    %v1695 = vpop.permute.xlu0 %1694
    %1696 = vrot.lane.b32.xlu0 %v1342, 111
    %v1697 = vpop.permute.xlu0 %1696
    %1698 = vrot.lane.b32.xlu0 %v1343, 111
    %v1699 = vpop.permute.xlu0 %1698
    %1700 = vrot.lane.b32.xlu0 %v1348, 111
    %v1701 = vpop.permute.xlu0 %1700
    %1702 = vrot.lane.b32.xlu0 %v1344, 111
    %v1703 = vpop.permute.xlu0 %1702
    %1704 = vrot.lane.b32.xlu0 %v1345, 111
    %v1705 = vpop.permute.xlu0 %1704
    %1706 = vrot.lane.b32.xlu0 %v1349, 111
    %v1707 = vpop.permute.xlu0 %1706
    %vm1708 = vcmask 908288
    %v1709 = vsel %vm1708, %v1685, %v1687
    %v1710 = vsel %vm1708, %v1687, %v1689
    %v1711 = vsel %vm1708, %v1691, %v1693
    %v1712 = vsel %vm1708, %v1693, %v1695
    %v1713 = vsel %vm1708, %v1697, %v1699
    %v1714 = vsel %vm1708, %v1699, %v1701
    %v1715 = vsel %vm1708, %v1703, %v1705
    %v1716 = vsel %vm1708, %v1705, %v1707
    %v1726 = vsel %vm117, %v716, 0
    %1728 = vmatprep.subr.mxu0 0.0
    %1729 = vmatpush1.msra.mxu0 0.0
    %1730 = vmatprep.subr.mxu0 0.0
    %1731 = vmatpush1.msra.mxu0 0.0
    %1732 = vmatprep.subr.mxu0 0.0
    %1733 = vmatpush1.msra.mxu0 0.0
    %1734 = vmatprep.subr.mxu0 0.0
    %1735 = vmatpush1.msra.mxu0 0.0
    %1736 = vmatprep.subr.mxu0 0.0
    %1737 = vmatpush1.msra.mxu0 0.0
    %1738 = vmatprep.subr.mxu0 0.0
    %1739 = vmatpush1.msra.mxu0 0.0
    %1740 = vmatprep.subr.mxu0 0.0
    %1741 = vmatpush1.msra.mxu0 0.0
    %1742 = vmatprep.subr.mxu0 0.0
    %1743 = vmatpush1.msra.mxu0 0.0
    %1744 = vmatprep.subr.mxu0 0.0
    %1745 = vmatpush1.msra.mxu0 0.0
    %1746 = vmatprep.subr.mxu0 0.0
    %1747 = vmatpush1.msra.mxu0 0.0
    %1748 = vmatprep.subr.mxu0 0.0
    %1749 = vmatpush1.msra.mxu0 0.0
    %1750 = vmatprep.subr.mxu0 0.0
    %1751 = vmatpush1.msra.mxu0 0.0
    %1752 = vmatprep.subr.mxu0 %v1716
    %1753 = vmatpush1.msra.mxu0 %v1715
    %1754 = vmatprep.subr.mxu0 %v1714
    %1755 = vmatpush1.msra.mxu0 %v1713
    %1756 = vmatprep.subr.mxu0 %v1712
    %1757 = vmatpush1.msra.mxu0 %v1711
    %1758 = vmatprep.subr.mxu0 %v1710
    %1759 = vmatpush1.msra.mxu0 %v1709
    %1760 = vmatprep.subr.mxu0 0.0
    %1761 = vmatpush2.msra.mxu0 0.0
    %1762 = vmatprep.subr.mxu0 0.0
    %1763 = vmatpush2.msra.mxu0 0.0
    %1764 = vmatprep.subr.mxu0 0.0
    %1765 = vmatpush2.msra.mxu0 0.0
    %1766 = vmatprep.subr.mxu0 0.0
    %1767 = vmatpush2.msra.mxu0 0.0
    %1768 = vmatprep.subr.mxu0 0.0
    %1769 = vmatpush2.msra.mxu0 0.0
    %1770 = vmatprep.subr.mxu0 0.0
    %1771 = vmatpush2.msra.mxu0 0.0
    %1772 = vmatprep.subr.mxu0 0.0
    %1773 = vmatpush2.msra.mxu0 0.0
    %1774 = vmatprep.subr.mxu0 0.0
    %1775 = vmatpush2.msra.mxu0 0.0
    %1776 = vmatprep.subr.mxu0 0.0
    %1777 = vmatpush2.msra.mxu0 0.0
    %1778 = vmatprep.subr.mxu0 0.0
    %1779 = vmatpush2.msra.mxu0 0.0
    %1780 = vmatprep.subr.mxu0 0.0
    %1781 = vmatpush2.msra.mxu0 0.0
    %1782 = vmatprep.subr.mxu0 0.0
    %1783 = vmatpush2.msra.mxu0 0.0
    %1784 = vmatprep.subr.mxu0 0.0
    %1785 = vmatpush2.msra.mxu0 0.0
    %1786 = vmatprep.subr.mxu0 0.0
    %1787 = vmatpush2.msra.mxu0 0.0
    %1788 = vmatprep.subr.mxu0 0.0
    %1789 = vmatpush2.msra.mxu0 0.0
    %1790 = vmatprep.subr.mxu0 0.0
    %1791 = vmatpush2.msra.mxu0 0.0
    %1792 = vmatprep.mubr.f32.mxu0 0.0
    %1793 = vmatmul.mubr.f32.gmra.mxu0 %v1726
    %v1794 = vpop.f32.mrf.mxu0
    %v1795 = vadd.f32 0.0, %v1794
    %v1796 = vpop.f32.mrf.mxu0
    %v1797 = vadd.f32 0.0, %v1796
    %1798 = vdwg.mxu0
    %1799 = vrot.lane.b32.xlu0 %v1338, 127
    %v1800 = vpop.permute.xlu0 %1799
    %1801 = vrot.lane.b32.xlu0 %v1339, 127
    %v1802 = vpop.permute.xlu0 %1801
    %1803 = vrot.lane.b32.xlu0 %v1346, 127
    %v1804 = vpop.permute.xlu0 %1803
    %1805 = vrot.lane.b32.xlu0 %v1340, 127
    %v1806 = vpop.permute.xlu0 %1805
    %1807 = vrot.lane.b32.xlu0 %v1341, 127
    %v1808 = vpop.permute.xlu0 %1807
    %1809 = vrot.lane.b32.xlu0 %v1347, 127
    %v1810 = vpop.permute.xlu0 %1809
    %1811 = vrot.lane.b32.xlu0 %v1342, 127
    %v1812 = vpop.permute.xlu0 %1811
    %1813 = vrot.lane.b32.xlu0 %v1343, 127
    %v1814 = vpop.permute.xlu0 %1813
    %1815 = vrot.lane.b32.xlu0 %v1348, 127
    %v1816 = vpop.permute.xlu0 %1815
    %1817 = vrot.lane.b32.xlu0 %v1344, 127
    %v1818 = vpop.permute.xlu0 %1817
    %1819 = vrot.lane.b32.xlu0 %v1345, 127
    %v1820 = vpop.permute.xlu0 %1819
    %1821 = vrot.lane.b32.xlu0 %v1349, 127
    %v1822 = vpop.permute.xlu0 %1821
    %vm1823 = vcmask 1039360
    %v1824 = vsel %vm1823, %v1800, %v1802
    %v1825 = vsel %vm1823, %v1802, %v1804
    %v1826 = vsel %vm1823, %v1806, %v1808
    %v1827 = vsel %vm1823, %v1808, %v1810
    %v1828 = vsel %vm1823, %v1812, %v1814
    %v1829 = vsel %vm1823, %v1814, %v1816
    %v1830 = vsel %vm1823, %v1818, %v1820
    %v1831 = vsel %vm1823, %v1820, %v1822
    %v1841 = vsel %vm117, %v420, 0
    %1843 = vmatprep.subr.mxu0 0.0
    %1844 = vmatpush1.msra.mxu0 0.0
    %1845 = vmatprep.subr.mxu0 0.0
    %1846 = vmatpush1.msra.mxu0 0.0
    %1847 = vmatprep.subr.mxu0 0.0
    %1848 = vmatpush1.msra.mxu0 0.0
    %1849 = vmatprep.subr.mxu0 0.0
    %1850 = vmatpush1.msra.mxu0 0.0
    %1851 = vmatprep.subr.mxu0 0.0
    %1852 = vmatpush1.msra.mxu0 0.0
    %1853 = vmatprep.subr.mxu0 0.0
    %1854 = vmatpush1.msra.mxu0 0.0
    %1855 = vmatprep.subr.mxu0 0.0
    %1856 = vmatpush1.msra.mxu0 0.0
    %1857 = vmatprep.subr.mxu0 0.0
    %1858 = vmatpush1.msra.mxu0 0.0
    %1859 = vmatprep.subr.mxu0 0.0
    %1860 = vmatpush1.msra.mxu0 0.0
    %1861 = vmatprep.subr.mxu0 0.0
    %1862 = vmatpush1.msra.mxu0 0.0
    %1863 = vmatprep.subr.mxu0 0.0
    %1864 = vmatpush1.msra.mxu0 0.0
    %1865 = vmatprep.subr.mxu0 0.0
    %1866 = vmatpush1.msra.mxu0 0.0
    %1867 = vmatprep.subr.mxu0 %v1831
    %1868 = vmatpush1.msra.mxu0 %v1830
    %1869 = vmatprep.subr.mxu0 %v1829
    %1870 = vmatpush1.msra.mxu0 %v1828
    %1871 = vmatprep.subr.mxu0 %v1827
    %1872 = vmatpush1.msra.mxu0 %v1826
    %1873 = vmatprep.subr.mxu0 %v1825
    %1874 = vmatpush1.msra.mxu0 %v1824
    %1875 = vmatprep.subr.mxu0 0.0
    %1876 = vmatpush2.msra.mxu0 0.0
    %1877 = vmatprep.subr.mxu0 0.0
    %1878 = vmatpush2.msra.mxu0 0.0
    %1879 = vmatprep.subr.mxu0 0.0
    %1880 = vmatpush2.msra.mxu0 0.0
    %1881 = vmatprep.subr.mxu0 0.0
    %1882 = vmatpush2.msra.mxu0 0.0
    %1883 = vmatprep.subr.mxu0 0.0
    %1884 = vmatpush2.msra.mxu0 0.0
    %1885 = vmatprep.subr.mxu0 0.0
    %1886 = vmatpush2.msra.mxu0 0.0
    %1887 = vmatprep.subr.mxu0 0.0
    %1888 = vmatpush2.msra.mxu0 0.0
    %1889 = vmatprep.subr.mxu0 0.0
    %1890 = vmatpush2.msra.mxu0 0.0
    %1891 = vmatprep.subr.mxu0 0.0
    %1892 = vmatpush2.msra.mxu0 0.0
    %1893 = vmatprep.subr.mxu0 0.0
    %1894 = vmatpush2.msra.mxu0 0.0
    %1895 = vmatprep.subr.mxu0 0.0
    %1896 = vmatpush2.msra.mxu0 0.0
    %1897 = vmatprep.subr.mxu0 0.0
    %1898 = vmatpush2.msra.mxu0 0.0
    %1899 = vmatprep.subr.mxu0 0.0
    %1900 = vmatpush2.msra.mxu0 0.0
    %1901 = vmatprep.subr.mxu0 0.0
    %1902 = vmatpush2.msra.mxu0 0.0
    %1903 = vmatprep.subr.mxu0 0.0
    %1904 = vmatpush2.msra.mxu0 0.0
    %1905 = vmatprep.subr.mxu0 0.0
    %1906 = vmatpush2.msra.mxu0 0.0
    %1907 = vmatprep.mubr.f32.mxu0 0.0
    %1908 = vmatmul.mubr.f32.gmra.mxu0 %v1841
    %v1909 = vpop.f32.mrf.mxu0
    %v1910 = vadd.f32 %v1795, %v1909
    %v1911 = vpop.f32.mrf.mxu0
    %v1912 = vadd.f32 %v1797, %v1911
    %1913 = vdwg.mxu0
    %1914 = vrot.lane.b32.xlu0 %v1338, 95
    %v1915 = vpop.permute.xlu0 %1914
    %1916 = vrot.lane.b32.xlu0 %v1339, 95
    %v1917 = vpop.permute.xlu0 %1916
    %1918 = vrot.lane.b32.xlu0 %v1346, 95
    %v1919 = vpop.permute.xlu0 %1918
    %1920 = vrot.lane.b32.xlu0 %v1340, 95
    %v1921 = vpop.permute.xlu0 %1920
    %1922 = vrot.lane.b32.xlu0 %v1341, 95
    %v1923 = vpop.permute.xlu0 %1922
    %1924 = vrot.lane.b32.xlu0 %v1347, 95
    %v1925 = vpop.permute.xlu0 %1924
    %1926 = vrot.lane.b32.xlu0 %v1342, 95
    %v1927 = vpop.permute.xlu0 %1926
    %1928 = vrot.lane.b32.xlu0 %v1343, 95
    %v1929 = vpop.permute.xlu0 %1928
    %1930 = vrot.lane.b32.xlu0 %v1348, 95
    %v1931 = vpop.permute.xlu0 %1930
    %1932 = vrot.lane.b32.xlu0 %v1344, 95
    %v1933 = vpop.permute.xlu0 %1932
    %1934 = vrot.lane.b32.xlu0 %v1345, 95
    %v1935 = vpop.permute.xlu0 %1934
    %1936 = vrot.lane.b32.xlu0 %v1349, 95
    %v1937 = vpop.permute.xlu0 %1936
    %vm1938 = vcmask 777216
    %v1939 = vsel %vm1938, %v1915, %v1917
    %v1940 = vsel %vm1938, %v1917, %v1919
    %v1941 = vsel %vm1938, %v1921, %v1923
    %v1942 = vsel %vm1938, %v1923, %v1925
    %v1943 = vsel %vm1938, %v1927, %v1929
    %v1944 = vsel %vm1938, %v1929, %v1931
    %v1945 = vsel %vm1938, %v1933, %v1935
    %v1946 = vsel %vm1938, %v1935, %v1937
    %v1956 = vsel %vm117, %v1020, 0
    %1958 = vmatprep.subr.mxu0 0.0
    %1959 = vmatpush1.msra.mxu0 0.0
    %1960 = vmatprep.subr.mxu0 0.0
    %1961 = vmatpush1.msra.mxu0 0.0
    %1962 = vmatprep.subr.mxu0 0.0
    %1963 = vmatpush1.msra.mxu0 0.0
    %1964 = vmatprep.subr.mxu0 0.0
    %1965 = vmatpush1.msra.mxu0 0.0
    %1966 = vmatprep.subr.mxu0 0.0
    %1967 = vmatpush1.msra.mxu0 0.0
    %1968 = vmatprep.subr.mxu0 0.0
    %1969 = vmatpush1.msra.mxu0 0.0
    %1970 = vmatprep.subr.mxu0 0.0
    %1971 = vmatpush1.msra.mxu0 0.0
    %1972 = vmatprep.subr.mxu0 0.0
    %1973 = vmatpush1.msra.mxu0 0.0
    %1974 = vmatprep.subr.mxu0 0.0
    %1975 = vmatpush1.msra.mxu0 0.0
    %1976 = vmatprep.subr.mxu0 0.0
    %1977 = vmatpush1.msra.mxu0 0.0
    %1978 = vmatprep.subr.mxu0 0.0
    %1979 = vmatpush1.msra.mxu0 0.0
    %1980 = vmatprep.subr.mxu0 0.0
    %1981 = vmatpush1.msra.mxu0 0.0
    %1982 = vmatprep.subr.mxu0 %v1946
    %1983 = vmatpush1.msra.mxu0 %v1945
    %1984 = vmatprep.subr.mxu0 %v1944
    %1985 = vmatpush1.msra.mxu0 %v1943
    %1986 = vmatprep.subr.mxu0 %v1942
    %1987 = vmatpush1.msra.mxu0 %v1941
    %1988 = vmatprep.subr.mxu0 %v1940
    %1989 = vmatpush1.msra.mxu0 %v1939
    %1990 = vmatprep.subr.mxu0 0.0
    %1991 = vmatpush2.msra.mxu0 0.0
    %1992 = vmatprep.subr.mxu0 0.0
    %1993 = vmatpush2.msra.mxu0 0.0
    %1994 = vmatprep.subr.mxu0 0.0
    %1995 = vmatpush2.msra.mxu0 0.0
    %1996 = vmatprep.subr.mxu0 0.0
    %1997 = vmatpush2.msra.mxu0 0.0
    %1998 = vmatprep.subr.mxu0 0.0
    %1999 = vmatpush2.msra.mxu0 0.0
    %2000 = vmatprep.subr.mxu0 0.0
    %2001 = vmatpush2.msra.mxu0 0.0
    %2002 = vmatprep.subr.mxu0 0.0
    %2003 = vmatpush2.msra.mxu0 0.0
    %2004 = vmatprep.subr.mxu0 0.0
    %2005 = vmatpush2.msra.mxu0 0.0
    %2006 = vmatprep.subr.mxu0 0.0
    %2007 = vmatpush2.msra.mxu0 0.0
    %2008 = vmatprep.subr.mxu0 0.0
    %2009 = vmatpush2.msra.mxu0 0.0
    %2010 = vmatprep.subr.mxu0 0.0
    %2011 = vmatpush2.msra.mxu0 0.0
    %2012 = vmatprep.subr.mxu0 0.0
    %2013 = vmatpush2.msra.mxu0 0.0
    %2014 = vmatprep.subr.mxu0 0.0
    %2015 = vmatpush2.msra.mxu0 0.0
    %2016 = vmatprep.subr.mxu0 0.0
    %2017 = vmatpush2.msra.mxu0 0.0
    %2018 = vmatprep.subr.mxu0 0.0
    %2019 = vmatpush2.msra.mxu0 0.0
    %2020 = vmatprep.subr.mxu0 0.0
    %2021 = vmatpush2.msra.mxu0 0.0
    %2022 = vmatprep.mubr.f32.mxu0 0.0
    %2023 = vmatmul.mubr.f32.gmra.mxu0 %v1956
    %v2024 = vpop.f32.mrf.mxu0
    %v2025 = vadd.f32 0.0, %v2024
    %v2026 = vpop.f32.mrf.mxu0
    %v2027 = vadd.f32 0.0, %v2026
    %2028 = vdwg.mxu0
    %v2029 = vadd.f32 %v1910, %v2025
    %v2030 = vadd.f32 %v1912, %v2027
    %v2031 = vadd.f32 %v1682, %v2029
    %v2032 = vadd.f32 %v1683, %v2030
    %2033 = vrot.lane.b32.xlu0 %v1338, 110
    %v2034 = vpop.permute.xlu0 %2033
    %2035 = vrot.lane.b32.xlu0 %v1339, 110
    %v2036 = vpop.permute.xlu0 %2035
    %2037 = vrot.lane.b32.xlu0 %v1346, 110
    %v2038 = vpop.permute.xlu0 %2037
    %2039 = vrot.lane.b32.xlu0 %v1340, 110
    %v2040 = vpop.permute.xlu0 %2039
    %2041 = vrot.lane.b32.xlu0 %v1341, 110
    %v2042 = vpop.permute.xlu0 %2041
    %2043 = vrot.lane.b32.xlu0 %v1347, 110
    %v2044 = vpop.permute.xlu0 %2043
    %2045 = vrot.lane.b32.xlu0 %v1342, 110
    %v2046 = vpop.permute.xlu0 %2045
    %2047 = vrot.lane.b32.xlu0 %v1343, 110
    %v2048 = vpop.permute.xlu0 %2047
    %2049 = vrot.lane.b32.xlu0 %v1348, 110
    %v2050 = vpop.permute.xlu0 %2049
    %2051 = vrot.lane.b32.xlu0 %v1344, 110
    %v2052 = vpop.permute.xlu0 %2051
    %2053 = vrot.lane.b32.xlu0 %v1345, 110
    %v2054 = vpop.permute.xlu0 %2053
    %2055 = vrot.lane.b32.xlu0 %v1349, 110
    %v2056 = vpop.permute.xlu0 %2055
    %vm2057 = vcmask 900096
    %v2058 = vsel %vm2057, %v2034, %v2036
    %v2059 = vsel %vm2057, %v2036, %v2038
    %v2060 = vsel %vm2057, %v2040, %v2042
    %v2061 = vsel %vm2057, %v2042, %v2044
    %v2062 = vsel %vm2057, %v2046, %v2048
    %v2063 = vsel %vm2057, %v2048, %v2050
    %v2064 = vsel %vm2057, %v2052, %v2054
    %v2065 = vsel %vm2057, %v2054, %v2056
    %v2075 = vsel %vm117, %v820, 0
    %2077 = vmatprep.subr.mxu0 0.0
    %2078 = vmatpush1.msra.mxu0 0.0
    %2079 = vmatprep.subr.mxu0 0.0
    %2080 = vmatpush1.msra.mxu0 0.0
    %2081 = vmatprep.subr.mxu0 0.0
    %2082 = vmatpush1.msra.mxu0 0.0
    %2083 = vmatprep.subr.mxu0 0.0
    %2084 = vmatpush1.msra.mxu0 0.0
    %2085 = vmatprep.subr.mxu0 0.0
    %2086 = vmatpush1.msra.mxu0 0.0
    %2087 = vmatprep.subr.mxu0 0.0
    %2088 = vmatpush1.msra.mxu0 0.0
    %2089 = vmatprep.subr.mxu0 0.0
    %2090 = vmatpush1.msra.mxu0 0.0
    %2091 = vmatprep.subr.mxu0 0.0
    %2092 = vmatpush1.msra.mxu0 0.0
    %2093 = vmatprep.subr.mxu0 0.0
    %2094 = vmatpush1.msra.mxu0 0.0
    %2095 = vmatprep.subr.mxu0 0.0
    %2096 = vmatpush1.msra.mxu0 0.0
    %2097 = vmatprep.subr.mxu0 0.0
    %2098 = vmatpush1.msra.mxu0 0.0
    %2099 = vmatprep.subr.mxu0 0.0
    %2100 = vmatpush1.msra.mxu0 0.0
    %2101 = vmatprep.subr.mxu0 %v2065
    %2102 = vmatpush1.msra.mxu0 %v2064
    %2103 = vmatprep.subr.mxu0 %v2063
    %2104 = vmatpush1.msra.mxu0 %v2062
    %2105 = vmatprep.subr.mxu0 %v2061
    %2106 = vmatpush1.msra.mxu0 %v2060
    %2107 = vmatprep.subr.mxu0 %v2059
    %2108 = vmatpush1.msra.mxu0 %v2058
    %2109 = vmatprep.subr.mxu0 0.0
    %2110 = vmatpush2.msra.mxu0 0.0
    %2111 = vmatprep.subr.mxu0 0.0
    %2112 = vmatpush2.msra.mxu0 0.0
    %2113 = vmatprep.subr.mxu0 0.0
    %2114 = vmatpush2.msra.mxu0 0.0
    %2115 = vmatprep.subr.mxu0 0.0
    %2116 = vmatpush2.msra.mxu0 0.0
    %2117 = vmatprep.subr.mxu0 0.0
    %2118 = vmatpush2.msra.mxu0 0.0
    %2119 = vmatprep.subr.mxu0 0.0
    %2120 = vmatpush2.msra.mxu0 0.0
    %2121 = vmatprep.subr.mxu0 0.0
    %2122 = vmatpush2.msra.mxu0 0.0
    %2123 = vmatprep.subr.mxu0 0.0
    %2124 = vmatpush2.msra.mxu0 0.0
    %2125 = vmatprep.subr.mxu0 0.0
    %2126 = vmatpush2.msra.mxu0 0.0
    %2127 = vmatprep.subr.mxu0 0.0
    %2128 = vmatpush2.msra.mxu0 0.0
    %2129 = vmatprep.subr.mxu0 0.0
    %2130 = vmatpush2.msra.mxu0 0.0
    %2131 = vmatprep.subr.mxu0 0.0
    %2132 = vmatpush2.msra.mxu0 0.0
    %2133 = vmatprep.subr.mxu0 0.0
    %2134 = vmatpush2.msra.mxu0 0.0
    %2135 = vmatprep.subr.mxu0 0.0
    %2136 = vmatpush2.msra.mxu0 0.0
    %2137 = vmatprep.subr.mxu0 0.0
    %2138 = vmatpush2.msra.mxu0 0.0
    %2139 = vmatprep.subr.mxu0 0.0
    %2140 = vmatpush2.msra.mxu0 0.0
    %2141 = vmatprep.mubr.f32.mxu0 0.0
    %2142 = vmatmul.mubr.f32.gmra.mxu0 %v2075
    %v2143 = vpop.f32.mrf.mxu0
    %v2144 = vadd.f32 0.0, %v2143
    %v2145 = vpop.f32.mrf.mxu0
    %v2146 = vadd.f32 0.0, %v2145
    %2147 = vdwg.mxu0
    %2148 = vrot.lane.b32.xlu0 %v1338, 126
    %v2149 = vpop.permute.xlu0 %2148
    %2150 = vrot.lane.b32.xlu0 %v1339, 126
    %v2151 = vpop.permute.xlu0 %2150
    %2152 = vrot.lane.b32.xlu0 %v1346, 126
    %v2153 = vpop.permute.xlu0 %2152
    %2154 = vrot.lane.b32.xlu0 %v1340, 126
    %v2155 = vpop.permute.xlu0 %2154
    %2156 = vrot.lane.b32.xlu0 %v1341, 126
    %v2157 = vpop.permute.xlu0 %2156
    %2158 = vrot.lane.b32.xlu0 %v1347, 126
    %v2159 = vpop.permute.xlu0 %2158
    %2160 = vrot.lane.b32.xlu0 %v1342, 126
    %v2161 = vpop.permute.xlu0 %2160
    %2162 = vrot.lane.b32.xlu0 %v1343, 126
    %v2163 = vpop.permute.xlu0 %2162
    %2164 = vrot.lane.b32.xlu0 %v1348, 126
    %v2165 = vpop.permute.xlu0 %2164
    %2166 = vrot.lane.b32.xlu0 %v1344, 126
    %v2167 = vpop.permute.xlu0 %2166
    %2168 = vrot.lane.b32.xlu0 %v1345, 126
    %v2169 = vpop.permute.xlu0 %2168
    %2170 = vrot.lane.b32.xlu0 %v1349, 126
    %v2171 = vpop.permute.xlu0 %2170
    %vm2172 = vcmask 1031168
    %v2173 = vsel %vm2172, %v2149, %v2151
    %v2174 = vsel %vm2172, %v2151, %v2153
    %v2175 = vsel %vm2172, %v2155, %v2157
    %v2176 = vsel %vm2172, %v2157, %v2159
    %v2177 = vsel %vm2172, %v2161, %v2163
    %v2178 = vsel %vm2172, %v2163, %v2165
    %v2179 = vsel %vm2172, %v2167, %v2169
    %v2180 = vsel %vm2172, %v2169, %v2171
    %v2190 = vsel %vm117, %v520, 0
    %2192 = vmatprep.subr.mxu0 0.0
    %2193 = vmatpush1.msra.mxu0 0.0
    %2194 = vmatprep.subr.mxu0 0.0
    %2195 = vmatpush1.msra.mxu0 0.0
    %2196 = vmatprep.subr.mxu0 0.0
    %2197 = vmatpush1.msra.mxu0 0.0
    %2198 = vmatprep.subr.mxu0 0.0
    %2199 = vmatpush1.msra.mxu0 0.0
    %2200 = vmatprep.subr.mxu0 0.0
    %2201 = vmatpush1.msra.mxu0 0.0
    %2202 = vmatprep.subr.mxu0 0.0
    %2203 = vmatpush1.msra.mxu0 0.0
    %2204 = vmatprep.subr.mxu0 0.0
    %2205 = vmatpush1.msra.mxu0 0.0
    %2206 = vmatprep.subr.mxu0 0.0
    %2207 = vmatpush1.msra.mxu0 0.0
    %2208 = vmatprep.subr.mxu0 0.0
    %2209 = vmatpush1.msra.mxu0 0.0
    %2210 = vmatprep.subr.mxu0 0.0
    %2211 = vmatpush1.msra.mxu0 0.0
    %2212 = vmatprep.subr.mxu0 0.0
    %2213 = vmatpush1.msra.mxu0 0.0
    %2214 = vmatprep.subr.mxu0 0.0
    %2215 = vmatpush1.msra.mxu0 0.0
    %2216 = vmatprep.subr.mxu0 %v2180
    %2217 = vmatpush1.msra.mxu0 %v2179
    %2218 = vmatprep.subr.mxu0 %v2178
    %2219 = vmatpush1.msra.mxu0 %v2177
    %2220 = vmatprep.subr.mxu0 %v2176
    %2221 = vmatpush1.msra.mxu0 %v2175
    %2222 = vmatprep.subr.mxu0 %v2174
    %2223 = vmatpush1.msra.mxu0 %v2173
    %2224 = vmatprep.subr.mxu0 0.0
    %2225 = vmatpush2.msra.mxu0 0.0
    %2226 = vmatprep.subr.mxu0 0.0
    %2227 = vmatpush2.msra.mxu0 0.0
    %2228 = vmatprep.subr.mxu0 0.0
    %2229 = vmatpush2.msra.mxu0 0.0
    %2230 = vmatprep.subr.mxu0 0.0
    %2231 = vmatpush2.msra.mxu0 0.0
    %2232 = vmatprep.subr.mxu0 0.0
    %2233 = vmatpush2.msra.mxu0 0.0
    %2234 = vmatprep.subr.mxu0 0.0
    %2235 = vmatpush2.msra.mxu0 0.0
    %2236 = vmatprep.subr.mxu0 0.0
    %2237 = vmatpush2.msra.mxu0 0.0
    %2238 = vmatprep.subr.mxu0 0.0
    %2239 = vmatpush2.msra.mxu0 0.0
    %2240 = vmatprep.subr.mxu0 0.0
    %2241 = vmatpush2.msra.mxu0 0.0
    %2242 = vmatprep.subr.mxu0 0.0
    %2243 = vmatpush2.msra.mxu0 0.0
    %2244 = vmatprep.subr.mxu0 0.0
    %2245 = vmatpush2.msra.mxu0 0.0
    %2246 = vmatprep.subr.mxu0 0.0
    %2247 = vmatpush2.msra.mxu0 0.0
    %2248 = vmatprep.subr.mxu0 0.0
    %2249 = vmatpush2.msra.mxu0 0.0
    %2250 = vmatprep.subr.mxu0 0.0
    %2251 = vmatpush2.msra.mxu0 0.0
    %2252 = vmatprep.subr.mxu0 0.0
    %2253 = vmatpush2.msra.mxu0 0.0
    %2254 = vmatprep.subr.mxu0 0.0
    %2255 = vmatpush2.msra.mxu0 0.0
    %2256 = vmatprep.mubr.f32.mxu0 0.0
    %2257 = vmatmul.mubr.f32.gmra.mxu0 %v2190
    %v2258 = vpop.f32.mrf.mxu0
    %v2259 = vadd.f32 %v2144, %v2258
    %v2260 = vpop.f32.mrf.mxu0
    %v2261 = vadd.f32 %v2146, %v2260
    %2262 = vdwg.mxu0
    %2263 = vrot.lane.b32.xlu0 %v1338, 94
    %v2264 = vpop.permute.xlu0 %2263
    %2265 = vrot.lane.b32.xlu0 %v1339, 94
    %v2266 = vpop.permute.xlu0 %2265
    %2267 = vrot.lane.b32.xlu0 %v1346, 94
    %v2268 = vpop.permute.xlu0 %2267
    %2269 = vrot.lane.b32.xlu0 %v1340, 94
    %v2270 = vpop.permute.xlu0 %2269
    %2271 = vrot.lane.b32.xlu0 %v1341, 94
    %v2272 = vpop.permute.xlu0 %2271
    %2273 = vrot.lane.b32.xlu0 %v1347, 94
    %v2274 = vpop.permute.xlu0 %2273
    %2275 = vrot.lane.b32.xlu0 %v1342, 94
    %v2276 = vpop.permute.xlu0 %2275
    %2277 = vrot.lane.b32.xlu0 %v1343, 94
    %v2278 = vpop.permute.xlu0 %2277
    %2279 = vrot.lane.b32.xlu0 %v1348, 94
    %v2280 = vpop.permute.xlu0 %2279
    %2281 = vrot.lane.b32.xlu0 %v1344, 94
    %v2282 = vpop.permute.xlu0 %2281
    %2283 = vrot.lane.b32.xlu0 %v1345, 94
    %v2284 = vpop.permute.xlu0 %2283
    %2285 = vrot.lane.b32.xlu0 %v1349, 94
    %v2286 = vpop.permute.xlu0 %2285
    %vm2287 = vcmask 769024
    %v2288 = vsel %vm2287, %v2264, %v2266
    %v2289 = vsel %vm2287, %v2266, %v2268
    %v2290 = vsel %vm2287, %v2270, %v2272
    %v2291 = vsel %vm2287, %v2272, %v2274
    %v2292 = vsel %vm2287, %v2276, %v2278
    %v2293 = vsel %vm2287, %v2278, %v2280
    %v2294 = vsel %vm2287, %v2282, %v2284
    %v2295 = vsel %vm2287, %v2284, %v2286
    %v2305 = vsel %vm117, %v1116, 0
    %2307 = vmatprep.subr.mxu0 0.0
    %2308 = vmatpush1.msra.mxu0 0.0
    %2309 = vmatprep.subr.mxu0 0.0
    %2310 = vmatpush1.msra.mxu0 0.0
    %2311 = vmatprep.subr.mxu0 0.0
    %2312 = vmatpush1.msra.mxu0 0.0
    %2313 = vmatprep.subr.mxu0 0.0
    %2314 = vmatpush1.msra.mxu0 0.0
    %2315 = vmatprep.subr.mxu0 0.0
    %2316 = vmatpush1.msra.mxu0 0.0
    %2317 = vmatprep.subr.mxu0 0.0
    %2318 = vmatpush1.msra.mxu0 0.0
    %2319 = vmatprep.subr.mxu0 0.0
    %2320 = vmatpush1.msra.mxu0 0.0
    %2321 = vmatprep.subr.mxu0 0.0
    %2322 = vmatpush1.msra.mxu0 0.0
    %2323 = vmatprep.subr.mxu0 0.0
    %2324 = vmatpush1.msra.mxu0 0.0
    %2325 = vmatprep.subr.mxu0 0.0
    %2326 = vmatpush1.msra.mxu0 0.0
    %2327 = vmatprep.subr.mxu0 0.0
    %2328 = vmatpush1.msra.mxu0 0.0
    %2329 = vmatprep.subr.mxu0 0.0
    %2330 = vmatpush1.msra.mxu0 0.0
    %2331 = vmatprep.subr.mxu0 %v2295
    %2332 = vmatpush1.msra.mxu0 %v2294
    %2333 = vmatprep.subr.mxu0 %v2293
    %2334 = vmatpush1.msra.mxu0 %v2292
    %2335 = vmatprep.subr.mxu0 %v2291
    %2336 = vmatpush1.msra.mxu0 %v2290
    %2337 = vmatprep.subr.mxu0 %v2289
    %2338 = vmatpush1.msra.mxu0 %v2288
    %2339 = vmatprep.subr.mxu0 0.0
    %2340 = vmatpush2.msra.mxu0 0.0
    %2341 = vmatprep.subr.mxu0 0.0
    %2342 = vmatpush2.msra.mxu0 0.0
    %2343 = vmatprep.subr.mxu0 0.0
    %2344 = vmatpush2.msra.mxu0 0.0
    %2345 = vmatprep.subr.mxu0 0.0
    %2346 = vmatpush2.msra.mxu0 0.0
    %2347 = vmatprep.subr.mxu0 0.0
    %2348 = vmatpush2.msra.mxu0 0.0
    %2349 = vmatprep.subr.mxu0 0.0
    %2350 = vmatpush2.msra.mxu0 0.0
    %2351 = vmatprep.subr.mxu0 0.0
    %2352 = vmatpush2.msra.mxu0 0.0
    %2353 = vmatprep.subr.mxu0 0.0
    %2354 = vmatpush2.msra.mxu0 0.0
    %2355 = vmatprep.subr.mxu0 0.0
    %2356 = vmatpush2.msra.mxu0 0.0
    %2357 = vmatprep.subr.mxu0 0.0
    %2358 = vmatpush2.msra.mxu0 0.0
    %2359 = vmatprep.subr.mxu0 0.0
    %2360 = vmatpush2.msra.mxu0 0.0
    %2361 = vmatprep.subr.mxu0 0.0
    %2362 = vmatpush2.msra.mxu0 0.0
    %2363 = vmatprep.subr.mxu0 0.0
    %2364 = vmatpush2.msra.mxu0 0.0
    %2365 = vmatprep.subr.mxu0 0.0
    %2366 = vmatpush2.msra.mxu0 0.0
    %2367 = vmatprep.subr.mxu0 0.0
    %2368 = vmatpush2.msra.mxu0 0.0
    %2369 = vmatprep.subr.mxu0 0.0
    %2370 = vmatpush2.msra.mxu0 0.0
    %2371 = vmatprep.mubr.f32.mxu0 0.0
    %2372 = vmatmul.mubr.f32.gmra.mxu0 %v2305
    %v2373 = vpop.f32.mrf.mxu0
    %v2374 = vadd.f32 0.0, %v2373
    %v2375 = vpop.f32.mrf.mxu0
    %v2376 = vadd.f32 0.0, %v2375
    %2377 = vdwg.mxu0
    %v2378 = vadd.f32 %v2259, %v2374
    %v2379 = vadd.f32 %v2261, %v2376
    %s2380 = scalar_lea.vmem %s6, 2
    %v2381 = vld [vmem:[%s2380] ss:$4 sm:$0x3]
    %v2383 = vlaneseq
    %v2384 = vshrl.u32 %v2383, 7
    %v2385 = vsub.s32 0, %v2384
    %v2386 = vrot.slane %v2381, %v2385
    %v2387 = vlaneseq
    %v2388 = vshrl.u32 %v2387, 7
    %v2389 = vsub.s32 1, %v2388
    %v2390 = vrot.slane %v2381, %v2389
    %v2393 = vmul.f32 %v2378, %v2386
    %v2394 = vmul.f32 %v2379, %v2390
    %v2395 = vadd.f32 %v2031, %v2393
    %v2396 = vadd.f32 %v2032, %v2394
    %v2397 = vstv %s1336
    %v2398 = vmul.f32 %v2395, %v2397
    %v2399 = vmul.f32 %v2396, %v2397
    %v2400 = vstv %s1337
    %v2401 = vadd.f32 %v2398, %v2400
    %v2402 = vadd.f32 %v2399, %v2400
    %2403 = vst [vmem:[#allocation14] sm:$0xff] %v2401
    %2404 = vst [vmem:[#allocation14 + $0x8] sm:$0xff] %v2402
    %s2405 = scalar_lea.vmem [#allocation2], 96
    %v2406 = vld [vmem:[%s2405] sm:$0xff]
    %v2407 = vld [vmem:[%s2405 + $0x8] sm:$0xff]
    %v2408 = vld [vmem:[%s2405 + $0x18] sm:$0xff]
    %v2409 = vld [vmem:[%s2405 + $0x20] sm:$0xff]
    %v2410 = vld [vmem:[%s2405 + $0x30] sm:$0xff]
    %v2411 = vld [vmem:[%s2405 + $0x38] sm:$0xff]
    %v2412 = vld [vmem:[%s2405 + $0x48] sm:$0xff]
    %v2413 = vld [vmem:[%s2405 + $0x50] sm:$0xff]
    %v2414 = vld [vmem:[%s2405 + $0x10] sm:$0xff]
    %v2415 = vld [vmem:[%s2405 + $0x28] sm:$0xff]
    %v2416 = vld [vmem:[%s2405 + $0x40] sm:$0xff]
    %v2417 = vld [vmem:[%s2405 + $0x58] sm:$0xff]
    %2430 = vrot.lane.b32.xlu0 %v2406, 112
    %v2431 = vpop.permute.xlu0 %2430
    %2432 = vrot.lane.b32.xlu0 %v2407, 112
    %v2433 = vpop.permute.xlu0 %2432
    %2434 = vrot.lane.b32.xlu0 %v2414, 112
    %v2435 = vpop.permute.xlu0 %2434
    %2436 = vrot.lane.b32.xlu0 %v2408, 112
    %v2437 = vpop.permute.xlu0 %2436
    %2438 = vrot.lane.b32.xlu0 %v2409, 112
    %v2439 = vpop.permute.xlu0 %2438
    %2440 = vrot.lane.b32.xlu0 %v2415, 112
    %v2441 = vpop.permute.xlu0 %2440
    %2442 = vrot.lane.b32.xlu0 %v2410, 112
    %v2443 = vpop.permute.xlu0 %2442
    %2444 = vrot.lane.b32.xlu0 %v2411, 112
    %v2445 = vpop.permute.xlu0 %2444
    %2446 = vrot.lane.b32.xlu0 %v2416, 112
    %v2447 = vpop.permute.xlu0 %2446
    %2448 = vrot.lane.b32.xlu0 %v2412, 112
    %v2449 = vpop.permute.xlu0 %2448
    %2450 = vrot.lane.b32.xlu0 %v2413, 112
    %v2451 = vpop.permute.xlu0 %2450
    %2452 = vrot.lane.b32.xlu0 %v2417, 112
    %v2453 = vpop.permute.xlu0 %2452
    %v2454 = vsel %vm1386, %v2431, %v2433
    %v2455 = vsel %vm1386, %v2433, %v2435
    %v2456 = vsel %vm1386, %v2437, %v2439
    %v2457 = vsel %vm1386, %v2439, %v2441
    %v2458 = vsel %vm1386, %v2443, %v2445
    %v2459 = vsel %vm1386, %v2445, %v2447
    %v2460 = vsel %vm1386, %v2449, %v2451
    %v2461 = vsel %vm1386, %v2451, %v2453
    %2470 = vmatprep.subr.mxu0 0.0
    %2471 = vmatpush1.msra.mxu0 0.0
    %2472 = vmatprep.subr.mxu0 0.0
    %2473 = vmatpush1.msra.mxu0 0.0
    %2474 = vmatprep.subr.mxu0 0.0
    %2475 = vmatpush1.msra.mxu0 0.0
    %2476 = vmatprep.subr.mxu0 0.0
    %2477 = vmatpush1.msra.mxu0 0.0
    %2478 = vmatprep.subr.mxu0 0.0
    %2479 = vmatpush1.msra.mxu0 0.0
    %2480 = vmatprep.subr.mxu0 0.0
    %2481 = vmatpush1.msra.mxu0 0.0
    %2482 = vmatprep.subr.mxu0 0.0
    %2483 = vmatpush1.msra.mxu0 0.0
    %2484 = vmatprep.subr.mxu0 0.0
    %2485 = vmatpush1.msra.mxu0 0.0
    %2486 = vmatprep.subr.mxu0 0.0
    %2487 = vmatpush1.msra.mxu0 0.0
    %2488 = vmatprep.subr.mxu0 0.0
    %2489 = vmatpush1.msra.mxu0 0.0
    %2490 = vmatprep.subr.mxu0 0.0
    %2491 = vmatpush1.msra.mxu0 0.0
    %2492 = vmatprep.subr.mxu0 0.0
    %2493 = vmatpush1.msra.mxu0 0.0
    %2494 = vmatprep.subr.mxu0 %v2461
    %2495 = vmatpush1.msra.mxu0 %v2460
    %2496 = vmatprep.subr.mxu0 %v2459
    %2497 = vmatpush1.msra.mxu0 %v2458
    %2498 = vmatprep.subr.mxu0 %v2457
    %2499 = vmatpush1.msra.mxu0 %v2456
    %2500 = vmatprep.subr.mxu0 %v2455
    %2501 = vmatpush1.msra.mxu0 %v2454
    %2502 = vmatprep.subr.mxu0 0.0
    %2503 = vmatpush2.msra.mxu0 0.0
    %2504 = vmatprep.subr.mxu0 0.0
    %2505 = vmatpush2.msra.mxu0 0.0
    %2506 = vmatprep.subr.mxu0 0.0
    %2507 = vmatpush2.msra.mxu0 0.0
    %2508 = vmatprep.subr.mxu0 0.0
    %2509 = vmatpush2.msra.mxu0 0.0
    %2510 = vmatprep.subr.mxu0 0.0
    %2511 = vmatpush2.msra.mxu0 0.0
    %2512 = vmatprep.subr.mxu0 0.0
    %2513 = vmatpush2.msra.mxu0 0.0
    %2514 = vmatprep.subr.mxu0 0.0
    %2515 = vmatpush2.msra.mxu0 0.0
    %2516 = vmatprep.subr.mxu0 0.0
    %2517 = vmatpush2.msra.mxu0 0.0
    %2518 = vmatprep.subr.mxu0 0.0
    %2519 = vmatpush2.msra.mxu0 0.0
    %2520 = vmatprep.subr.mxu0 0.0
    %2521 = vmatpush2.msra.mxu0 0.0
    %2522 = vmatprep.subr.mxu0 0.0
    %2523 = vmatpush2.msra.mxu0 0.0
    %2524 = vmatprep.subr.mxu0 0.0
    %2525 = vmatpush2.msra.mxu0 0.0
    %2526 = vmatprep.subr.mxu0 0.0
    %2527 = vmatpush2.msra.mxu0 0.0
    %2528 = vmatprep.subr.mxu0 0.0
    %2529 = vmatpush2.msra.mxu0 0.0
    %2530 = vmatprep.subr.mxu0 0.0
    %2531 = vmatpush2.msra.mxu0 0.0
    %2532 = vmatprep.subr.mxu0 0.0
    %2533 = vmatpush2.msra.mxu0 0.0
    %2534 = vmatprep.mubr.f32.mxu0 0.0
    %2535 = vmatmul.mubr.f32.gmra.mxu0 %v1404
    %v2536 = vpop.f32.mrf.mxu0
    %v2537 = vadd.f32 0.0, %v2536
    %v2538 = vpop.f32.mrf.mxu0
    %v2539 = vadd.f32 0.0, %v2538
    %2540 = vdwg.mxu0
    %2541 = vmatprep.subr.mxu0 0.0
    %2542 = vmatpush1.msra.mxu0 0.0
    %2543 = vmatprep.subr.mxu0 0.0
    %2544 = vmatpush1.msra.mxu0 0.0
    %2545 = vmatprep.subr.mxu0 0.0
    %2546 = vmatpush1.msra.mxu0 0.0
    %2547 = vmatprep.subr.mxu0 0.0
    %2548 = vmatpush1.msra.mxu0 0.0
    %2549 = vmatprep.subr.mxu0 0.0
    %2550 = vmatpush1.msra.mxu0 0.0
    %2551 = vmatprep.subr.mxu0 0.0
    %2552 = vmatpush1.msra.mxu0 0.0
    %2553 = vmatprep.subr.mxu0 0.0
    %2554 = vmatpush1.msra.mxu0 0.0
    %2555 = vmatprep.subr.mxu0 0.0
    %2556 = vmatpush1.msra.mxu0 0.0
    %2557 = vmatprep.subr.mxu0 0.0
    %2558 = vmatpush1.msra.mxu0 0.0
    %2559 = vmatprep.subr.mxu0 0.0
    %2560 = vmatpush1.msra.mxu0 0.0
    %2561 = vmatprep.subr.mxu0 0.0
    %2562 = vmatpush1.msra.mxu0 0.0
    %2563 = vmatprep.subr.mxu0 0.0
    %2564 = vmatpush1.msra.mxu0 0.0
    %2565 = vmatprep.subr.mxu0 %v2413
    %2566 = vmatpush1.msra.mxu0 %v2412
    %2567 = vmatprep.subr.mxu0 %v2411
    %2568 = vmatpush1.msra.mxu0 %v2410
    %2569 = vmatprep.subr.mxu0 %v2409
    %2570 = vmatpush1.msra.mxu0 %v2408
    %2571 = vmatprep.subr.mxu0 %v2407
    %2572 = vmatpush1.msra.mxu0 %v2406
    %2573 = vmatprep.subr.mxu0 0.0
    %2574 = vmatpush2.msra.mxu0 0.0
    %2575 = vmatprep.subr.mxu0 0.0
    %2576 = vmatpush2.msra.mxu0 0.0
    %2577 = vmatprep.subr.mxu0 0.0
    %2578 = vmatpush2.msra.mxu0 0.0
    %2579 = vmatprep.subr.mxu0 0.0
    %2580 = vmatpush2.msra.mxu0 0.0
    %2581 = vmatprep.subr.mxu0 0.0
    %2582 = vmatpush2.msra.mxu0 0.0
    %2583 = vmatprep.subr.mxu0 0.0
    %2584 = vmatpush2.msra.mxu0 0.0
    %2585 = vmatprep.subr.mxu0 0.0
    %2586 = vmatpush2.msra.mxu0 0.0
    %2587 = vmatprep.subr.mxu0 0.0
    %2588 = vmatpush2.msra.mxu0 0.0
    %2589 = vmatprep.subr.mxu0 0.0
    %2590 = vmatpush2.msra.mxu0 0.0
    %2591 = vmatprep.subr.mxu0 0.0
    %2592 = vmatpush2.msra.mxu0 0.0
    %2593 = vmatprep.subr.mxu0 0.0
    %2594 = vmatpush2.msra.mxu0 0.0
    %2595 = vmatprep.subr.mxu0 0.0
    %2596 = vmatpush2.msra.mxu0 0.0
    %2597 = vmatprep.subr.mxu0 0.0
    %2598 = vmatpush2.msra.mxu0 0.0
    %2599 = vmatprep.subr.mxu0 0.0
    %2600 = vmatpush2.msra.mxu0 0.0
    %2601 = vmatprep.subr.mxu0 0.0
    %2602 = vmatpush2.msra.mxu0 0.0
    %2603 = vmatprep.subr.mxu0 0.0
    %2604 = vmatpush2.msra.mxu0 0.0
    %2605 = vmatprep.mubr.f32.mxu0 0.0
    %2606 = vmatmul.mubr.f32.gmra.mxu0 %v1478
    %v2607 = vpop.f32.mrf.mxu0
    %v2608 = vadd.f32 %v2537, %v2607
    %v2609 = vpop.f32.mrf.mxu0
    %v2610 = vadd.f32 %v2539, %v2609
    %2611 = vdwg.mxu0
    %2612 = vrot.lane.b32.xlu0 %v2406, 96
    %v2613 = vpop.permute.xlu0 %2612
    %2614 = vrot.lane.b32.xlu0 %v2407, 96
    %v2615 = vpop.permute.xlu0 %2614
    %2616 = vrot.lane.b32.xlu0 %v2414, 96
    %v2617 = vpop.permute.xlu0 %2616
    %2618 = vrot.lane.b32.xlu0 %v2408, 96
    %v2619 = vpop.permute.xlu0 %2618
    %2620 = vrot.lane.b32.xlu0 %v2409, 96
    %v2621 = vpop.permute.xlu0 %2620
    %2622 = vrot.lane.b32.xlu0 %v2415, 96
    %v2623 = vpop.permute.xlu0 %2622
    %2624 = vrot.lane.b32.xlu0 %v2410, 96
    %v2625 = vpop.permute.xlu0 %2624
    %2626 = vrot.lane.b32.xlu0 %v2411, 96
    %v2627 = vpop.permute.xlu0 %2626
    %2628 = vrot.lane.b32.xlu0 %v2416, 96
    %v2629 = vpop.permute.xlu0 %2628
    %2630 = vrot.lane.b32.xlu0 %v2412, 96
    %v2631 = vpop.permute.xlu0 %2630
    %2632 = vrot.lane.b32.xlu0 %v2413, 96
    %v2633 = vpop.permute.xlu0 %2632
    %2634 = vrot.lane.b32.xlu0 %v2417, 96
    %v2635 = vpop.permute.xlu0 %2634
    %v2636 = vsel %vm1575, %v2613, %v2615
    %v2637 = vsel %vm1575, %v2615, %v2617
    %v2638 = vsel %vm1575, %v2619, %v2621
    %v2639 = vsel %vm1575, %v2621, %v2623
    %v2640 = vsel %vm1575, %v2625, %v2627
    %v2641 = vsel %vm1575, %v2627, %v2629
    %v2642 = vsel %vm1575, %v2631, %v2633
    %v2643 = vsel %vm1575, %v2633, %v2635
    %2652 = vmatprep.subr.mxu0 0.0
    %2653 = vmatpush1.msra.mxu0 0.0
    %2654 = vmatprep.subr.mxu0 0.0
    %2655 = vmatpush1.msra.mxu0 0.0
    %2656 = vmatprep.subr.mxu0 0.0
    %2657 = vmatpush1.msra.mxu0 0.0
    %2658 = vmatprep.subr.mxu0 0.0
    %2659 = vmatpush1.msra.mxu0 0.0
    %2660 = vmatprep.subr.mxu0 0.0
    %2661 = vmatpush1.msra.mxu0 0.0
    %2662 = vmatprep.subr.mxu0 0.0
    %2663 = vmatpush1.msra.mxu0 0.0
    %2664 = vmatprep.subr.mxu0 0.0
    %2665 = vmatpush1.msra.mxu0 0.0
    %2666 = vmatprep.subr.mxu0 0.0
    %2667 = vmatpush1.msra.mxu0 0.0
    %2668 = vmatprep.subr.mxu0 0.0
    %2669 = vmatpush1.msra.mxu0 0.0
    %2670 = vmatprep.subr.mxu0 0.0
    %2671 = vmatpush1.msra.mxu0 0.0
    %2672 = vmatprep.subr.mxu0 0.0
    %2673 = vmatpush1.msra.mxu0 0.0
    %2674 = vmatprep.subr.mxu0 0.0
    %2675 = vmatpush1.msra.mxu0 0.0
    %2676 = vmatprep.subr.mxu0 %v2643
    %2677 = vmatpush1.msra.mxu0 %v2642
    %2678 = vmatprep.subr.mxu0 %v2641
    %2679 = vmatpush1.msra.mxu0 %v2640
    %2680 = vmatprep.subr.mxu0 %v2639
    %2681 = vmatpush1.msra.mxu0 %v2638
    %2682 = vmatprep.subr.mxu0 %v2637
    %2683 = vmatpush1.msra.mxu0 %v2636
    %2684 = vmatprep.subr.mxu0 0.0
    %2685 = vmatpush2.msra.mxu0 0.0
    %2686 = vmatprep.subr.mxu0 0.0
    %2687 = vmatpush2.msra.mxu0 0.0
    %2688 = vmatprep.subr.mxu0 0.0
    %2689 = vmatpush2.msra.mxu0 0.0
    %2690 = vmatprep.subr.mxu0 0.0
    %2691 = vmatpush2.msra.mxu0 0.0
    %2692 = vmatprep.subr.mxu0 0.0
    %2693 = vmatpush2.msra.mxu0 0.0
    %2694 = vmatprep.subr.mxu0 0.0
    %2695 = vmatpush2.msra.mxu0 0.0
    %2696 = vmatprep.subr.mxu0 0.0
    %2697 = vmatpush2.msra.mxu0 0.0
    %2698 = vmatprep.subr.mxu0 0.0
    %2699 = vmatpush2.msra.mxu0 0.0
    %2700 = vmatprep.subr.mxu0 0.0
    %2701 = vmatpush2.msra.mxu0 0.0
    %2702 = vmatprep.subr.mxu0 0.0
    %2703 = vmatpush2.msra.mxu0 0.0
    %2704 = vmatprep.subr.mxu0 0.0
    %2705 = vmatpush2.msra.mxu0 0.0
    %2706 = vmatprep.subr.mxu0 0.0
    %2707 = vmatpush2.msra.mxu0 0.0
    %2708 = vmatprep.subr.mxu0 0.0
    %2709 = vmatpush2.msra.mxu0 0.0
    %2710 = vmatprep.subr.mxu0 0.0
    %2711 = vmatpush2.msra.mxu0 0.0
    %2712 = vmatprep.subr.mxu0 0.0
    %2713 = vmatpush2.msra.mxu0 0.0
    %2714 = vmatprep.subr.mxu0 0.0
    %2715 = vmatpush2.msra.mxu0 0.0
    %2716 = vmatprep.mubr.f32.mxu0 0.0
    %2717 = vmatmul.mubr.f32.gmra.mxu0 %v1593
    %v2718 = vpop.f32.mrf.mxu0
    %v2719 = vadd.f32 0.0, %v2718
    %v2720 = vpop.f32.mrf.mxu0
    %v2721 = vadd.f32 0.0, %v2720
    %2722 = vdwg.mxu0
    %v2723 = vadd.f32 %v2608, %v2719
    %v2724 = vadd.f32 %v2610, %v2721
    %v2725 = vld [vmem:[%s6] ss:$4 sm:$0x3]
    %v2727 = vlaneseq
    %v2728 = vshrl.u32 %v2727, 7
    %v2729 = vsub.s32 0, %v2728
    %v2730 = vrot.slane %v2725, %v2729
    %v2731 = vlaneseq
    %v2732 = vshrl.u32 %v2731, 7
    %v2733 = vsub.s32 1, %v2732
    %v2734 = vrot.slane %v2725, %v2733
    %v2737 = vmul.f32 %v2723, %v2730
    %v2738 = vmul.f32 %v2724, %v2734
    %v2739 = vadd.f32 %v2737, 0.0
    %v2740 = vadd.f32 %v2738, 0.0
    %2741 = vrot.lane.b32.xlu0 %v2406, 111
    %v2742 = vpop.permute.xlu0 %2741
    %2743 = vrot.lane.b32.xlu0 %v2407, 111
    %v2744 = vpop.permute.xlu0 %2743
    %2745 = vrot.lane.b32.xlu0 %v2414, 111
    %v2746 = vpop.permute.xlu0 %2745
    %2747 = vrot.lane.b32.xlu0 %v2408, 111
    %v2748 = vpop.permute.xlu0 %2747
    %2749 = vrot.lane.b32.xlu0 %v2409, 111
    %v2750 = vpop.permute.xlu0 %2749
    %2751 = vrot.lane.b32.xlu0 %v2415, 111
    %v2752 = vpop.permute.xlu0 %2751
    %2753 = vrot.lane.b32.xlu0 %v2410, 111
    %v2754 = vpop.permute.xlu0 %2753
    %2755 = vrot.lane.b32.xlu0 %v2411, 111
    %v2756 = vpop.permute.xlu0 %2755
    %2757 = vrot.lane.b32.xlu0 %v2416, 111
    %v2758 = vpop.permute.xlu0 %2757
    %2759 = vrot.lane.b32.xlu0 %v2412, 111
    %v2760 = vpop.permute.xlu0 %2759
    %2761 = vrot.lane.b32.xlu0 %v2413, 111
    %v2762 = vpop.permute.xlu0 %2761
    %2763 = vrot.lane.b32.xlu0 %v2417, 111
    %v2764 = vpop.permute.xlu0 %2763
    %v2765 = vsel %vm1708, %v2742, %v2744
    %v2766 = vsel %vm1708, %v2744, %v2746
    %v2767 = vsel %vm1708, %v2748, %v2750
    %v2768 = vsel %vm1708, %v2750, %v2752
    %v2769 = vsel %vm1708, %v2754, %v2756
    %v2770 = vsel %vm1708, %v2756, %v2758
    %v2771 = vsel %vm1708, %v2760, %v2762
    %v2772 = vsel %vm1708, %v2762, %v2764
    %2781 = vmatprep.subr.mxu0 0.0
    %2782 = vmatpush1.msra.mxu0 0.0
    %2783 = vmatprep.subr.mxu0 0.0
    %2784 = vmatpush1.msra.mxu0 0.0
    %2785 = vmatprep.subr.mxu0 0.0
    %2786 = vmatpush1.msra.mxu0 0.0
    %2787 = vmatprep.subr.mxu0 0.0
    %2788 = vmatpush1.msra.mxu0 0.0
    %2789 = vmatprep.subr.mxu0 0.0
    %2790 = vmatpush1.msra.mxu0 0.0
    %2791 = vmatprep.subr.mxu0 0.0
    %2792 = vmatpush1.msra.mxu0 0.0
    %2793 = vmatprep.subr.mxu0 0.0
    %2794 = vmatpush1.msra.mxu0 0.0
    %2795 = vmatprep.subr.mxu0 0.0
    %2796 = vmatpush1.msra.mxu0 0.0
    %2797 = vmatprep.subr.mxu0 0.0
    %2798 = vmatpush1.msra.mxu0 0.0
    %2799 = vmatprep.subr.mxu0 0.0
    %2800 = vmatpush1.msra.mxu0 0.0
    %2801 = vmatprep.subr.mxu0 0.0
    %2802 = vmatpush1.msra.mxu0 0.0
    %2803 = vmatprep.subr.mxu0 0.0
    %2804 = vmatpush1.msra.mxu0 0.0
    %2805 = vmatprep.subr.mxu0 %v2772
    %2806 = vmatpush1.msra.mxu0 %v2771
    %2807 = vmatprep.subr.mxu0 %v2770
    %2808 = vmatpush1.msra.mxu0 %v2769
    %2809 = vmatprep.subr.mxu0 %v2768
    %2810 = vmatpush1.msra.mxu0 %v2767
    %2811 = vmatprep.subr.mxu0 %v2766
    %2812 = vmatpush1.msra.mxu0 %v2765
    %2813 = vmatprep.subr.mxu0 0.0
    %2814 = vmatpush2.msra.mxu0 0.0
    %2815 = vmatprep.subr.mxu0 0.0
    %2816 = vmatpush2.msra.mxu0 0.0
    %2817 = vmatprep.subr.mxu0 0.0
    %2818 = vmatpush2.msra.mxu0 0.0
    %2819 = vmatprep.subr.mxu0 0.0
    %2820 = vmatpush2.msra.mxu0 0.0
    %2821 = vmatprep.subr.mxu0 0.0
    %2822 = vmatpush2.msra.mxu0 0.0
    %2823 = vmatprep.subr.mxu0 0.0
    %2824 = vmatpush2.msra.mxu0 0.0
    %2825 = vmatprep.subr.mxu0 0.0
    %2826 = vmatpush2.msra.mxu0 0.0
    %2827 = vmatprep.subr.mxu0 0.0
    %2828 = vmatpush2.msra.mxu0 0.0
    %2829 = vmatprep.subr.mxu0 0.0
    %2830 = vmatpush2.msra.mxu0 0.0
    %2831 = vmatprep.subr.mxu0 0.0
    %2832 = vmatpush2.msra.mxu0 0.0
    %2833 = vmatprep.subr.mxu0 0.0
    %2834 = vmatpush2.msra.mxu0 0.0
    %2835 = vmatprep.subr.mxu0 0.0
    %2836 = vmatpush2.msra.mxu0 0.0
    %2837 = vmatprep.subr.mxu0 0.0
    %2838 = vmatpush2.msra.mxu0 0.0
    %2839 = vmatprep.subr.mxu0 0.0
    %2840 = vmatpush2.msra.mxu0 0.0
    %2841 = vmatprep.subr.mxu0 0.0
    %2842 = vmatpush2.msra.mxu0 0.0
    %2843 = vmatprep.subr.mxu0 0.0
    %2844 = vmatpush2.msra.mxu0 0.0
    %2845 = vmatprep.mubr.f32.mxu0 0.0
    %2846 = vmatmul.mubr.f32.gmra.mxu0 %v1726
    %v2847 = vpop.f32.mrf.mxu0
    %v2848 = vadd.f32 0.0, %v2847
    %v2849 = vpop.f32.mrf.mxu0
    %v2850 = vadd.f32 0.0, %v2849
    %2851 = vdwg.mxu0
    %2852 = vrot.lane.b32.xlu0 %v2406, 127
    %v2853 = vpop.permute.xlu0 %2852
    %2854 = vrot.lane.b32.xlu0 %v2407, 127
    %v2855 = vpop.permute.xlu0 %2854
    %2856 = vrot.lane.b32.xlu0 %v2414, 127
    %v2857 = vpop.permute.xlu0 %2856
    %2858 = vrot.lane.b32.xlu0 %v2408, 127
    %v2859 = vpop.permute.xlu0 %2858
    %2860 = vrot.lane.b32.xlu0 %v2409, 127
    %v2861 = vpop.permute.xlu0 %2860
    %2862 = vrot.lane.b32.xlu0 %v2415, 127
    %v2863 = vpop.permute.xlu0 %2862
    %2864 = vrot.lane.b32.xlu0 %v2410, 127
    %v2865 = vpop.permute.xlu0 %2864
    %2866 = vrot.lane.b32.xlu0 %v2411, 127
    %v2867 = vpop.permute.xlu0 %2866
    %2868 = vrot.lane.b32.xlu0 %v2416, 127
    %v2869 = vpop.permute.xlu0 %2868
    %2870 = vrot.lane.b32.xlu0 %v2412, 127
    %v2871 = vpop.permute.xlu0 %2870
    %2872 = vrot.lane.b32.xlu0 %v2413, 127
    %v2873 = vpop.permute.xlu0 %2872
    %2874 = vrot.lane.b32.xlu0 %v2417, 127
    %v2875 = vpop.permute.xlu0 %2874
    %v2876 = vsel %vm1823, %v2853, %v2855
    %v2877 = vsel %vm1823, %v2855, %v2857
    %v2878 = vsel %vm1823, %v2859, %v2861
    %v2879 = vsel %vm1823, %v2861, %v2863
    %v2880 = vsel %vm1823, %v2865, %v2867
    %v2881 = vsel %vm1823, %v2867, %v2869
    %v2882 = vsel %vm1823, %v2871, %v2873
    %v2883 = vsel %vm1823, %v2873, %v2875
    %2892 = vmatprep.subr.mxu0 0.0
    %2893 = vmatpush1.msra.mxu0 0.0
    %2894 = vmatprep.subr.mxu0 0.0
    %2895 = vmatpush1.msra.mxu0 0.0
    %2896 = vmatprep.subr.mxu0 0.0
    %2897 = vmatpush1.msra.mxu0 0.0
    %2898 = vmatprep.subr.mxu0 0.0
    %2899 = vmatpush1.msra.mxu0 0.0
    %2900 = vmatprep.subr.mxu0 0.0
    %2901 = vmatpush1.msra.mxu0 0.0
    %2902 = vmatprep.subr.mxu0 0.0
    %2903 = vmatpush1.msra.mxu0 0.0
    %2904 = vmatprep.subr.mxu0 0.0
    %2905 = vmatpush1.msra.mxu0 0.0
    %2906 = vmatprep.subr.mxu0 0.0
    %2907 = vmatpush1.msra.mxu0 0.0
    %2908 = vmatprep.subr.mxu0 0.0
    %2909 = vmatpush1.msra.mxu0 0.0
    %2910 = vmatprep.subr.mxu0 0.0
    %2911 = vmatpush1.msra.mxu0 0.0
    %2912 = vmatprep.subr.mxu0 0.0
    %2913 = vmatpush1.msra.mxu0 0.0
    %2914 = vmatprep.subr.mxu0 0.0
    %2915 = vmatpush1.msra.mxu0 0.0
    %2916 = vmatprep.subr.mxu0 %v2883
    %2917 = vmatpush1.msra.mxu0 %v2882
    %2918 = vmatprep.subr.mxu0 %v2881
    %2919 = vmatpush1.msra.mxu0 %v2880
    %2920 = vmatprep.subr.mxu0 %v2879
    %2921 = vmatpush1.msra.mxu0 %v2878
    %2922 = vmatprep.subr.mxu0 %v2877
    %2923 = vmatpush1.msra.mxu0 %v2876
    %2924 = vmatprep.subr.mxu0 0.0
    %2925 = vmatpush2.msra.mxu0 0.0
    %2926 = vmatprep.subr.mxu0 0.0
    %2927 = vmatpush2.msra.mxu0 0.0
    %2928 = vmatprep.subr.mxu0 0.0
    %2929 = vmatpush2.msra.mxu0 0.0
    %2930 = vmatprep.subr.mxu0 0.0
    %2931 = vmatpush2.msra.mxu0 0.0
    %2932 = vmatprep.subr.mxu0 0.0
    %2933 = vmatpush2.msra.mxu0 0.0
    %2934 = vmatprep.subr.mxu0 0.0
    %2935 = vmatpush2.msra.mxu0 0.0
    %2936 = vmatprep.subr.mxu0 0.0
    %2937 = vmatpush2.msra.mxu0 0.0
    %2938 = vmatprep.subr.mxu0 0.0
    %2939 = vmatpush2.msra.mxu0 0.0
    %2940 = vmatprep.subr.mxu0 0.0
    %2941 = vmatpush2.msra.mxu0 0.0
    %2942 = vmatprep.subr.mxu0 0.0
    %2943 = vmatpush2.msra.mxu0 0.0
    %2944 = vmatprep.subr.mxu0 0.0
    %2945 = vmatpush2.msra.mxu0 0.0
    %2946 = vmatprep.subr.mxu0 0.0
    %2947 = vmatpush2.msra.mxu0 0.0
    %2948 = vmatprep.subr.mxu0 0.0
    %2949 = vmatpush2.msra.mxu0 0.0
    %2950 = vmatprep.subr.mxu0 0.0
    %2951 = vmatpush2.msra.mxu0 0.0
    %2952 = vmatprep.subr.mxu0 0.0
    %2953 = vmatpush2.msra.mxu0 0.0
    %2954 = vmatprep.subr.mxu0 0.0
    %2955 = vmatpush2.msra.mxu0 0.0
    %2956 = vmatprep.mubr.f32.mxu0 0.0
    %2957 = vmatmul.mubr.f32.gmra.mxu0 %v1841
    %v2958 = vpop.f32.mrf.mxu0
    %v2959 = vadd.f32 %v2848, %v2958
    %v2960 = vpop.f32.mrf.mxu0
    %v2961 = vadd.f32 %v2850, %v2960
    %2962 = vdwg.mxu0
    %2963 = vrot.lane.b32.xlu0 %v2406, 95
    %v2964 = vpop.permute.xlu0 %2963
    %2965 = vrot.lane.b32.xlu0 %v2407, 95
    %v2966 = vpop.permute.xlu0 %2965
    %2967 = vrot.lane.b32.xlu0 %v2414, 95
    %v2968 = vpop.permute.xlu0 %2967
    %2969 = vrot.lane.b32.xlu0 %v2408, 95
    %v2970 = vpop.permute.xlu0 %2969
    %2971 = vrot.lane.b32.xlu0 %v2409, 95
    %v2972 = vpop.permute.xlu0 %2971
    %2973 = vrot.lane.b32.xlu0 %v2415, 95
    %v2974 = vpop.permute.xlu0 %2973
    %2975 = vrot.lane.b32.xlu0 %v2410, 95
    %v2976 = vpop.permute.xlu0 %2975
    %2977 = vrot.lane.b32.xlu0 %v2411, 95
    %v2978 = vpop.permute.xlu0 %2977
    %2979 = vrot.lane.b32.xlu0 %v2416, 95
    %v2980 = vpop.permute.xlu0 %2979
    %2981 = vrot.lane.b32.xlu0 %v2412, 95
    %v2982 = vpop.permute.xlu0 %2981
    %2983 = vrot.lane.b32.xlu0 %v2413, 95
    %v2984 = vpop.permute.xlu0 %2983
    %2985 = vrot.lane.b32.xlu0 %v2417, 95
    %v2986 = vpop.permute.xlu0 %2985
    %v2987 = vsel %vm1938, %v2964, %v2966
    %v2988 = vsel %vm1938, %v2966, %v2968
    %v2989 = vsel %vm1938, %v2970, %v2972
    %v2990 = vsel %vm1938, %v2972, %v2974
    %v2991 = vsel %vm1938, %v2976, %v2978
    %v2992 = vsel %vm1938, %v2978, %v2980
    %v2993 = vsel %vm1938, %v2982, %v2984
    %v2994 = vsel %vm1938, %v2984, %v2986
    %3003 = vmatprep.subr.mxu0 0.0
    %3004 = vmatpush1.msra.mxu0 0.0
    %3005 = vmatprep.subr.mxu0 0.0
    %3006 = vmatpush1.msra.mxu0 0.0
    %3007 = vmatprep.subr.mxu0 0.0
    %3008 = vmatpush1.msra.mxu0 0.0
    %3009 = vmatprep.subr.mxu0 0.0
    %3010 = vmatpush1.msra.mxu0 0.0
    %3011 = vmatprep.subr.mxu0 0.0
    %3012 = vmatpush1.msra.mxu0 0.0
    %3013 = vmatprep.subr.mxu0 0.0
    %3014 = vmatpush1.msra.mxu0 0.0
    %3015 = vmatprep.subr.mxu0 0.0
    %3016 = vmatpush1.msra.mxu0 0.0
    %3017 = vmatprep.subr.mxu0 0.0
    %3018 = vmatpush1.msra.mxu0 0.0
    %3019 = vmatprep.subr.mxu0 0.0
    %3020 = vmatpush1.msra.mxu0 0.0
    %3021 = vmatprep.subr.mxu0 0.0
    %3022 = vmatpush1.msra.mxu0 0.0
    %3023 = vmatprep.subr.mxu0 0.0
    %3024 = vmatpush1.msra.mxu0 0.0
    %3025 = vmatprep.subr.mxu0 0.0
    %3026 = vmatpush1.msra.mxu0 0.0
    %3027 = vmatprep.subr.mxu0 %v2994
    %3028 = vmatpush1.msra.mxu0 %v2993
    %3029 = vmatprep.subr.mxu0 %v2992
    %3030 = vmatpush1.msra.mxu0 %v2991
    %3031 = vmatprep.subr.mxu0 %v2990
    %3032 = vmatpush1.msra.mxu0 %v2989
    %3033 = vmatprep.subr.mxu0 %v2988
    %3034 = vmatpush1.msra.mxu0 %v2987
    %3035 = vmatprep.subr.mxu0 0.0
    %3036 = vmatpush2.msra.mxu0 0.0
    %3037 = vmatprep.subr.mxu0 0.0
    %3038 = vmatpush2.msra.mxu0 0.0
    %3039 = vmatprep.subr.mxu0 0.0
    %3040 = vmatpush2.msra.mxu0 0.0
    %3041 = vmatprep.subr.mxu0 0.0
    %3042 = vmatpush2.msra.mxu0 0.0
    %3043 = vmatprep.subr.mxu0 0.0
    %3044 = vmatpush2.msra.mxu0 0.0
    %3045 = vmatprep.subr.mxu0 0.0
    %3046 = vmatpush2.msra.mxu0 0.0
    %3047 = vmatprep.subr.mxu0 0.0
    %3048 = vmatpush2.msra.mxu0 0.0
    %3049 = vmatprep.subr.mxu0 0.0
    %3050 = vmatpush2.msra.mxu0 0.0
    %3051 = vmatprep.subr.mxu0 0.0
    %3052 = vmatpush2.msra.mxu0 0.0
    %3053 = vmatprep.subr.mxu0 0.0
    %3054 = vmatpush2.msra.mxu0 0.0
    %3055 = vmatprep.subr.mxu0 0.0
    %3056 = vmatpush2.msra.mxu0 0.0
    %3057 = vmatprep.subr.mxu0 0.0
    %3058 = vmatpush2.msra.mxu0 0.0
    %3059 = vmatprep.subr.mxu0 0.0
    %3060 = vmatpush2.msra.mxu0 0.0
    %3061 = vmatprep.subr.mxu0 0.0
    %3062 = vmatpush2.msra.mxu0 0.0
    %3063 = vmatprep.subr.mxu0 0.0
    %3064 = vmatpush2.msra.mxu0 0.0
    %3065 = vmatprep.subr.mxu0 0.0
    %3066 = vmatpush2.msra.mxu0 0.0
    %3067 = vmatprep.mubr.f32.mxu0 0.0
    %3068 = vmatmul.mubr.f32.gmra.mxu0 %v1956
    %v3069 = vpop.f32.mrf.mxu0
    %v3070 = vadd.f32 0.0, %v3069
    %v3071 = vpop.f32.mrf.mxu0
    %v3072 = vadd.f32 0.0, %v3071
    %3073 = vdwg.mxu0
    %v3074 = vadd.f32 %v2959, %v3070
    %v3075 = vadd.f32 %v2961, %v3072
    %v3076 = vadd.f32 %v2739, %v3074
    %v3077 = vadd.f32 %v2740, %v3075
    %3078 = vrot.lane.b32.xlu0 %v2406, 110
    %v3079 = vpop.permute.xlu0 %3078
    %3080 = vrot.lane.b32.xlu0 %v2407, 110
    %v3081 = vpop.permute.xlu0 %3080
    %3082 = vrot.lane.b32.xlu0 %v2414, 110
    %v3083 = vpop.permute.xlu0 %3082
    %3084 = vrot.lane.b32.xlu0 %v2408, 110
    %v3085 = vpop.permute.xlu0 %3084
    %3086 = vrot.lane.b32.xlu0 %v2409, 110
    %v3087 = vpop.permute.xlu0 %3086
    %3088 = vrot.lane.b32.xlu0 %v2415, 110
    %v3089 = vpop.permute.xlu0 %3088
    %3090 = vrot.lane.b32.xlu0 %v2410, 110
    %v3091 = vpop.permute.xlu0 %3090
    %3092 = vrot.lane.b32.xlu0 %v2411, 110
    %v3093 = vpop.permute.xlu0 %3092
    %3094 = vrot.lane.b32.xlu0 %v2416, 110
    %v3095 = vpop.permute.xlu0 %3094
    %3096 = vrot.lane.b32.xlu0 %v2412, 110
    %v3097 = vpop.permute.xlu0 %3096
    %3098 = vrot.lane.b32.xlu0 %v2413, 110
    %v3099 = vpop.permute.xlu0 %3098
    %3100 = vrot.lane.b32.xlu0 %v2417, 110
    %v3101 = vpop.permute.xlu0 %3100
    %v3102 = vsel %vm2057, %v3079, %v3081
    %v3103 = vsel %vm2057, %v3081, %v3083
    %v3104 = vsel %vm2057, %v3085, %v3087
    %v3105 = vsel %vm2057, %v3087, %v3089
    %v3106 = vsel %vm2057, %v3091, %v3093
    %v3107 = vsel %vm2057, %v3093, %v3095
    %v3108 = vsel %vm2057, %v3097, %v3099
    %v3109 = vsel %vm2057, %v3099, %v3101
    %3118 = vmatprep.subr.mxu0 0.0
    %3119 = vmatpush1.msra.mxu0 0.0
    %3120 = vmatprep.subr.mxu0 0.0
    %3121 = vmatpush1.msra.mxu0 0.0
    %3122 = vmatprep.subr.mxu0 0.0
    %3123 = vmatpush1.msra.mxu0 0.0
    %3124 = vmatprep.subr.mxu0 0.0
    %3125 = vmatpush1.msra.mxu0 0.0
    %3126 = vmatprep.subr.mxu0 0.0
    %3127 = vmatpush1.msra.mxu0 0.0
    %3128 = vmatprep.subr.mxu0 0.0
    %3129 = vmatpush1.msra.mxu0 0.0
    %3130 = vmatprep.subr.mxu0 0.0
    %3131 = vmatpush1.msra.mxu0 0.0
    %3132 = vmatprep.subr.mxu0 0.0
    %3133 = vmatpush1.msra.mxu0 0.0
    %3134 = vmatprep.subr.mxu0 0.0
    %3135 = vmatpush1.msra.mxu0 0.0
    %3136 = vmatprep.subr.mxu0 0.0
    %3137 = vmatpush1.msra.mxu0 0.0
    %3138 = vmatprep.subr.mxu0 0.0
    %3139 = vmatpush1.msra.mxu0 0.0
    %3140 = vmatprep.subr.mxu0 0.0
    %3141 = vmatpush1.msra.mxu0 0.0
    %3142 = vmatprep.subr.mxu0 %v3109
    %3143 = vmatpush1.msra.mxu0 %v3108
    %3144 = vmatprep.subr.mxu0 %v3107
    %3145 = vmatpush1.msra.mxu0 %v3106
    %3146 = vmatprep.subr.mxu0 %v3105
    %3147 = vmatpush1.msra.mxu0 %v3104
    %3148 = vmatprep.subr.mxu0 %v3103
    %3149 = vmatpush1.msra.mxu0 %v3102
    %3150 = vmatprep.subr.mxu0 0.0
    %3151 = vmatpush2.msra.mxu0 0.0
    %3152 = vmatprep.subr.mxu0 0.0
    %3153 = vmatpush2.msra.mxu0 0.0
    %3154 = vmatprep.subr.mxu0 0.0
    %3155 = vmatpush2.msra.mxu0 0.0
    %3156 = vmatprep.subr.mxu0 0.0
    %3157 = vmatpush2.msra.mxu0 0.0
    %3158 = vmatprep.subr.mxu0 0.0
    %3159 = vmatpush2.msra.mxu0 0.0
    %3160 = vmatprep.subr.mxu0 0.0
    %3161 = vmatpush2.msra.mxu0 0.0
    %3162 = vmatprep.subr.mxu0 0.0
    %3163 = vmatpush2.msra.mxu0 0.0
    %3164 = vmatprep.subr.mxu0 0.0
    %3165 = vmatpush2.msra.mxu0 0.0
    %3166 = vmatprep.subr.mxu0 0.0
    %3167 = vmatpush2.msra.mxu0 0.0
    %3168 = vmatprep.subr.mxu0 0.0
    %3169 = vmatpush2.msra.mxu0 0.0
    %3170 = vmatprep.subr.mxu0 0.0
    %3171 = vmatpush2.msra.mxu0 0.0
    %3172 = vmatprep.subr.mxu0 0.0
    %3173 = vmatpush2.msra.mxu0 0.0
    %3174 = vmatprep.subr.mxu0 0.0
    %3175 = vmatpush2.msra.mxu0 0.0
    %3176 = vmatprep.subr.mxu0 0.0
    %3177 = vmatpush2.msra.mxu0 0.0
    %3178 = vmatprep.subr.mxu0 0.0
    %3179 = vmatpush2.msra.mxu0 0.0
    %3180 = vmatprep.subr.mxu0 0.0
    %3181 = vmatpush2.msra.mxu0 0.0
    %3182 = vmatprep.mubr.f32.mxu0 0.0
    %3183 = vmatmul.mubr.f32.gmra.mxu0 %v2075
    %v3184 = vpop.f32.mrf.mxu0
    %v3185 = vadd.f32 0.0, %v3184
    %v3186 = vpop.f32.mrf.mxu0
    %v3187 = vadd.f32 0.0, %v3186
    %3188 = vdwg.mxu0
    %3189 = vrot.lane.b32.xlu0 %v2406, 126
    %v3190 = vpop.permute.xlu0 %3189
    %3191 = vrot.lane.b32.xlu0 %v2407, 126
    %v3192 = vpop.permute.xlu0 %3191
    %3193 = vrot.lane.b32.xlu0 %v2414, 126
    %v3194 = vpop.permute.xlu0 %3193
    %3195 = vrot.lane.b32.xlu0 %v2408, 126
    %v3196 = vpop.permute.xlu0 %3195
    %3197 = vrot.lane.b32.xlu0 %v2409, 126
    %v3198 = vpop.permute.xlu0 %3197
    %3199 = vrot.lane.b32.xlu0 %v2415, 126
    %v3200 = vpop.permute.xlu0 %3199
    %3201 = vrot.lane.b32.xlu0 %v2410, 126
    %v3202 = vpop.permute.xlu0 %3201
    %3203 = vrot.lane.b32.xlu0 %v2411, 126
    %v3204 = vpop.permute.xlu0 %3203
    %3205 = vrot.lane.b32.xlu0 %v2416, 126
    %v3206 = vpop.permute.xlu0 %3205
    %3207 = vrot.lane.b32.xlu0 %v2412, 126
    %v3208 = vpop.permute.xlu0 %3207
    %3209 = vrot.lane.b32.xlu0 %v2413, 126
    %v3210 = vpop.permute.xlu0 %3209
    %3211 = vrot.lane.b32.xlu0 %v2417, 126
    %v3212 = vpop.permute.xlu0 %3211
    %v3213 = vsel %vm2172, %v3190, %v3192
    %v3214 = vsel %vm2172, %v3192, %v3194
    %v3215 = vsel %vm2172, %v3196, %v3198
    %v3216 = vsel %vm2172, %v3198, %v3200
    %v3217 = vsel %vm2172, %v3202, %v3204
    %v3218 = vsel %vm2172, %v3204, %v3206
    %v3219 = vsel %vm2172, %v3208, %v3210
    %v3220 = vsel %vm2172, %v3210, %v3212
    %3229 = vmatprep.subr.mxu0 0.0
    %3230 = vmatpush1.msra.mxu0 0.0
    %3231 = vmatprep.subr.mxu0 0.0
    %3232 = vmatpush1.msra.mxu0 0.0
    %3233 = vmatprep.subr.mxu0 0.0
    %3234 = vmatpush1.msra.mxu0 0.0
    %3235 = vmatprep.subr.mxu0 0.0
    %3236 = vmatpush1.msra.mxu0 0.0
    %3237 = vmatprep.subr.mxu0 0.0
    %3238 = vmatpush1.msra.mxu0 0.0
    %3239 = vmatprep.subr.mxu0 0.0
    %3240 = vmatpush1.msra.mxu0 0.0
    %3241 = vmatprep.subr.mxu0 0.0
    %3242 = vmatpush1.msra.mxu0 0.0
    %3243 = vmatprep.subr.mxu0 0.0
    %3244 = vmatpush1.msra.mxu0 0.0
    %3245 = vmatprep.subr.mxu0 0.0
    %3246 = vmatpush1.msra.mxu0 0.0
    %3247 = vmatprep.subr.mxu0 0.0
    %3248 = vmatpush1.msra.mxu0 0.0
    %3249 = vmatprep.subr.mxu0 0.0
    %3250 = vmatpush1.msra.mxu0 0.0
    %3251 = vmatprep.subr.mxu0 0.0
    %3252 = vmatpush1.msra.mxu0 0.0
    %3253 = vmatprep.subr.mxu0 %v3220
    %3254 = vmatpush1.msra.mxu0 %v3219
    %3255 = vmatprep.subr.mxu0 %v3218
    %3256 = vmatpush1.msra.mxu0 %v3217
    %3257 = vmatprep.subr.mxu0 %v3216
    %3258 = vmatpush1.msra.mxu0 %v3215
    %3259 = vmatprep.subr.mxu0 %v3214
    %3260 = vmatpush1.msra.mxu0 %v3213
    %3261 = vmatprep.subr.mxu0 0.0
    %3262 = vmatpush2.msra.mxu0 0.0
    %3263 = vmatprep.subr.mxu0 0.0
    %3264 = vmatpush2.msra.mxu0 0.0
    %3265 = vmatprep.subr.mxu0 0.0
    %3266 = vmatpush2.msra.mxu0 0.0
    %3267 = vmatprep.subr.mxu0 0.0
    %3268 = vmatpush2.msra.mxu0 0.0
    %3269 = vmatprep.subr.mxu0 0.0
    %3270 = vmatpush2.msra.mxu0 0.0
    %3271 = vmatprep.subr.mxu0 0.0
    %3272 = vmatpush2.msra.mxu0 0.0
    %3273 = vmatprep.subr.mxu0 0.0
    %3274 = vmatpush2.msra.mxu0 0.0
    %3275 = vmatprep.subr.mxu0 0.0
    %3276 = vmatpush2.msra.mxu0 0.0
    %3277 = vmatprep.subr.mxu0 0.0
    %3278 = vmatpush2.msra.mxu0 0.0
    %3279 = vmatprep.subr.mxu0 0.0
    %3280 = vmatpush2.msra.mxu0 0.0
    %3281 = vmatprep.subr.mxu0 0.0
    %3282 = vmatpush2.msra.mxu0 0.0
    %3283 = vmatprep.subr.mxu0 0.0
    %3284 = vmatpush2.msra.mxu0 0.0
    %3285 = vmatprep.subr.mxu0 0.0
    %3286 = vmatpush2.msra.mxu0 0.0
    %3287 = vmatprep.subr.mxu0 0.0
    %3288 = vmatpush2.msra.mxu0 0.0
    %3289 = vmatprep.subr.mxu0 0.0
    %3290 = vmatpush2.msra.mxu0 0.0
    %3291 = vmatprep.subr.mxu0 0.0
    %3292 = vmatpush2.msra.mxu0 0.0
    %3293 = vmatprep.mubr.f32.mxu0 0.0
    %3294 = vmatmul.mubr.f32.gmra.mxu0 %v2190
    %v3295 = vpop.f32.mrf.mxu0
    %v3296 = vadd.f32 %v3185, %v3295
    %v3297 = vpop.f32.mrf.mxu0
    %v3298 = vadd.f32 %v3187, %v3297
    %3299 = vdwg.mxu0
    %3300 = vrot.lane.b32.xlu0 %v2406, 94
    %v3301 = vpop.permute.xlu0 %3300
    %3302 = vrot.lane.b32.xlu0 %v2407, 94
    %v3303 = vpop.permute.xlu0 %3302
    %3304 = vrot.lane.b32.xlu0 %v2414, 94
    %v3305 = vpop.permute.xlu0 %3304
    %3306 = vrot.lane.b32.xlu0 %v2408, 94
    %v3307 = vpop.permute.xlu0 %3306
    %3308 = vrot.lane.b32.xlu0 %v2409, 94
    %v3309 = vpop.permute.xlu0 %3308
    %3310 = vrot.lane.b32.xlu0 %v2415, 94
    %v3311 = vpop.permute.xlu0 %3310
    %3312 = vrot.lane.b32.xlu0 %v2410, 94
    %v3313 = vpop.permute.xlu0 %3312
    %3314 = vrot.lane.b32.xlu0 %v2411, 94
    %v3315 = vpop.permute.xlu0 %3314
    %3316 = vrot.lane.b32.xlu0 %v2416, 94
    %v3317 = vpop.permute.xlu0 %3316
    %3318 = vrot.lane.b32.xlu0 %v2412, 94
    %v3319 = vpop.permute.xlu0 %3318
    %3320 = vrot.lane.b32.xlu0 %v2413, 94
    %v3321 = vpop.permute.xlu0 %3320
    %3322 = vrot.lane.b32.xlu0 %v2417, 94
    %v3323 = vpop.permute.xlu0 %3322
    %v3324 = vsel %vm2287, %v3301, %v3303
    %v3325 = vsel %vm2287, %v3303, %v3305
    %v3326 = vsel %vm2287, %v3307, %v3309
    %v3327 = vsel %vm2287, %v3309, %v3311
    %v3328 = vsel %vm2287, %v3313, %v3315
    %v3329 = vsel %vm2287, %v3315, %v3317
    %v3330 = vsel %vm2287, %v3319, %v3321
    %v3331 = vsel %vm2287, %v3321, %v3323
    %3340 = vmatprep.subr.mxu0 0.0
    %3341 = vmatpush1.msra.mxu0 0.0
    %3342 = vmatprep.subr.mxu0 0.0
    %3343 = vmatpush1.msra.mxu0 0.0
    %3344 = vmatprep.subr.mxu0 0.0
    %3345 = vmatpush1.msra.mxu0 0.0
    %3346 = vmatprep.subr.mxu0 0.0
    %3347 = vmatpush1.msra.mxu0 0.0
    %3348 = vmatprep.subr.mxu0 0.0
    %3349 = vmatpush1.msra.mxu0 0.0
    %3350 = vmatprep.subr.mxu0 0.0
    %3351 = vmatpush1.msra.mxu0 0.0
    %3352 = vmatprep.subr.mxu0 0.0
    %3353 = vmatpush1.msra.mxu0 0.0
    %3354 = vmatprep.subr.mxu0 0.0
    %3355 = vmatpush1.msra.mxu0 0.0
    %3356 = vmatprep.subr.mxu0 0.0
    %3357 = vmatpush1.msra.mxu0 0.0
    %3358 = vmatprep.subr.mxu0 0.0
    %3359 = vmatpush1.msra.mxu0 0.0
    %3360 = vmatprep.subr.mxu0 0.0
    %3361 = vmatpush1.msra.mxu0 0.0
    %3362 = vmatprep.subr.mxu0 0.0
    %3363 = vmatpush1.msra.mxu0 0.0
    %3364 = vmatprep.subr.mxu0 %v3331
    %3365 = vmatpush1.msra.mxu0 %v3330
    %3366 = vmatprep.subr.mxu0 %v3329
    %3367 = vmatpush1.msra.mxu0 %v3328
    %3368 = vmatprep.subr.mxu0 %v3327
    %3369 = vmatpush1.msra.mxu0 %v3326
    %3370 = vmatprep.subr.mxu0 %v3325
    %3371 = vmatpush1.msra.mxu0 %v3324
    %3372 = vmatprep.subr.mxu0 0.0
    %3373 = vmatpush2.msra.mxu0 0.0
    %3374 = vmatprep.subr.mxu0 0.0
    %3375 = vmatpush2.msra.mxu0 0.0
    %3376 = vmatprep.subr.mxu0 0.0
    %3377 = vmatpush2.msra.mxu0 0.0
    %3378 = vmatprep.subr.mxu0 0.0
    %3379 = vmatpush2.msra.mxu0 0.0
    %3380 = vmatprep.subr.mxu0 0.0
    %3381 = vmatpush2.msra.mxu0 0.0
    %3382 = vmatprep.subr.mxu0 0.0
    %3383 = vmatpush2.msra.mxu0 0.0
    %3384 = vmatprep.subr.mxu0 0.0
    %3385 = vmatpush2.msra.mxu0 0.0
    %3386 = vmatprep.subr.mxu0 0.0
    %3387 = vmatpush2.msra.mxu0 0.0
    %3388 = vmatprep.subr.mxu0 0.0
    %3389 = vmatpush2.msra.mxu0 0.0
    %3390 = vmatprep.subr.mxu0 0.0
    %3391 = vmatpush2.msra.mxu0 0.0
    %3392 = vmatprep.subr.mxu0 0.0
    %3393 = vmatpush2.msra.mxu0 0.0
    %3394 = vmatprep.subr.mxu0 0.0
    %3395 = vmatpush2.msra.mxu0 0.0
    %3396 = vmatprep.subr.mxu0 0.0
    %3397 = vmatpush2.msra.mxu0 0.0
    %3398 = vmatprep.subr.mxu0 0.0
    %3399 = vmatpush2.msra.mxu0 0.0
    %3400 = vmatprep.subr.mxu0 0.0
    %3401 = vmatpush2.msra.mxu0 0.0
    %3402 = vmatprep.subr.mxu0 0.0
    %3403 = vmatpush2.msra.mxu0 0.0
    %3404 = vmatprep.mubr.f32.mxu0 0.0
    %3405 = vmatmul.mubr.f32.gmra.mxu0 %v2305
    %v3406 = vpop.f32.mrf.mxu0
    %v3407 = vadd.f32 0.0, %v3406
    %v3408 = vpop.f32.mrf.mxu0
    %v3409 = vadd.f32 0.0, %v3408
    %3410 = vdwg.mxu0
    %v3411 = vadd.f32 %v3296, %v3407
    %v3412 = vadd.f32 %v3298, %v3409
    %v3413 = vld [vmem:[%s2380] ss:$4 sm:$0x3]
    %v3415 = vlaneseq
    %v3416 = vshrl.u32 %v3415, 7
    %v3417 = vsub.s32 0, %v3416
    %v3418 = vrot.slane %v3413, %v3417
    %v3419 = vlaneseq
    %v3420 = vshrl.u32 %v3419, 7
    %v3421 = vsub.s32 1, %v3420
    %v3422 = vrot.slane %v3413, %v3421
    %v3425 = vmul.f32 %v3411, %v3418
    %v3426 = vmul.f32 %v3412, %v3422
    %v3427 = vadd.f32 %v3076, %v3425
    %v3428 = vadd.f32 %v3077, %v3426
    %v3429 = vmul.f32 %v3427, %v2397
    %v3430 = vmul.f32 %v3428, %v2397
    %v3431 = vadd.f32 %v3429, %v2400
    %v3432 = vadd.f32 %v3430, %v2400
    %s3433 = scalar_lea.vmem [#allocation14], 16
    %3434 = vst [vmem:[%s3433] sm:$0xff] %v3431
    %3435 = vst [vmem:[%s3433 + $0x8] sm:$0xff] %v3432
    // Predicated region
    $region58: #{tpu_custom_call.1} parent=1 // pred_check
      _
    $region59: #{tpu_custom_call.1} parent=1 // pred_check_branch
      %3437 = sbr.rel (0) target = $region61
    $region60: #{tpu_custom_call.1} parent=1 // pred_region
      %s3439 = ssub.s32 512, 512
      %3440 = vsyncadd [#allocation5], %s3439
      %s3441 = sshll.u32 [#allocation14], 4
      %s3442 = int_to_ptr.vmem [resolvable:$true] %s3441
      %3447 = dma.vmem_to_hbm [thread:$0]  %s3442, 512, %s8, [#allocation5], 256, 256, 16
    $region61: #{tpu_custom_call.1} parent=1 // pred_fallthru
      _
    // Predicated region
    $region62: #{tpu_custom_call.1} parent=1 // pred_check
      _
    $region63: #{tpu_custom_call.1} parent=1 // pred_check_branch
      %3449 = sbr.rel (0) target = $region65
    $region64: #{tpu_custom_call.1} parent=1 // pred_region
      %3450 = dma.done [#allocation5], 512
    $region65: #{tpu_custom_call.1} parent=1 // pred_fallthru
      _
    %3451 = vsyncpa [#allocation4], 1
    %3452 = vsyncpa [#allocation9], 1
    %3453 = vsyncpa [#allocation12], 1
    %3454 = vsyncpa [#allocation5], 1
    %3455 = vsyncpa [#allocation6], 1

</llo_original>
